<compile_context>
chip_gen: v7x
topology: tpu7x:2x2x1
jax: 0.10.0
libtpu: 0.0.40
codegen_flags: <defaults>
</compile_context>

<pallas_src>
import functools

import jax
import jax.numpy as jnp
from jax.experimental import pallas as pl
from jax.experimental.pallas import tpu as pltpu


_SQRT_HALF = 0.7071067811865476
_GELU_C = 0.7978845608028654  # sqrt(2/pi)


def _gelu_erf(x):
    # Matches torch.nn.GELU() default (erf-based). Used only by the f32 reference.
    return 0.5 * x * (1.0 + jax.lax.erf(x * _SQRT_HALF))


def _gelu_tanh(x):
    # tanh approximation (torch GELU(approximate='tanh')). Inside the kernel the
    # tanh lowers to the EUP slot, keeping the VALU free for the rest of the math.
    return 0.5 * x * (1.0 + jnp.tanh(_GELU_C * (x + 0.044715 * (x * x * x))))


# ----------------------------------------------------------------------------
# Pallas kernel: PatchEncoder (BN folded, split global branch, bf16 matmuls,
# EUP GELU, lane-dense padded output)
# ----------------------------------------------------------------------------
def _patch_encoder_kernel(x_ref,
                          w1_ref, b1_ref,
                          w2_ref, b2_ref,
                          w3a_ref, w3b_ref, b3_ref,
                          w4_ref, b4_ref,
                          o_ref, *, k, act_dtype):
    tmk = x_ref.shape[0]
    tm = tmk // k

    # conv1 block (BN folded into w1/b1): Linear -> GELU -> Linear
    h = jnp.dot(x_ref[...], w1_ref[...],
                preferred_element_type=jnp.float32) + b1_ref[...]
    h = _gelu_tanh(h.astype(act_dtype))                               # EUP tanh
    h = jnp.dot(h.astype(w2_ref.dtype), w2_ref[...],
                preferred_element_type=jnp.float32) + b2_ref[...]
    d1 = h.shape[-1]

    # Per-patch global feature: max over the K points of each patch.
    g = jnp.max(h.reshape(tm, k, d1), axis=1)                         # [tm, d1]

    # conv2 block (BN folded into w3/b3).  The original concat([h, bcast(g)]) @ w3
    # is split: per-point  h @ w3a  plus per-patch  g @ w3b  broadcast over K.
    loc = jnp.dot(h.astype(w3a_ref.dtype), w3a_ref[...],
                  preferred_element_type=jnp.float32)                 # [tm*k, d2]
    glo = jnp.dot(g.astype(w3b_ref.dtype), w3b_ref[...],
                  preferred_element_type=jnp.float32) + b3_ref[...]   # [tm, d2]
    d2 = loc.shape[-1]
    h2 = (loc.reshape(tm, k, d2).astype(act_dtype)
          + glo[:, None, :].astype(act_dtype))
    h2 = _gelu_tanh(h2.reshape(tmk, d2))                              # EUP tanh
    out = jnp.dot(h2.astype(w4_ref.dtype), w4_ref[...],
                  preferred_element_type=jnp.float32) + b4_ref[...]   # [tm*k, d_pad]

    o_ref[...] = jnp.max(out.reshape(tm, k, -1), axis=1).astype(o_ref.dtype)


def fold_patch_encoder_params(params, compute_dtype=jnp.bfloat16, lane_pad=128):
    """Fold eval-mode BN affine into the adjacent linears, split w3 into the
    local (w3a) and global (w3b) halves, zero-pad the final projection to a
    lane-dense width (multiple of 128), and cast matmul weights to bf16.
    Biases stay f32 (added to the f32 accumulators)."""
    d1 = params["w2t"].shape[-1]
    w1f = params["w1t"] * params["g1"]
    b1f = params["b1"] * params["g1"] + params["be1"]
    w3f = params["w3t"] * params["g2"]
    b3f = params["b3"] * params["g2"] + params["be2"]

    w4 = params["w4t"]
    b4 = params["b4"]
    d_out = w4.shape[-1]
    d_pad = max(lane_pad, ((d_out + lane_pad - 1) // lane_pad) * lane_pad)
    if d_pad != d_out:
        # Padded columns are exactly zero -> sliced off after the kernel.
        w4 = jnp.pad(w4, ((0, 0), (0, d_pad - d_out)))
        b4 = jnp.pad(b4, ((0, 0), (0, d_pad - d_out)))

    return dict(
        w1=w1f.astype(compute_dtype),
        b1=b1f.astype(jnp.float32),
        w2=params["w2t"].astype(compute_dtype),
        b2=params["b2"].astype(jnp.float32),
        w3a=w3f[:d1].astype(compute_dtype),
        w3b=w3f[d1:].astype(compute_dtype),
        b3=b3f.astype(jnp.float32),
        w4=w4.astype(compute_dtype),
        b4=b4.astype(jnp.float32),
    )


def _encoder_config():
    """Per-TPU-generation tiling / precision config.

    v5e & v6e: 128 MiB physical VMEM -> 96 MiB scoped limit, large tm target.
    v7x (64 MiB VMEM, 2 TensorCores) and unknown parts: 48 MiB, tm target 64.
    bf16 element-wise math only where the VPU has native bf16 (v6e / v7x).
    """
    kind = ""
    try:
        kind = jax.devices()[0].device_kind.lower()
    except Exception:
        pass
    is_old = any(t in kind for t in ("v2", "v3", "v4", "v5"))   # no bf16 VPU
    is_big_vmem = ("v5 lite" in kind) or ("v5e" in kind) or ("v6" in kind)
    return dict(
        tm_target=256 if is_big_vmem else 64,
        vmem_limit=(96 << 20) if is_big_vmem else (48 << 20),
        act_dtype=jnp.float32 if is_old else jnp.bfloat16,
    )


def _choose_tile(bl, k, target):
    """Pick the patch-tile size tm: a divisor of bl with (tm*k) % 16 == 0
    (sublane alignment for the bf16 input block) OR tm == bl (full-extent
    block, always legal).  Prefer tm <= target, then an even number of grid
    steps (balanced across v7x's two TensorCores), then the largest tm under
    the target (or the smallest above it)."""
    cands = [d for d in range(1, bl + 1)
             if bl % d == 0 and ((d * k) % 16 == 0 or d == bl)]

    def key(d):
        steps = bl // d
        return (d <= target, steps % 2 == 0, d if d <= target else -d)

    return max(cands, key=key)


def patch_encoder_pallas(x, params, *, tm=None, act_dtype=None,
                         compute_dtype=jnp.bfloat16):
    """x: [B, L, K, C] patch features -> embeddings [B, L, out_channels]."""
    B, L, K, C = x.shape
    BL = B * L
    out_dtype = x.dtype

    cfg = _encoder_config()
    if act_dtype is None:
        act_dtype = cfg["act_dtype"]
    vmem_limit = cfg["vmem_limit"]
    tm_target = tm if tm is not None else cfg["tm_target"]

    fp = fold_patch_encoder_params(params, compute_dtype)
    d_h1 = fp["w1"].shape[-1]
    d1 = fp["w2"].shape[-1]
    d2 = fp["w3a"].shape[-1]
    d_pad = fp["w4"].shape[-1]          # lane-dense padded output width
    d_out = params["w4t"].shape[-1]

    # Cap tm so per-step live intermediates stay well inside the VMEM budget
    # (leave half the budget for double-buffered I/O and resident weights).
    asz = jnp.dtype(act_dtype).itemsize
    per_point_bytes = (2 * C * 2
                       + d_h1 * (4 + asz)
                       + d1 * (4 + asz)
                       + d2 * (4 + asz)
                       + d_pad * 4)
    max_rows = max(K, (vmem_limit // 2) // max(per_point_bytes, 1))
    tm_target = max(1, min(tm_target, max_rows // K))

    tm = _choose_tile(BL, K, tm_target)

    # Present the matmul LHS already 2-D so the input DMA is a contiguous tile.
    # TODO(synk): raw features are cast to bf16 here; large-magnitude
    # un-normalized feature channels would lose precision.
    xf = x.reshape(BL * K, C).astype(compute_dtype)

    weight_args = (fp["w1"], fp["b1"], fp["w2"], fp["b2"],
                   fp["w3a"], fp["w3b"], fp["b3"], fp["w4"], fp["b4"])

    # Grid-invariant weights: constant index_map, so they are DMA'd once and
    # re-used across grid steps (no per-step re-fetch).
    def full_spec(a):
        nd = a.ndim
        return pl.BlockSpec(a.shape, lambda i, _nd=nd: (0,) * _nd)

    kernel = functools.partial(_patch_encoder_kernel, k=K, act_dtype=act_dtype)

    flops = int(2 * BL * K * (C * d_h1 + d_h1 * d1 + d1 * d2 + d2 * d_pad)
                + 2 * BL * d1 * d2)
    transcendentals = int(BL * K * (d_h1 + d2))
    bytes_accessed = int(xf.size * jnp.dtype(compute_dtype).itemsize
                         + sum(int(a.size) * jnp.dtype(a.dtype).itemsize
                               for a in weight_args)
                         + BL * d_pad * jnp.dtype(out_dtype).itemsize)

    out = pl.pallas_call(
        kernel,
        out_shape=jax.ShapeDtypeStruct((BL, d_pad), out_dtype),
        grid_spec=pltpu.PrefetchScalarGridSpec(
            num_scalar_prefetch=0,
            grid=(BL // tm,),
            in_specs=[pl.BlockSpec((tm * K, C), lambda i: (i, 0))]
                     + [full_spec(a) for a in weight_args],
            out_specs=pl.BlockSpec((tm, d_pad), lambda i: (i, 0)),
        ),
        compiler_params=pltpu.CompilerParams(
            dimension_semantics=("parallel",),
            vmem_limit_bytes=vmem_limit,
        ),
        cost_estimate=pl.CostEstimate(flops=flops,
                                      transcendentals=transcendentals,
                                      bytes_accessed=bytes_accessed),
    )(xf, *weight_args)
    return out[:, :d_out].reshape(B, L, d_out)


# ----------------------------------------------------------------------------
# KNNGrouper (plain JAX glue: FPS + KNN + gather + centering)
# ----------------------------------------------------------------------------
def farthest_point_sampling(coords, num_samples):
    """coords: [B, N, 3] -> idx [B, num_samples] (deterministic, starts at point 0)."""
    def single(c):
        n = c.shape[0]
        idx0 = jnp.zeros((num_samples,), jnp.int32)
        min_d = jnp.full((n,), jnp.inf, dtype=c.dtype)

        def body(i, carry):
            md, idx = carry
            last = c[idx[i - 1]]
            d = jnp.sum((c - last) ** 2, axis=-1)
            md = jnp.minimum(md, d)
            nxt = jnp.argmax(md).astype(jnp.int32)
            return md, idx.at[i].set(nxt)

        _, idx = jax.lax.fori_loop(1, num_samples, body, (min_d, idx0))
        return idx

    return jax.vmap(single)(coords)


def knn_indices(centers, coords, k):
    """centers [B,G,3], coords [B,N,3] -> idx [B,G,k] of k nearest points."""
    d = jnp.sum((centers[:, :, None, :] - coords[:, None, :, :]) ** 2, axis=-1)
    _, idx = jax.lax.top_k(-d, k)
    return idx


def gather_points(points, idx):
    """points [B,N,C], idx [B,G,K] -> [B,G,K,C]."""
    return jax.vmap(lambda p, i: p[i])(points, idx)


def knn_grouper(coords, features, num_patches, patch_size,
                radius=None, centralize_features=False):
    fps_idx = farthest_point_sampling(coords, num_patches)                  # [B, G]
    centers = jnp.take_along_axis(coords, fps_idx[..., None], axis=1)       # [B, G, 3]
    knn_idx = knn_indices(centers, coords, patch_size)                      # [B, G, K]

    nbr_coords = gather_points(coords, knn_idx)                             # [B, G, K, 3]
    nbr_feats = gather_points(features, knn_idx)                            # [B, G, K, C]

    nbr_coords = nbr_coords - centers[:, :, None, :]
    if radius is not None:
        nbr_coords = nbr_coords / radius
    if centralize_features:
        center_feats = jnp.take_along_axis(features, fps_idx[..., None], axis=1)
        nbr_feats = nbr_feats - center_feats[:, :, None, :]

    patch_features = jnp.concatenate([nbr_coords, nbr_feats], axis=-1)      # [B, G, K, 3+C]
    return {"centers": centers, "fps_idx": fps_idx, "knn_idx": knn_idx,
            "features": patch_features}


# ----------------------------------------------------------------------------
# PatchEmbed forward
# ----------------------------------------------------------------------------
def patch_embed_forward(coords, features, enc_params, *, num_patches, patch_size,
                        radius=None, centralize_features=False):
    patches = knn_grouper(coords, features, num_patches, patch_size,
                          radius=radius, centralize_features=centralize_features)
    patches["embeddings"] = patch_encoder_pallas(patches["features"], enc_params)
    return patches


# ----------------------------------------------------------------------------
# Deterministic parameter init (Conv1d weights stored pre-transposed [in, out])
# ----------------------------------------------------------------------------
def init_patch_encoder_params(key, in_channels, out_channels, hidden_dims=(128, 512)):
    h1, h2 = hidden_dims
    ks = jax.random.split(key, 12)

    def unif(k, shape, fan_in):
        bound = 1.0 / (fan_in ** 0.5)
        return jax.random.uniform(k, shape, jnp.float32, -bound, bound)

    return dict(
        w1t=unif(ks[0], (in_channels, h1), in_channels),
        b1=unif(ks[1], (1, h1), in_channels),
        g1=1.0 + 0.1 * jax.random.normal(ks[2], (1, h1), jnp.float32),
        be1=0.1 * jax.random.normal(ks[3], (1, h1), jnp.float32),
        w2t=unif(ks[4], (h1, h2), h1),
        b2=unif(ks[5], (1, h2), h1),
        w3t=unif(ks[6], (2 * h2, h2), 2 * h2),
        b3=unif(ks[7], (1, h2), 2 * h2),
        g2=1.0 + 0.1 * jax.random.normal(ks[8], (1, h2), jnp.float32),
        be2=0.1 * jax.random.normal(ks[9], (1, h2), jnp.float32),
        w4t=unif(ks[10], (h2, out_channels), h2),
        b4=unif(ks[11], (1, out_channels), h2),
    )


# Pure-JAX f32 reference (unfolded, erf GELU — matches the PyTorch module semantics).
def patch_encoder_ref(x, p):
    B, L, K, C = x.shape
    h = x.reshape(B * L * K, C)
    h = _gelu_erf((h @ p["w1t"] + p["b1"]) * p["g1"] + p["be1"])
    h = h @ p["w2t"] + p["b2"]
    d1 = h.shape[-1]
    h3 = h.reshape(B * L, K, d1)
    g = jnp.max(h3, axis=1, keepdims=True)
    hc = jnp.concatenate([h3, jnp.broadcast_to(g, h3.shape)], -1).reshape(B * L * K, 2 * d1)
    h = _gelu_erf((hc @ p["w3t"] + p["b3"]) * p["g2"] + p["be2"])
    h = h @ p["w4t"] + p["b4"]
    return jnp.max(h.reshape(B * L, K, -1), axis=1).reshape(B, L, -1)


# Pure-JAX reference using the SAME folded / split / padded / bf16 / tanh-GELU
# math as the kernel: isolates Pallas tiling/layout bugs from expected rounding.
def patch_encoder_matched_ref(x, params, compute_dtype=jnp.bfloat16,
                              act_dtype=jnp.bfloat16):
    B, L, K, C = x.shape
    fp = fold_patch_encoder_params(params, compute_dtype)
    d_out = params["w4t"].shape[-1]
    xb = x.reshape(B * L * K, C).astype(compute_dtype)
    h = jnp.dot(xb, fp["w1"], preferred_element_type=jnp.float32) + fp["b1"]
    h = _gelu_tanh(h.astype(act_dtype))
    h = jnp.dot(h.astype(compute_dtype), fp["w2"],
                preferred_element_type=jnp.float32) + fp["b2"]
    d1 = h.shape[-1]
    g = jnp.max(h.reshape(B * L, K, d1), axis=1)
    loc = jnp.dot(h.astype(compute_dtype), fp["w3a"],
                  preferred_element_type=jnp.float32)
    glo = jnp.dot(g.astype(compute_dtype), fp["w3b"],
                  preferred_element_type=jnp.float32) + fp["b3"]
    d2 = loc.shape[-1]
    h2 = (loc.reshape(B * L, K, d2).astype(act_dtype)
          + glo[:, None, :].astype(act_dtype))
    h2 = _gelu_tanh(h2.reshape(B * L * K, d2))
    h2 = jnp.dot(h2.astype(compute_dtype), fp["w4"],
                 preferred_element_type=jnp.float32) + fp["b4"]
    out = jnp.max(h2.reshape(B * L, K, -1), axis=1)
    return out[:, :d_out].reshape(B, L, d_out)


if __name__ == "__main__":
    key = jax.random.PRNGKey(0)
    B, N = 2, 128                 # batch, number of points
    feat_dim = 3                  # per-point feature dim (e.g. color)
    in_channels = 3 + feat_dim    # grouper concatenates centered coords + features
    out_channels = 32
    num_patches, patch_size = 8, 16

    k_coords, k_feats, k_params = jax.random.split(key, 3)
    coords = jax.random.uniform(k_coords, (B, N, 3), jnp.float32)
    features = jax.random.normal(k_feats, (B, N, feat_dim), jnp.float32)
    params = init_patch_encoder_params(k_params, in_channels, out_channels)

    patches = patch_embed_forward(coords, features, params,
                                  num_patches=num_patches, patch_size=patch_size,
                                  radius=None, centralize_features=False)
    emb = jax.block_until_ready(patches["embeddings"])
    assert emb.shape == (B, num_patches, out_channels)

    # 1) Tight check vs. a plain-JAX replica of the kernel's exact mixed-precision
    #    math (same fold / split / pad / act dtype / tanh GELU): catches any
    #    tiling / layout bug independent of rounding.
    act_dtype = _encoder_config()["act_dtype"]
    matched = patch_encoder_matched_ref(patches["features"], params,
                                        act_dtype=act_dtype)
    err_m = float(jnp.max(jnp.abs(emb - matched)))
    assert jnp.allclose(emb, matched, rtol=5e-3, atol=5e-3), f"matched max abs err {err_m}"

    # 2) Semantic check vs. the f32 (PyTorch-equivalent, erf-GELU) reference;
    #    tolerance accounts for bf16 matmul operands + tanh-approximate GELU.
    ref = patch_encoder_ref(patches["features"], params)
    err_f = float(jnp.max(jnp.abs(emb - ref)))
    assert jnp.allclose(emb, ref, rtol=5e-2, atol=5e-2), f"f32 ref max abs err {err_f}"

    print("KERNEL_OK")
</pallas_src>

<mosaic_0001>
module attributes {stable_mosaic.version = 11 : i64} {
  func.func @_patch_encoder_kernel(%arg0: i32, %arg1: memref<128x6xbf16, #tpu.memory_space<vmem>>, %arg2: memref<6x128xbf16, #tpu.memory_space<vmem>>, %arg3: memref<1x128xf32, #tpu.memory_space<vmem>>, %arg4: memref<128x512xbf16, #tpu.memory_space<vmem>>, %arg5: memref<1x512xf32, #tpu.memory_space<vmem>>, %arg6: memref<512x512xbf16, #tpu.memory_space<vmem>>, %arg7: memref<512x512xbf16, #tpu.memory_space<vmem>>, %arg8: memref<1x512xf32, #tpu.memory_space<vmem>>, %arg9: memref<512x128xbf16, #tpu.memory_space<vmem>>, %arg10: memref<1x128xf32, #tpu.memory_space<vmem>>, %arg11: memref<8x128xf32, #tpu.memory_space<vmem>>) attributes {dimension_semantics = [#tpu.dimension_semantics<parallel>], iteration_bounds = array<i64: 2>, scalar_prefetch = 0 : i64, scratch_operands = 0 : i64, tpu.core_type = #tpu.core_type<tc>, window_params = [{transform_indices = @transform_0, window_bounds = array<i64: 128, 6>}, {pipeline_mode = #tpu.pipeline_mode<synchronous>, transform_indices = @transform_1, window_bounds = array<i64: 6, 128>}, {pipeline_mode = #tpu.pipeline_mode<synchronous>, transform_indices = @transform_2, window_bounds = array<i64: 1, 128>}, {pipeline_mode = #tpu.pipeline_mode<synchronous>, transform_indices = @transform_3, window_bounds = array<i64: 128, 512>}, {pipeline_mode = #tpu.pipeline_mode<synchronous>, transform_indices = @transform_4, window_bounds = array<i64: 1, 512>}, {pipeline_mode = #tpu.pipeline_mode<synchronous>, transform_indices = @transform_5, window_bounds = array<i64: 512, 512>}, {pipeline_mode = #tpu.pipeline_mode<synchronous>, transform_indices = @transform_6, window_bounds = array<i64: 512, 512>}, {pipeline_mode = #tpu.pipeline_mode<synchronous>, transform_indices = @transform_7, window_bounds = array<i64: 1, 512>}, {pipeline_mode = #tpu.pipeline_mode<synchronous>, transform_indices = @transform_8, window_bounds = array<i64: 512, 128>}, {pipeline_mode = #tpu.pipeline_mode<synchronous>, transform_indices = @transform_9, window_bounds = array<i64: 1, 128>}, {transform_indices = @transform_10, window_bounds = array<i64: 8, 128>}]} {
    %c0 = arith.constant 0 : index
    %c0_0 = arith.constant 0 : index
    %0 = vector.load %arg1[%c0, %c0_0] : memref<128x6xbf16, #tpu.memory_space<vmem>>, vector<128x6xbf16>
    %c0_1 = arith.constant 0 : index
    %c0_2 = arith.constant 0 : index
    %1 = vector.load %arg2[%c0_1, %c0_2] : memref<6x128xbf16, #tpu.memory_space<vmem>>, vector<6x128xbf16>
    %cst = arith.constant dense<0.000000e+00> : vector<128x128xf32>
    %2 = tpu.matmul %0, %1, %cst {dimension_numbers = #tpu.dot_dimension_numbers<[1], [0], [0], [1], [0, 0, 1, 1], [], []>} : vector<128x6xbf16>, vector<6x128xbf16>, vector<128x128xf32> -> vector<128x128xf32>
    %c0_3 = arith.constant 0 : index
    %c0_4 = arith.constant 0 : index
    %3 = vector.load %arg3[%c0_3, %c0_4] : memref<1x128xf32, #tpu.memory_space<vmem>>, vector<1x128xf32>
    %4 = vector.broadcast %3 : vector<1x128xf32> to vector<128x128xf32>
    %5 = arith.addf %2, %4 : vector<128x128xf32>
    %6 = arith.truncf %5 : vector<128x128xf32> to vector<128x128xbf16>
    %cst_5 = arith.constant 5.000000e-01 : bf16
    %7 = vector.broadcast %cst_5 : bf16 to vector<128x128xbf16>
    %8 = arith.mulf %7, %6 : vector<128x128xbf16>
    %9 = arith.mulf %6, %6 : vector<128x128xbf16>
    %10 = arith.mulf %9, %6 : vector<128x128xbf16>
    %cst_6 = arith.constant 4.467770e-02 : bf16
    %11 = vector.broadcast %cst_6 : bf16 to vector<128x128xbf16>
    %12 = arith.mulf %11, %10 : vector<128x128xbf16>
    %13 = arith.addf %6, %12 : vector<128x128xbf16>
    %cst_7 = arith.constant 7.968750e-01 : bf16
    %14 = vector.broadcast %cst_7 : bf16 to vector<128x128xbf16>
    %15 = arith.mulf %14, %13 : vector<128x128xbf16>
    %16 = math.tanh %15 : vector<128x128xbf16>
    %cst_8 = arith.constant 1.000000e+00 : bf16
    %17 = vector.broadcast %cst_8 : bf16 to vector<128x128xbf16>
    %18 = arith.addf %17, %16 : vector<128x128xbf16>
    %19 = arith.mulf %8, %18 : vector<128x128xbf16>
    %c0_9 = arith.constant 0 : index
    %c0_10 = arith.constant 0 : index
    %20 = vector.load %arg4[%c0_9, %c0_10] : memref<128x512xbf16, #tpu.memory_space<vmem>>, vector<128x512xbf16>
    %cst_11 = arith.constant dense<0.000000e+00> : vector<128x512xf32>
    %21 = tpu.matmul %19, %20, %cst_11 {dimension_numbers = #tpu.dot_dimension_numbers<[1], [0], [0], [1], [0, 0, 1, 1], [], []>} : vector<128x128xbf16>, vector<128x512xbf16>, vector<128x512xf32> -> vector<128x512xf32>
    %c0_12 = arith.constant 0 : index
    %c0_13 = arith.constant 0 : index
    %22 = vector.load %arg5[%c0_12, %c0_13] : memref<1x512xf32, #tpu.memory_space<vmem>>, vector<1x512xf32>
    %23 = vector.broadcast %22 : vector<1x512xf32> to vector<128x512xf32>
    %24 = arith.addf %21, %23 : vector<128x512xf32>
    %25 = vector.shape_cast %24 : vector<128x512xf32> to vector<8x16x512xf32>
    %cst_14 = arith.constant dense<0xFF800000> : vector<8x512xf32>
    %26 = vector.multi_reduction <maximumf>, %25, %cst_14 [1] : vector<8x16x512xf32> to vector<8x512xf32>
    %27 = arith.truncf %24 : vector<128x512xf32> to vector<128x512xbf16>
    %c0_15 = arith.constant 0 : index
    %c0_16 = arith.constant 0 : index
    %28 = vector.load %arg6[%c0_15, %c0_16] : memref<512x512xbf16, #tpu.memory_space<vmem>>, vector<512x512xbf16>
    %cst_17 = arith.constant dense<0.000000e+00> : vector<128x512xf32>
    %29 = tpu.matmul %27, %28, %cst_17 {dimension_numbers = #tpu.dot_dimension_numbers<[1], [0], [0], [1], [0, 0, 1, 1], [], []>} : vector<128x512xbf16>, vector<512x512xbf16>, vector<128x512xf32> -> vector<128x512xf32>
    %30 = arith.truncf %26 : vector<8x512xf32> to vector<8x512xbf16>
    %c0_18 = arith.constant 0 : index
    %c0_19 = arith.constant 0 : index
    %31 = vector.load %arg7[%c0_18, %c0_19] : memref<512x512xbf16, #tpu.memory_space<vmem>>, vector<512x512xbf16>
    %cst_20 = arith.constant dense<0.000000e+00> : vector<8x512xf32>
    %32 = tpu.matmul %30, %31, %cst_20 {dimension_numbers = #tpu.dot_dimension_numbers<[1], [0], [0], [1], [0, 0, 1, 1], [], []>} : vector<8x512xbf16>, vector<512x512xbf16>, vector<8x512xf32> -> vector<8x512xf32>
    %c0_21 = arith.constant 0 : index
    %c0_22 = arith.constant 0 : index
    %33 = vector.load %arg8[%c0_21, %c0_22] : memref<1x512xf32, #tpu.memory_space<vmem>>, vector<1x512xf32>
    %34 = vector.broadcast %33 : vector<1x512xf32> to vector<8x512xf32>
    %35 = arith.addf %32, %34 : vector<8x512xf32>
    %36 = vector.shape_cast %29 : vector<128x512xf32> to vector<8x16x512xf32>
    %37 = arith.truncf %36 : vector<8x16x512xf32> to vector<8x16x512xbf16>
    %38 = vector.shape_cast %35 : vector<8x512xf32> to vector<8x1x512xf32>
    %39 = arith.truncf %38 : vector<8x1x512xf32> to vector<8x1x512xbf16>
    %40 = vector.broadcast %39 : vector<8x1x512xbf16> to vector<8x16x512xbf16>
    %41 = arith.addf %37, %40 : vector<8x16x512xbf16>
    %42 = vector.shape_cast %41 : vector<8x16x512xbf16> to vector<128x512xbf16>
    %cst_23 = arith.constant 5.000000e-01 : bf16
    %43 = vector.broadcast %cst_23 : bf16 to vector<128x512xbf16>
    %44 = arith.mulf %43, %42 : vector<128x512xbf16>
    %45 = arith.mulf %42, %42 : vector<128x512xbf16>
    %46 = arith.mulf %45, %42 : vector<128x512xbf16>
    %cst_24 = arith.constant 4.467770e-02 : bf16
    %47 = vector.broadcast %cst_24 : bf16 to vector<128x512xbf16>
    %48 = arith.mulf %47, %46 : vector<128x512xbf16>
    %49 = arith.addf %42, %48 : vector<128x512xbf16>
    %cst_25 = arith.constant 7.968750e-01 : bf16
    %50 = vector.broadcast %cst_25 : bf16 to vector<128x512xbf16>
    %51 = arith.mulf %50, %49 : vector<128x512xbf16>
    %52 = math.tanh %51 : vector<128x512xbf16>
    %cst_26 = arith.constant 1.000000e+00 : bf16
    %53 = vector.broadcast %cst_26 : bf16 to vector<128x512xbf16>
    %54 = arith.addf %53, %52 : vector<128x512xbf16>
    %55 = arith.mulf %44, %54 : vector<128x512xbf16>
    %c0_27 = arith.constant 0 : index
    %c0_28 = arith.constant 0 : index
    %56 = vector.load %arg9[%c0_27, %c0_28] : memref<512x128xbf16, #tpu.memory_space<vmem>>, vector<512x128xbf16>
    %cst_29 = arith.constant dense<0.000000e+00> : vector<128x128xf32>
    %57 = tpu.matmul %55, %56, %cst_29 {dimension_numbers = #tpu.dot_dimension_numbers<[1], [0], [0], [1], [0, 0, 1, 1], [], []>} : vector<128x512xbf16>, vector<512x128xbf16>, vector<128x128xf32> -> vector<128x128xf32>
    %c0_30 = arith.constant 0 : index
    %c0_31 = arith.constant 0 : index
    %58 = vector.load %arg10[%c0_30, %c0_31] : memref<1x128xf32, #tpu.memory_space<vmem>>, vector<1x128xf32>
    %59 = vector.broadcast %58 : vector<1x128xf32> to vector<128x128xf32>
    %60 = arith.addf %57, %59 : vector<128x128xf32>
    %61 = vector.shape_cast %60 : vector<128x128xf32> to vector<8x16x128xf32>
    %cst_32 = arith.constant dense<0xFF800000> : vector<8x128xf32>
    %62 = vector.multi_reduction <maximumf>, %61, %cst_32 [1] : vector<8x16x128xf32> to vector<8x128xf32>
    %c0_33 = arith.constant 0 : index
    %c0_34 = arith.constant 0 : index
    %63 = vector.load %arg11[%c0_33, %c0_34] : memref<8x128xf32, #tpu.memory_space<vmem>>, vector<8x128xf32>
    tpu.vector_store %arg11[%c0_33, %c0_34], %62 {strides = array<i32>} : memref<8x128xf32, #tpu.memory_space<vmem>>, vector<8x128xf32>,
    return
  }
  func.func @transform_0(%arg0: i32) -> (i32, i32) {
    %c0_i32 = arith.constant 0 : i32
    %c0_i32_0 = arith.constant 0 : i32
    return %arg0, %c0_i32 : i32, i32
  }
  func.func @transform_1(%arg0: i32) -> (i32, i32) {
    %c0_i32 = arith.constant 0 : i32
    %c0_i32_0 = arith.constant 0 : i32
    %c0_i32_1 = arith.constant 0 : i32
    return %c0_i32, %c0_i32_0 : i32, i32
  }
  func.func @transform_2(%arg0: i32) -> (i32, i32) {
    %c0_i32 = arith.constant 0 : i32
    %c0_i32_0 = arith.constant 0 : i32
    %c0_i32_1 = arith.constant 0 : i32
    return %c0_i32, %c0_i32_0 : i32, i32
  }
  func.func @transform_3(%arg0: i32) -> (i32, i32) {
    %c0_i32 = arith.constant 0 : i32
    %c0_i32_0 = arith.constant 0 : i32
    %c0_i32_1 = arith.constant 0 : i32
    return %c0_i32, %c0_i32_0 : i32, i32
  }
  func.func @transform_4(%arg0: i32) -> (i32, i32) {
    %c0_i32 = arith.constant 0 : i32
    %c0_i32_0 = arith.constant 0 : i32
    %c0_i32_1 = arith.constant 0 : i32
    return %c0_i32, %c0_i32_0 : i32, i32
  }
  func.func @transform_5(%arg0: i32) -> (i32, i32) {
    %c0_i32 = arith.constant 0 : i32
    %c0_i32_0 = arith.constant 0 : i32
    %c0_i32_1 = arith.constant 0 : i32
    return %c0_i32, %c0_i32_0 : i32, i32
  }
  func.func @transform_6(%arg0: i32) -> (i32, i32) {
    %c0_i32 = arith.constant 0 : i32
    %c0_i32_0 = arith.constant 0 : i32
    %c0_i32_1 = arith.constant 0 : i32
    return %c0_i32, %c0_i32_0 : i32, i32
  }
  func.func @transform_7(%arg0: i32) -> (i32, i32) {
    %c0_i32 = arith.constant 0 : i32
    %c0_i32_0 = arith.constant 0 : i32
    %c0_i32_1 = arith.constant 0 : i32
    return %c0_i32, %c0_i32_0 : i32, i32
  }
  func.func @transform_8(%arg0: i32) -> (i32, i32) {
    %c0_i32 = arith.constant 0 : i32
    %c0_i32_0 = arith.constant 0 : i32
    %c0_i32_1 = arith.constant 0 : i32
    return %c0_i32, %c0_i32_0 : i32, i32
  }
  func.func @transform_9(%arg0: i32) -> (i32, i32) {
    %c0_i32 = arith.constant 0 : i32
    %c0_i32_0 = arith.constant 0 : i32
    %c0_i32_1 = arith.constant 0 : i32
    return %c0_i32, %c0_i32_0 : i32, i32
  }
  func.func @transform_10(%arg0: i32) -> (i32, i32) {
    %c0_i32 = arith.constant 0 : i32
    %c0_i32_0 = arith.constant 0 : i32
    return %arg0, %c0_i32 : i32, i32
  }
}

</mosaic_0001>

<llo_original>
// kernel: tpu_custom_call.1
$region0: #{tpu_custom_call.1}
  #allocation0 [shape = 'u32[]', space=smem, size = 0x4, offset = 0x4, fixed_abs, tag = 'smem constant byte address 0x4 - core index']
  #allocation1 [shape = 'u32[144,128]{1,0:T(1,128)}', space=vmem, size = 0x12000, scoped, tag = 'internal scratch']
  %s0 = inlined_call_operand.vmem [shape: bf16[256,6], index: 0, kind: input, shape index: {}]
  %s1 = inlined_call_operand.vmem [shape: bf16[6,128], index: 1, kind: input, shape index: {}]
  %s2 = inlined_call_operand.vmem [shape: f32[1,128], index: 2, kind: input, shape index: {}]
  %s3 = inlined_call_operand.hbm [shape: bf16[128,512], index: 3, kind: input, shape index: {}]
  %s4 = inlined_call_operand.vmem [shape: f32[1,512], index: 4, kind: input, shape index: {}]
  %s5 = inlined_call_operand.hbm [shape: bf16[512,512], index: 5, kind: input, shape index: {}]
  %s6 = inlined_call_operand.hbm [shape: bf16[512,512], index: 6, kind: input, shape index: {}]
  %s7 = inlined_call_operand.vmem [shape: f32[1,512], index: 7, kind: input, shape index: {}]
  %s8 = inlined_call_operand.hbm [shape: bf16[512,128], index: 8, kind: input, shape index: {}]
  %s9 = inlined_call_operand.vmem [shape: f32[1,128], index: 9, kind: input, shape index: {}]
  %s10 = inlined_call_operand.hbm [shape: f32[16,128], index: 10, kind: output, shape index: {}]
  %s11 = sld [smem:[#allocation0]]
  $region89: #{tpu_custom_call.1} parent=0
    _
  %s13 = ssub.s32 1, %s11
  %s14 = scalar_select 0, %s13, %s11
  $region1: #{tpu_custom_call.1} parent=0
    #allocation2 [shape = 'u8[131072]{0}', space=vmem, size = 0x20000, scoped, tag = 'input window, operand 3, single buffered']
    #allocation3 [shape = 's32[2]{0}', space=sflag, size = 0x8, scoped, tag = 'scoped memory for tpu_custom_call.1']
    #allocation4 [shape = 's32[2]{0}', space=sflag, size = 0x8, scoped, tag = 'scoped memory for tpu_custom_call.1']
    #allocation5 [shape = 'u8[524288]{0}', space=vmem, size = 0x80000, scoped, tag = 'input window, operand 5, single buffered']
    #allocation6 [shape = 's32[1]{0}', space=sflag, size = 0x4, scoped, tag = 'scoped memory for tpu_custom_call.1']
    #allocation7 [shape = 'u8[524288]{0}', space=vmem, size = 0x80000, scoped, tag = 'input window, operand 6, single buffered']
    #allocation8 [shape = 'u8[131072]{0}', space=vmem, size = 0x20000, scoped, tag = 'input window, operand 8, single buffered']
    #allocation9 [shape = 's32[1]{0}', space=sflag, size = 0x4, scoped, tag = 'scoped memory for tpu_custom_call.1']
    #allocation10 [shape = 'u8[8192]{0}', space=vmem, size = 0x2000, scoped, tag = 'output window, operand 0']
    %15 = vsyncpa [#allocation3], 0
    %16 = vsyncpa [#allocation6], 0
    %17 = vsyncpa [#allocation9], 0
    %18 = vsyncpa [#allocation4], 0
    %s19 = scalar_lea.sflag [#allocation4], 1
    %20 = vsyncpa %s19, 0
    loop: start=0, step=1, limit=4
    $region2: #{tpu_custom_call.1} parent=1 // loop_pre_header
      _
    $region3: #{tpu_custom_call.1} parent=1 // loop_header
      %s22 = sphi 0, %s26
      %p23 = scmp.ge.s32.totalorder %s22, 4
      %s32 = sphi 0, %s34
      %s35 = sphi 0, %s32
      %s36 = sphi 0, %s35
      %s52 = sphi 0, %s36
      %s56 = sphi 0, %s56
      %s58 = sphi 0, %s56
      %s59 = sphi 0, %s58
      %s73 = sphi 0, %s59
      %s77 = sphi 0, %s77
      %s79 = sphi 0, %s77
      %s80 = sphi 0, %s79
      %s94 = sphi 0, %s80
      %s98 = sphi 0, %s98
      %s100 = sphi 0, %s98
      %s101 = sphi 0, %s100
      %s115 = sphi 0, %s101
      %s119 = sphi 0, %s119
      %s121 = sphi 0, %s119
      %s122 = sphi 0, %s121
      %s136 = sphi 0, %s122
      %s140 = sphi 0, %s140
      %s142 = sphi 0, %s140
      %s143 = sphi 0, %s142
      %s157 = sphi 0, %s143
      %s161 = sphi 0, %s161
      %s163 = sphi 0, %s161
      %s164 = sphi 0, %s163
      %s178 = sphi 0, %s164
      %s182 = sphi 0, %s182
      %s184 = sphi 0, %s182
      %s185 = sphi 0, %s184
      %s199 = sphi 0, %s185
      %s203 = sphi 0, %s203
      %s205 = sphi 0, %s203
      %s206 = sphi 0, %s205
      %s220 = sphi 0, %s206
      %s224 = sphi 0, %s224
      %s226 = sphi 0, %s224
      %s227 = sphi 0, %s226
      %s241 = sphi 0, %s227
      %s247 = sphi 0, %s249
      %s250 = sphi 0, %s247
      %s251 = sphi 0, %s250
      %s267 = sphi 0, %s251
    $region4: #{tpu_custom_call.1} parent=1 // loop_header_branch
      %25 = sbr.rel (%p23) target = $region8
    $region5: #{tpu_custom_call.1} parent=1 // loop_body
      %s27 = ssub.s32 %s22, 1
      %s28 = ssub.s32 %s22, 2
      %s29 = sadd.s32 %s22, 1
      %s30 = ssub.s32 %s22, %s29
      %p31 = scmp.eq.s32.totalorder %s30, 0
      %s33 = sadd.s32 %s32, 1
      %s34 = scalar_select %p31, %s32, %s33
      %p37 = pneg %p31
      %p38 = scmp.eq.s32.totalorder %s22, 1
      %p39 = por %p37, %p38
      %p40 = scmp.ne.s32.totalorder %s32, %s35
      %p41 = scmp.eq.s32.totalorder %s22, 0
      %p42 = por %p40, %p41
      %p43 = scmp.ne.s32.totalorder %s32, %s35
      %p44 = scmp.eq.s32.totalorder %s27, 1
      %p45 = por %p43, %p44
      %p46 = scmp.ne.s32.totalorder %s35, %s36
      %p47 = scmp.eq.s32.totalorder %s27, 0
      %p48 = por %p46, %p47
      %p49 = scmp.ne.s32.totalorder %s35, %s36
      %p50 = scmp.eq.s32.totalorder %s28, 1
      %p51 = por %p49, %p50
      %p53 = scmp.ne.s32.totalorder %s36, %s52
      %p54 = scmp.eq.s32.totalorder %s28, 0
      %p55 = por %p53, %p54
      %s57 = sadd.s32 %s56, 1
      %p60 = scmp.eq.s32.totalorder %s22, 1
      %p61 = scmp.ne.s32.totalorder %s56, %s58
      %p62 = scmp.eq.s32.totalorder %s22, 0
      %p63 = por %p61, %p62
      %p64 = scmp.ne.s32.totalorder %s56, %s58
      %p65 = scmp.eq.s32.totalorder %s27, 1
      %p66 = por %p64, %p65
      %p67 = scmp.ne.s32.totalorder %s58, %s59
      %p68 = scmp.eq.s32.totalorder %s27, 0
      %p69 = por %p67, %p68
      %p70 = scmp.ne.s32.totalorder %s58, %s59
      %p71 = scmp.eq.s32.totalorder %s28, 1
      %p72 = por %p70, %p71
      %p74 = scmp.ne.s32.totalorder %s59, %s73
      %p75 = scmp.eq.s32.totalorder %s28, 0
      %p76 = por %p74, %p75
      %s78 = sadd.s32 %s77, 1
      %p81 = scmp.eq.s32.totalorder %s22, 1
      %p82 = scmp.ne.s32.totalorder %s77, %s79
      %p83 = scmp.eq.s32.totalorder %s22, 0
      %p84 = por %p82, %p83
      %p85 = scmp.ne.s32.totalorder %s77, %s79
      %p86 = scmp.eq.s32.totalorder %s27, 1
      %p87 = por %p85, %p86
      %p88 = scmp.ne.s32.totalorder %s79, %s80
      %p89 = scmp.eq.s32.totalorder %s27, 0
      %p90 = por %p88, %p89
      %p91 = scmp.ne.s32.totalorder %s79, %s80
      %p92 = scmp.eq.s32.totalorder %s28, 1
      %p93 = por %p91, %p92
      %p95 = scmp.ne.s32.totalorder %s80, %s94
      %p96 = scmp.eq.s32.totalorder %s28, 0
      %p97 = por %p95, %p96
      %s99 = sadd.s32 %s98, 1
      %p102 = scmp.eq.s32.totalorder %s22, 1
      %p103 = scmp.ne.s32.totalorder %s98, %s100
      %p104 = scmp.eq.s32.totalorder %s22, 0
      %p105 = por %p103, %p104
      %p106 = scmp.ne.s32.totalorder %s98, %s100
      %p107 = scmp.eq.s32.totalorder %s27, 1
      %p108 = por %p106, %p107
      %p109 = scmp.ne.s32.totalorder %s100, %s101
      %p110 = scmp.eq.s32.totalorder %s27, 0
      %p111 = por %p109, %p110
      %p112 = scmp.ne.s32.totalorder %s100, %s101
      %p113 = scmp.eq.s32.totalorder %s28, 1
      %p114 = por %p112, %p113
      %p116 = scmp.ne.s32.totalorder %s101, %s115
      %p117 = scmp.eq.s32.totalorder %s28, 0
      %p118 = por %p116, %p117
      %s120 = sadd.s32 %s119, 1
      %p123 = scmp.eq.s32.totalorder %s22, 1
      %p124 = scmp.ne.s32.totalorder %s119, %s121
      %p125 = scmp.eq.s32.totalorder %s22, 0
      %p126 = por %p124, %p125
      %p127 = scmp.ne.s32.totalorder %s119, %s121
      %p128 = scmp.eq.s32.totalorder %s27, 1
      %p129 = por %p127, %p128
      %p130 = scmp.ne.s32.totalorder %s121, %s122
      %p131 = scmp.eq.s32.totalorder %s27, 0
      %p132 = por %p130, %p131
      %p133 = scmp.ne.s32.totalorder %s121, %s122
      %p134 = scmp.eq.s32.totalorder %s28, 1
      %p135 = por %p133, %p134
      %p137 = scmp.ne.s32.totalorder %s122, %s136
      %p138 = scmp.eq.s32.totalorder %s28, 0
      %p139 = por %p137, %p138
      %s141 = sadd.s32 %s140, 1
      %p144 = scmp.eq.s32.totalorder %s22, 1
      %p145 = scmp.ne.s32.totalorder %s140, %s142
      %p146 = scmp.eq.s32.totalorder %s22, 0
      %p147 = por %p145, %p146
      %p148 = scmp.ne.s32.totalorder %s140, %s142
      %p149 = scmp.eq.s32.totalorder %s27, 1
      %p150 = por %p148, %p149
      %p151 = scmp.ne.s32.totalorder %s142, %s143
      %p152 = scmp.eq.s32.totalorder %s27, 0
      %p153 = por %p151, %p152
      %p154 = scmp.ne.s32.totalorder %s142, %s143
      %p155 = scmp.eq.s32.totalorder %s28, 1
      %p156 = por %p154, %p155
      %p158 = scmp.ne.s32.totalorder %s143, %s157
      %p159 = scmp.eq.s32.totalorder %s28, 0
      %p160 = por %p158, %p159
      %s162 = sadd.s32 %s161, 1
      %p165 = scmp.eq.s32.totalorder %s22, 1
      %p166 = scmp.ne.s32.totalorder %s161, %s163
      %p167 = scmp.eq.s32.totalorder %s22, 0
      %p168 = por %p166, %p167
      %p169 = scmp.ne.s32.totalorder %s161, %s163
      %p170 = scmp.eq.s32.totalorder %s27, 1
      %p171 = por %p169, %p170
      %p172 = scmp.ne.s32.totalorder %s163, %s164
      %p173 = scmp.eq.s32.totalorder %s27, 0
      %p174 = por %p172, %p173
      %p175 = scmp.ne.s32.totalorder %s163, %s164
      %p176 = scmp.eq.s32.totalorder %s28, 1
      %p177 = por %p175, %p176
      %p179 = scmp.ne.s32.totalorder %s164, %s178
      %p180 = scmp.eq.s32.totalorder %s28, 0
      %p181 = por %p179, %p180
      %s183 = sadd.s32 %s182, 1
      %p186 = scmp.eq.s32.totalorder %s22, 1
      %p187 = scmp.ne.s32.totalorder %s182, %s184
      %p188 = scmp.eq.s32.totalorder %s22, 0
      %p189 = por %p187, %p188
      %p190 = scmp.ne.s32.totalorder %s182, %s184
      %p191 = scmp.eq.s32.totalorder %s27, 1
      %p192 = por %p190, %p191
      %p193 = scmp.ne.s32.totalorder %s184, %s185
      %p194 = scmp.eq.s32.totalorder %s27, 0
      %p195 = por %p193, %p194
      %p196 = scmp.ne.s32.totalorder %s184, %s185
      %p197 = scmp.eq.s32.totalorder %s28, 1
      %p198 = por %p196, %p197
      %p200 = scmp.ne.s32.totalorder %s185, %s199
      %p201 = scmp.eq.s32.totalorder %s28, 0
      %p202 = por %p200, %p201
      %s204 = sadd.s32 %s203, 1
      %p207 = scmp.eq.s32.totalorder %s22, 1
      %p208 = scmp.ne.s32.totalorder %s203, %s205
      %p209 = scmp.eq.s32.totalorder %s22, 0
      %p210 = por %p208, %p209
      %p211 = scmp.ne.s32.totalorder %s203, %s205
      %p212 = scmp.eq.s32.totalorder %s27, 1
      %p213 = por %p211, %p212
      %p214 = scmp.ne.s32.totalorder %s205, %s206
      %p215 = scmp.eq.s32.totalorder %s27, 0
      %p216 = por %p214, %p215
      %p217 = scmp.ne.s32.totalorder %s205, %s206
      %p218 = scmp.eq.s32.totalorder %s28, 1
      %p219 = por %p217, %p218
      %p221 = scmp.ne.s32.totalorder %s206, %s220
      %p222 = scmp.eq.s32.totalorder %s28, 0
      %p223 = por %p221, %p222
      %s225 = sadd.s32 %s224, 1
      %p228 = scmp.eq.s32.totalorder %s22, 1
      %p229 = scmp.ne.s32.totalorder %s224, %s226
      %p230 = scmp.eq.s32.totalorder %s22, 0
      %p231 = por %p229, %p230
      %p232 = scmp.ne.s32.totalorder %s224, %s226
      %p233 = scmp.eq.s32.totalorder %s27, 1
      %p234 = por %p232, %p233
      %p235 = scmp.ne.s32.totalorder %s226, %s227
      %p236 = scmp.eq.s32.totalorder %s27, 0
      %p237 = por %p235, %p236
      %p238 = scmp.ne.s32.totalorder %s226, %s227
      %p239 = scmp.eq.s32.totalorder %s28, 1
      %p240 = por %p238, %p239
      %p242 = scmp.ne.s32.totalorder %s227, %s241
      %p243 = scmp.eq.s32.totalorder %s28, 0
      %p244 = por %p242, %p243
      %s245 = ssub.s32 %s22, %s29
      %p246 = scmp.eq.s32.totalorder %s245, 0
      %s248 = sadd.s32 %s247, 1
      %s249 = scalar_select %p246, %s247, %s248
      %p252 = pneg %p246
      %p253 = scmp.eq.s32.totalorder %s22, 1
      %p254 = por %p252, %p253
      %p255 = scmp.ne.s32.totalorder %s247, %s250
      %p256 = scmp.eq.s32.totalorder %s22, 0
      %p257 = por %p255, %p256
      %p258 = scmp.ne.s32.totalorder %s247, %s250
      %p259 = scmp.eq.s32.totalorder %s27, 1
      %p260 = por %p258, %p259
      %p261 = scmp.ne.s32.totalorder %s250, %s251
      %p262 = scmp.eq.s32.totalorder %s27, 0
      %p263 = por %p261, %p262
      %p264 = scmp.ne.s32.totalorder %s250, %s251
      %p265 = scmp.eq.s32.totalorder %s28, 1
      %p266 = por %p264, %p265
      %p268 = scmp.ne.s32.totalorder %s251, %s267
      %p269 = scmp.eq.s32.totalorder %s28, 0
      %p270 = por %p268, %p269
      %p271 = scmp.le.s32.totalorder 1, %s22
      %p272 = scmp.lt.s32.totalorder %s22, 3
      %p273 = pnand %p271, %p272
      %p274 = pneg %p273
      // Predicated region
      $region9: #{tpu_custom_call.1} parent=5 // pred_check
        _
      $region10: #{tpu_custom_call.1} parent=5 // pred_check_branch
        %276 = sbr.rel (%p273) target = $region12
      $region11: #{tpu_custom_call.1} parent=5 // pred_region
        %s277 = ssub.s32 %s22, 1
        // Predicated region
        $region13: #{tpu_custom_call.1} parent=11 // pred_check
          %p278 = pneg %p69
        $region14: #{tpu_custom_call.1} parent=11 // pred_check_branch
          %280 = sbr.rel (%p278) target = $region16
        $region15: #{tpu_custom_call.1} parent=11 // pred_region
          _
        $region16: #{tpu_custom_call.1} parent=11 // pred_fallthru
          _
        // Predicated region
        $region17: #{tpu_custom_call.1} parent=11 // pred_check
          %p281 = pneg %p90
        $region18: #{tpu_custom_call.1} parent=11 // pred_check_branch
          %283 = sbr.rel (%p281) target = $region20
        $region19: #{tpu_custom_call.1} parent=11 // pred_region
          _
        $region20: #{tpu_custom_call.1} parent=11 // pred_fallthru
          _
        // Predicated region
        $region21: #{tpu_custom_call.1} parent=11 // pred_check
          %p284 = pneg %p111
        $region22: #{tpu_custom_call.1} parent=11 // pred_check_branch
          %286 = sbr.rel (%p284) target = $region24
        $region23: #{tpu_custom_call.1} parent=11 // pred_region
          %s288 = ssub.s32 4096, 4096
          %289 = vsyncadd [#allocation3], %s288
          %s290 = sshll.u32 [#allocation2], 4
          %s291 = int_to_ptr.vmem [resolvable:$true] %s290
          %296 = dma.hbm_to_vmem [thread:$0]  %s3, 4096, %s291, [#allocation3], 256, 256, 16
        $region24: #{tpu_custom_call.1} parent=11 // pred_fallthru
          _
        // Predicated region
        $region25: #{tpu_custom_call.1} parent=11 // pred_check
          %p297 = pneg %p132
        $region26: #{tpu_custom_call.1} parent=11 // pred_check_branch
          %299 = sbr.rel (%p297) target = $region28
        $region27: #{tpu_custom_call.1} parent=11 // pred_region
          _
        $region28: #{tpu_custom_call.1} parent=11 // pred_fallthru
          _
        // Predicated region
        $region29: #{tpu_custom_call.1} parent=11 // pred_check
          %p300 = pneg %p153
        $region30: #{tpu_custom_call.1} parent=11 // pred_check_branch
          %302 = sbr.rel (%p300) target = $region32
        $region31: #{tpu_custom_call.1} parent=11 // pred_region
          %s304 = ssub.s32 16384, 16384
          %305 = vsyncadd [#allocation6], %s304
          %s306 = sshll.u32 [#allocation5], 4
          %s307 = int_to_ptr.vmem [resolvable:$true] %s306
          %312 = dma.hbm_to_vmem [thread:$0]  %s5, 16384, %s307, [#allocation6], 256, 256, 16
        $region32: #{tpu_custom_call.1} parent=11 // pred_fallthru
          _
        // Predicated region
        $region33: #{tpu_custom_call.1} parent=11 // pred_check
          %p313 = pneg %p174
        $region34: #{tpu_custom_call.1} parent=11 // pred_check_branch
          %315 = sbr.rel (%p313) target = $region36
        $region35: #{tpu_custom_call.1} parent=11 // pred_region
          %s317 = ssub.s32 16384, 16384
          %318 = vsyncadd [#allocation6], %s317
          %s319 = sshll.u32 [#allocation7], 4
          %s320 = int_to_ptr.vmem [resolvable:$true] %s319
          %325 = dma.hbm_to_vmem [thread:$0]  %s6, 16384, %s320, [#allocation6], 256, 256, 16
        $region36: #{tpu_custom_call.1} parent=11 // pred_fallthru
          _
        // Predicated region
        $region37: #{tpu_custom_call.1} parent=11 // pred_check
          %p326 = pneg %p195
        $region38: #{tpu_custom_call.1} parent=11 // pred_check_branch
          %328 = sbr.rel (%p326) target = $region40
        $region39: #{tpu_custom_call.1} parent=11 // pred_region
          _
        $region40: #{tpu_custom_call.1} parent=11 // pred_fallthru
          _
        // Predicated region
        $region41: #{tpu_custom_call.1} parent=11 // pred_check
          %p329 = pneg %p216
        $region42: #{tpu_custom_call.1} parent=11 // pred_check_branch
          %331 = sbr.rel (%p329) target = $region44
        $region43: #{tpu_custom_call.1} parent=11 // pred_region
          %s333 = ssub.s32 4096, 4096
          %334 = vsyncadd [#allocation9], %s333
          %s335 = sshll.u32 [#allocation8], 4
          %s336 = int_to_ptr.vmem [resolvable:$true] %s335
          %341 = dma.hbm_to_vmem [thread:$0]  %s8, 4096, %s336, [#allocation9], 64, 64, 4
        $region44: #{tpu_custom_call.1} parent=11 // pred_fallthru
          _
        // Predicated region
        $region45: #{tpu_custom_call.1} parent=11 // pred_check
          %p342 = pneg %p237
        $region46: #{tpu_custom_call.1} parent=11 // pred_check_branch
          %344 = sbr.rel (%p342) target = $region48
        $region47: #{tpu_custom_call.1} parent=11 // pred_region
          _
        $region48: #{tpu_custom_call.1} parent=11 // pred_fallthru
          _
      $region12: #{tpu_custom_call.1} parent=5 // pred_fallthru
        _
      %p345 = scmp.lt.s32.totalorder %s22, 2
      // Predicated region
      $region49: #{tpu_custom_call.1} parent=5 // pred_check
        %p346 = pneg %p345
      $region50: #{tpu_custom_call.1} parent=5 // pred_check_branch
        %348 = sbr.rel (%p346) target = $region52
      $region51: #{tpu_custom_call.1} parent=5 // pred_region
        // Predicated region
        $region53: #{tpu_custom_call.1} parent=51 // pred_check
          %p349 = pneg %p42
        $region54: #{tpu_custom_call.1} parent=51 // pred_check_branch
          %351 = sbr.rel (%p349) target = $region56
        $region55: #{tpu_custom_call.1} parent=51 // pred_region
          %s352 = smul.u32 16, %s22
          %p353 = scmp.lt.s32.totalorder %s352, 31
          %s354 = scalar_select %p353, %s352, 31
          %s355 = smul.addr %s354, 4
          %s356 = scalar_lea.vmem %s0, %s355
          %s357 = smul.u32 16, %s22
        $region56: #{tpu_custom_call.1} parent=51 // pred_fallthru
          _
      $region52: #{tpu_custom_call.1} parent=5 // pred_fallthru
        _
      %p358 = scmp.le.s32.totalorder 1, %s22
      %p359 = scmp.lt.s32.totalorder %s22, 3
      %p360 = pnand %p358, %p359
      %p361 = pneg %p360
      // Predicated region
      $region57: #{tpu_custom_call.1} parent=5 // pred_check
        _
      $region58: #{tpu_custom_call.1} parent=5 // pred_check_branch
        %363 = sbr.rel (%p360) target = $region60
      $region59: #{tpu_custom_call.1} parent=5 // pred_region
        %s364 = ssub.s32 %s22, 1
        // Predicated region
        $region61: #{tpu_custom_call.1} parent=59 // pred_check
          %p365 = pneg %p111
        $region62: #{tpu_custom_call.1} parent=59 // pred_check_branch
          %367 = sbr.rel (%p365) target = $region64
        $region63: #{tpu_custom_call.1} parent=59 // pred_region
          %368 = dma.done [#allocation3], 4096
        $region64: #{tpu_custom_call.1} parent=59 // pred_fallthru
          _
        // Predicated region
        $region65: #{tpu_custom_call.1} parent=59 // pred_check
          %p369 = pneg %p153
        $region66: #{tpu_custom_call.1} parent=59 // pred_check_branch
          %371 = sbr.rel (%p369) target = $region68
        $region67: #{tpu_custom_call.1} parent=59 // pred_region
          %372 = dma.done [#allocation6], 16384
        $region68: #{tpu_custom_call.1} parent=59 // pred_fallthru
          _
        // Predicated region
        $region69: #{tpu_custom_call.1} parent=59 // pred_check
          %p373 = pneg %p174
        $region70: #{tpu_custom_call.1} parent=59 // pred_check_branch
          %375 = sbr.rel (%p373) target = $region72
        $region71: #{tpu_custom_call.1} parent=59 // pred_region
          %376 = dma.done [#allocation6], 16384
        $region72: #{tpu_custom_call.1} parent=59 // pred_fallthru
          _
        // Predicated region
        $region73: #{tpu_custom_call.1} parent=59 // pred_check
          %p377 = pneg %p216
        $region74: #{tpu_custom_call.1} parent=59 // pred_check_branch
          %379 = sbr.rel (%p377) target = $region76
        $region75: #{tpu_custom_call.1} parent=59 // pred_region
          %380 = dma.done [#allocation9], 4096
        $region76: #{tpu_custom_call.1} parent=59 // pred_fallthru
          _
        %s381 = smul.u32 16, %s27
        %p382 = scmp.lt.s32.totalorder %s381, 31
        %s383 = scalar_select %p382, %s381, 31
        %s384 = smul.addr %s383, 4
        %s385 = scalar_lea.vmem %s0, %s384
        %p386 = pneg %p48
        %p387 = pneg %p45
        %p388 = pneg %p69
        %p389 = pneg %p66
        %p390 = pneg %p90
        %p391 = pneg %p87
        %p392 = pneg %p111
        %p393 = pneg %p108
        %p394 = pneg %p132
        %p395 = pneg %p129
        %p396 = pneg %p153
        %p397 = pneg %p150
        %p398 = pneg %p174
        %p399 = pneg %p171
        %p400 = pneg %p195
        %p401 = pneg %p192
        %p402 = pneg %p216
        %p403 = pneg %p213
        %p404 = pneg %p237
        %p405 = pneg %p234
        %p406 = pneg %p263
        %p407 = pneg %p260
        %s408 = sand.u32 %s250, 1
        %s409 = scalar_lea.sflag [#allocation4], %s408
        %s410 = sand.u32 %s250, 1
        %s411 = smul.addr %s410, 8
        %s412 = scalar_lea.vmem [#allocation10], %s411
        %s413 = smul.u32 16, %s27
        %p414 = scmp.lt.s32.totalorder %s413, 31
        %s415 = scalar_select %p414, %s413, 31
        %s416 = smul.addr %s415, 4
        %s417 = scalar_lea.vmem %s0, %s416
        %s418 = smul.u32 16, %s27
        %v424 = vld [vmem:[%s417] sm:$0xf]
        %v425 = vld [vmem:[%s417 + $0x4] sm:$0xf]
        %v426 = vld [vmem:[%s417 + $0x8] sm:$0xf]
        %v427 = vld [vmem:[%s417 + $0xc] sm:$0xf]
        %v428 = vld [vmem:[%s417 + $0x10] sm:$0xf]
        %v429 = vld [vmem:[%s417 + $0x14] sm:$0xf]
        %v430 = vld [vmem:[%s417 + $0x18] sm:$0xf]
        %v431 = vld [vmem:[%s417 + $0x1c] sm:$0xf]
        %v432 = vld [vmem:[%s417 + $0x20] sm:$0xf]
        %v433 = vld [vmem:[%s417 + $0x24] sm:$0xf]
        %v434 = vld [vmem:[%s417 + $0x28] sm:$0xf]
        %v435 = vld [vmem:[%s417 + $0x2c] sm:$0xf]
        %v436 = vld [vmem:[%s417 + $0x30] sm:$0xf]
        %v437 = vld [vmem:[%s417 + $0x34] sm:$0xf]
        %v438 = vld [vmem:[%s417 + $0x38] sm:$0xf]
        %v439 = vld [vmem:[%s417 + $0x3c] sm:$0xf]
        %v440 = vld [vmem:[%s1] sm:$0x7]
        %v441 = vld [vmem:[%s2] sm:$0x1]
        %v443 = vlaneseq
        %v444 = vshrl.u32 %v443, 7
        %v445 = vsub.s32 0, %v444
        %v446 = vrot.slane %v441, %v445
        %v464 = vunpack.c.l.b16 %v424
        %v465 = vunpack.c.l.b16 %v425
        %v466 = vunpack.c.l.b16 %v426
        %v467 = vunpack.c.l.b16 %v427
        %v468 = vunpack.c.l.b16 %v428
        %v469 = vunpack.c.l.b16 %v429
        %v470 = vunpack.c.l.b16 %v430
        %v471 = vunpack.c.l.b16 %v431
        %v472 = vunpack.c.l.b16 %v432
        %v473 = vunpack.c.l.b16 %v433
        %v474 = vunpack.c.l.b16 %v434
        %v475 = vunpack.c.l.b16 %v435
        %v476 = vunpack.c.l.b16 %v436
        %v477 = vunpack.c.l.b16 %v437
        %v478 = vunpack.c.l.b16 %v438
        %v479 = vunpack.c.l.b16 %v439
        %v480 = vpack.c.b16 %v465, %v464
        %v481 = vpack.c.b16 %v467, %v466
        %v482 = vpack.c.b16 %v469, %v468
        %v483 = vpack.c.b16 %v471, %v470
        %v484 = vpack.c.b16 %v473, %v472
        %v485 = vpack.c.b16 %v475, %v474
        %v486 = vpack.c.b16 %v477, %v476
        %v487 = vpack.c.b16 %v479, %v478
        %vm488 = vcmask 48128
        %v490 = vsel %vm488, %v480, 0
        %v493 = vsel %vm488, %v481, 0
        %v496 = vsel %vm488, %v482, 0
        %v499 = vsel %vm488, %v483, 0
        %v502 = vsel %vm488, %v484, 0
        %v505 = vsel %vm488, %v485, 0
        %v508 = vsel %vm488, %v486, 0
        %v511 = vsel %vm488, %v487, 0
        %vm513 = vcmask 1042432
        %v515 = vsel %vm513, %v440, 0
        %517 = vmatprep.subr.bf16.mxu0 0
        %518 = vmatpush1.bf16.msra.mxu0 %v515
        %519 = vmatprep.subr.bf16.mxu0 0
        %520 = vmatpush1.bf16.msra.mxu0 0
        %521 = vmatprep.subr.bf16.mxu0 0
        %522 = vmatpush1.bf16.msra.mxu0 0
        %523 = vmatprep.subr.bf16.mxu0 0
        %524 = vmatpush1.bf16.msra.mxu0 0
        %525 = vmatprep.subr.bf16.mxu0 0
        %526 = vmatpush1.bf16.msra.mxu0 0
        %527 = vmatprep.subr.bf16.mxu0 0
        %528 = vmatpush1.bf16.msra.mxu0 0
        %529 = vmatprep.subr.bf16.mxu0 0
        %530 = vmatpush1.bf16.msra.mxu0 0
        %531 = vmatprep.subr.bf16.mxu0 0
        %532 = vmatpush1.bf16.msra.mxu0 0
        %533 = vmatprep.subr.bf16.mxu0 0
        %534 = vmatpush1.bf16.msra.mxu0 0
        %535 = vmatprep.subr.bf16.mxu0 0
        %536 = vmatpush1.bf16.msra.mxu0 0
        %537 = vmatprep.subr.bf16.mxu0 0
        %538 = vmatpush1.bf16.msra.mxu0 0
        %539 = vmatprep.subr.bf16.mxu0 0
        %540 = vmatpush1.bf16.msra.mxu0 0
        %541 = vmatprep.subr.bf16.mxu0 0
        %542 = vmatpush1.bf16.msra.mxu0 0
        %543 = vmatprep.subr.bf16.mxu0 0
        %544 = vmatpush1.bf16.msra.mxu0 0
        %545 = vmatprep.subr.bf16.mxu0 0
        %546 = vmatpush1.bf16.msra.mxu0 0
        %547 = vmatprep.subr.bf16.mxu0 0
        %548 = vmatpush1.bf16.msra.mxu0 0
        %549 = vmatprep.mubr.bf16.mxu0 0
        %550 = vmatmul.mubr.bf16.gmra.mrb[0].mxu0 %v490
        %v551 = vpop.f32.mrb[0].mxu0
        %v552 = vadd.f32 %v446, %v551
        %v553 = vpop.f32.mrb[0].mxu0
        %v554 = vpop.f32.mrb[0].mxu0
        %v555 = vadd.f32 %v446, %v554
        %v556 = vpop.f32.mrb[0].mxu0
        %557 = vmatprep.mubr.bf16.mxu0 0
        %558 = vmatmul.mubr.bf16.gmra.mrb[0].mxu0 %v493
        %v559 = vpop.f32.mrb[0].mxu0
        %v560 = vadd.f32 %v446, %v559
        %v561 = vpop.f32.mrb[0].mxu0
        %v562 = vpop.f32.mrb[0].mxu0
        %v563 = vadd.f32 %v446, %v562
        %v564 = vpop.f32.mrb[0].mxu0
        %565 = vmatprep.mubr.bf16.mxu0 0
        %566 = vmatmul.mubr.bf16.gmra.mrb[0].mxu0 %v496
        %v567 = vpop.f32.mrb[0].mxu0
        %v568 = vadd.f32 %v446, %v567
        %v569 = vpop.f32.mrb[0].mxu0
        %v570 = vpop.f32.mrb[0].mxu0
        %v571 = vadd.f32 %v446, %v570
        %v572 = vpop.f32.mrb[0].mxu0
        %573 = vmatprep.mubr.bf16.mxu0 0
        %574 = vmatmul.mubr.bf16.gmra.mrb[0].mxu0 %v499
        %v575 = vpop.f32.mrb[0].mxu0
        %v576 = vadd.f32 %v446, %v575
        %v577 = vpop.f32.mrb[0].mxu0
        %v578 = vpop.f32.mrb[0].mxu0
        %v579 = vadd.f32 %v446, %v578
        %v580 = vpop.f32.mrb[0].mxu0
        %581 = vmatprep.mubr.bf16.mxu0 0
        %582 = vmatmul.mubr.bf16.gmra.mrb[0].mxu0 %v502
        %v583 = vpop.f32.mrb[0].mxu0
        %v584 = vadd.f32 %v446, %v583
        %v585 = vpop.f32.mrb[0].mxu0
        %v586 = vpop.f32.mrb[0].mxu0
        %v587 = vadd.f32 %v446, %v586
        %v588 = vpop.f32.mrb[0].mxu0
        %589 = vmatprep.mubr.bf16.mxu0 0
        %590 = vmatmul.mubr.bf16.gmra.mrb[0].mxu0 %v505
        %v591 = vpop.f32.mrb[0].mxu0
        %v592 = vadd.f32 %v446, %v591
        %v593 = vpop.f32.mrb[0].mxu0
        %v594 = vpop.f32.mrb[0].mxu0
        %v595 = vadd.f32 %v446, %v594
        %v596 = vpop.f32.mrb[0].mxu0
        %597 = vmatprep.mubr.bf16.mxu0 0
        %598 = vmatmul.mubr.bf16.gmra.mrb[0].mxu0 %v508
        %v599 = vpop.f32.mrb[0].mxu0
        %v600 = vadd.f32 %v446, %v599
        %v601 = vpop.f32.mrb[0].mxu0
        %v602 = vpop.f32.mrb[0].mxu0
        %v603 = vadd.f32 %v446, %v602
        %v604 = vpop.f32.mrb[0].mxu0
        %605 = vmatprep.mubr.bf16.mxu0 0
        %606 = vmatmul.mubr.bf16.gmra.mrb[0].mxu0 %v511
        %v607 = vpop.f32.mrb[0].mxu0
        %v608 = vadd.f32 %v446, %v607
        %v609 = vpop.f32.mrb[0].mxu0
        %v610 = vpop.f32.mrb[0].mxu0
        %v611 = vadd.f32 %v446, %v610
        %v612 = vpop.f32.mrb[0].mxu0
        %613 = vdwg.mxu0
        %v614 = vpack.c.bf16 %v555, %v552
        %v615 = vpack.c.bf16 %v563, %v560
        %v616 = vpack.c.bf16 %v571, %v568
        %v617 = vpack.c.bf16 %v579, %v576
        %v618 = vpack.c.bf16 %v587, %v584
        %v619 = vpack.c.bf16 %v595, %v592
        %v620 = vpack.c.bf16 %v603, %v600
        %v621 = vpack.c.bf16 %v611, %v608
        %v622 = vmul.bf16 %v614, 1056980736
        %v623 = vmul.bf16 %v615, 1056980736
        %v624 = vmul.bf16 %v616, 1056980736
        %v625 = vmul.bf16 %v617, 1056980736
        %v626 = vmul.bf16 %v618, 1056980736
        %v627 = vmul.bf16 %v619, 1056980736
        %v628 = vmul.bf16 %v620, 1056980736
        %v629 = vmul.bf16 %v621, 1056980736
        %v630 = vmul.bf16 %v614, %v614
        %v631 = vmul.bf16 %v615, %v615
        %v632 = vmul.bf16 %v616, %v616
        %v633 = vmul.bf16 %v617, %v617
        %v634 = vmul.bf16 %v618, %v618
        %v635 = vmul.bf16 %v619, %v619
        %v636 = vmul.bf16 %v620, %v620
        %v637 = vmul.bf16 %v621, %v621
        %v638 = vmul.bf16 %v630, %v614
        %v639 = vmul.bf16 %v631, %v615
        %v640 = vmul.bf16 %v632, %v616
        %v641 = vmul.bf16 %v633, %v617
        %v642 = vmul.bf16 %v634, %v618
        %v643 = vmul.bf16 %v635, %v619
        %v644 = vmul.bf16 %v636, %v620
        %v645 = vmul.bf16 %v637, %v621
        %v646 = vmul.bf16 %v638, 1027030327
        %v647 = vmul.bf16 %v639, 1027030327
        %v648 = vmul.bf16 %v640, 1027030327
        %v649 = vmul.bf16 %v641, 1027030327
        %v650 = vmul.bf16 %v642, 1027030327
        %v651 = vmul.bf16 %v643, 1027030327
        %v652 = vmul.bf16 %v644, 1027030327
        %v653 = vmul.bf16 %v645, 1027030327
        %v654 = vadd.bf16 %v614, %v646
        %v655 = vadd.bf16 %v615, %v647
        %v656 = vadd.bf16 %v616, %v648
        %v657 = vadd.bf16 %v617, %v649
        %v658 = vadd.bf16 %v618, %v650
        %v659 = vadd.bf16 %v619, %v651
        %v660 = vadd.bf16 %v620, %v652
        %v661 = vadd.bf16 %v621, %v653
        %v662 = vmul.bf16 %v654, 1061961548
        %v663 = vmul.bf16 %v655, 1061961548
        %v664 = vmul.bf16 %v656, 1061961548
        %v665 = vmul.bf16 %v657, 1061961548
        %v666 = vmul.bf16 %v658, 1061961548
        %v667 = vmul.bf16 %v659, 1061961548
        %v668 = vmul.bf16 %v660, 1061961548
        %v669 = vmul.bf16 %v661, 1061961548
        %v670 = vtanh.bf16.pop %v662
        %v671 = vtanh.bf16.pop %v663
        %v672 = vtanh.bf16.pop %v664
        %v673 = vtanh.bf16.pop %v665
        %v674 = vtanh.bf16.pop %v666
        %v675 = vtanh.bf16.pop %v667
        %v676 = vtanh.bf16.pop %v668
        %v677 = vtanh.bf16.pop %v669
        %v678 = vadd.bf16 %v670, 1065369472
        %v679 = vadd.bf16 %v671, 1065369472
        %v680 = vadd.bf16 %v672, 1065369472
        %v681 = vadd.bf16 %v673, 1065369472
        %v682 = vadd.bf16 %v674, 1065369472
        %v683 = vadd.bf16 %v675, 1065369472
        %v684 = vadd.bf16 %v676, 1065369472
        %v685 = vadd.bf16 %v677, 1065369472
        %v686 = vmul.bf16 %v622, %v678
        %v687 = vmul.bf16 %v623, %v679
        %v688 = vmul.bf16 %v624, %v680
        %v689 = vmul.bf16 %v625, %v681
        %v690 = vmul.bf16 %v626, %v682
        %v691 = vmul.bf16 %v627, %v683
        %v692 = vmul.bf16 %v628, %v684
        %v693 = vmul.bf16 %v629, %v685
        %v694 = vld [vmem:[#allocation2] sm:$0xff]
        %v695 = vld [vmem:[#allocation2 + $0x8] sm:$0xff]
        %v696 = vld [vmem:[#allocation2 + $0x10] sm:$0xff]
        %v697 = vld [vmem:[#allocation2 + $0x18] sm:$0xff]
        %v698 = vld [vmem:[#allocation2 + $0x20] sm:$0xff]
        %v699 = vld [vmem:[#allocation2 + $0x28] sm:$0xff]
        %v700 = vld [vmem:[#allocation2 + $0x30] sm:$0xff]
        %v701 = vld [vmem:[#allocation2 + $0x38] sm:$0xff]
        %v702 = vld [vmem:[#allocation2 + $0x40] sm:$0xff]
        %v703 = vld [vmem:[#allocation2 + $0x48] sm:$0xff]
        %v704 = vld [vmem:[#allocation2 + $0x50] sm:$0xff]
        %v705 = vld [vmem:[#allocation2 + $0x58] sm:$0xff]
        %v706 = vld [vmem:[#allocation2 + $0x60] sm:$0xff]
        %v707 = vld [vmem:[#allocation2 + $0x68] sm:$0xff]
        %v708 = vld [vmem:[#allocation2 + $0x70] sm:$0xff]
        %v709 = vld [vmem:[#allocation2 + $0x78] sm:$0xff]
        %v710 = vld [vmem:[#allocation2 + $0x80] sm:$0xff]
        %v711 = vld [vmem:[#allocation2 + $0x88] sm:$0xff]
        %v712 = vld [vmem:[#allocation2 + $0x90] sm:$0xff]
        %v713 = vld [vmem:[#allocation2 + $0x98] sm:$0xff]
        %v714 = vld [vmem:[#allocation2 + $0xa0] sm:$0xff]
        %v715 = vld [vmem:[#allocation2 + $0xa8] sm:$0xff]
        %v716 = vld [vmem:[#allocation2 + $0xb0] sm:$0xff]
        %v717 = vld [vmem:[#allocation2 + $0xb8] sm:$0xff]
        %v718 = vld [vmem:[#allocation2 + $0xc0] sm:$0xff]
        %v719 = vld [vmem:[#allocation2 + $0xc8] sm:$0xff]
        %v720 = vld [vmem:[#allocation2 + $0xd0] sm:$0xff]
        %v721 = vld [vmem:[#allocation2 + $0xd8] sm:$0xff]
        %v722 = vld [vmem:[#allocation2 + $0xe0] sm:$0xff]
        %v723 = vld [vmem:[#allocation2 + $0xe8] sm:$0xff]
        %v724 = vld [vmem:[#allocation2 + $0xf0] sm:$0xff]
        %v725 = vld [vmem:[#allocation2 + $0xf8] sm:$0xff]
        %v726 = vld [vmem:[%s4] sm:$0xf]
        %v728 = vlaneseq
        %v729 = vshrl.u32 %v728, 7
        %v730 = vsub.s32 0, %v729
        %v731 = vrot.slane %v726, %v730
        %v732 = vlaneseq
        %v733 = vshrl.u32 %v732, 7
        %v734 = vsub.s32 1, %v733
        %v735 = vrot.slane %v726, %v734
        %v736 = vlaneseq
        %v737 = vshrl.u32 %v736, 7
        %v738 = vsub.s32 2, %v737
        %v739 = vrot.slane %v726, %v738
        %v740 = vlaneseq
        %v741 = vshrl.u32 %v740, 7
        %v742 = vsub.s32 3, %v741
        %v743 = vrot.slane %v726, %v742
        %v780 = vunpack.c.l.b16 %v694
        %v781 = vunpack.c.h.b16 %v694
        %v782 = vunpack.c.l.b16 %v695
        %v783 = vunpack.c.h.b16 %v695
        %v784 = vunpack.c.l.b16 %v696
        %v785 = vunpack.c.h.b16 %v696
        %v786 = vunpack.c.l.b16 %v697
        %v787 = vunpack.c.h.b16 %v697
        %v788 = vunpack.c.l.b16 %v698
        %v789 = vunpack.c.h.b16 %v698
        %v790 = vunpack.c.l.b16 %v699
        %v791 = vunpack.c.h.b16 %v699
        %v792 = vunpack.c.l.b16 %v700
        %v793 = vunpack.c.h.b16 %v700
        %v794 = vunpack.c.l.b16 %v701
        %v795 = vunpack.c.h.b16 %v701
        %v796 = vunpack.c.l.b16 %v702
        %v797 = vunpack.c.h.b16 %v702
        %v798 = vunpack.c.l.b16 %v703
        %v799 = vunpack.c.h.b16 %v703
        %v800 = vunpack.c.l.b16 %v704
        %v801 = vunpack.c.h.b16 %v704
        %v802 = vunpack.c.l.b16 %v705
        %v803 = vunpack.c.h.b16 %v705
        %v804 = vunpack.c.l.b16 %v706
        %v805 = vunpack.c.h.b16 %v706
        %v806 = vunpack.c.l.b16 %v707
        %v807 = vunpack.c.h.b16 %v707
        %v808 = vunpack.c.l.b16 %v708
        %v809 = vunpack.c.h.b16 %v708
        %v810 = vunpack.c.l.b16 %v709
        %v811 = vunpack.c.h.b16 %v709
        %v812 = vunpack.c.l.b16 %v710
        %v813 = vunpack.c.h.b16 %v710
        %v814 = vunpack.c.l.b16 %v711
        %v815 = vunpack.c.h.b16 %v711
        %v816 = vunpack.c.l.b16 %v712
        %v817 = vunpack.c.h.b16 %v712
        %v818 = vunpack.c.l.b16 %v713
        %v819 = vunpack.c.h.b16 %v713
        %v820 = vunpack.c.l.b16 %v714
        %v821 = vunpack.c.h.b16 %v714
        %v822 = vunpack.c.l.b16 %v715
        %v823 = vunpack.c.h.b16 %v715
        %v824 = vunpack.c.l.b16 %v716
        %v825 = vunpack.c.h.b16 %v716
        %v826 = vunpack.c.l.b16 %v717
        %v827 = vunpack.c.h.b16 %v717
        %v828 = vunpack.c.l.b16 %v718
        %v829 = vunpack.c.h.b16 %v718
        %v830 = vunpack.c.l.b16 %v719
        %v831 = vunpack.c.h.b16 %v719
        %v832 = vunpack.c.l.b16 %v720
        %v833 = vunpack.c.h.b16 %v720
        %v834 = vunpack.c.l.b16 %v721
        %v835 = vunpack.c.h.b16 %v721
        %v836 = vunpack.c.l.b16 %v722
        %v837 = vunpack.c.h.b16 %v722
        %v838 = vunpack.c.l.b16 %v723
        %v839 = vunpack.c.h.b16 %v723
        %v840 = vunpack.c.l.b16 %v724
        %v841 = vunpack.c.h.b16 %v724
        %v842 = vunpack.c.l.b16 %v725
        %v843 = vunpack.c.h.b16 %v725
        %v844 = vpack.c.b16 %v784, %v780
        %v845 = vpack.c.b16 %v785, %v781
        %v846 = vpack.c.b16 %v786, %v782
        %v847 = vpack.c.b16 %v787, %v783
        %v848 = vpack.c.b16 %v792, %v788
        %v849 = vpack.c.b16 %v793, %v789
        %v850 = vpack.c.b16 %v794, %v790
        %v851 = vpack.c.b16 %v795, %v791
        %v852 = vpack.c.b16 %v800, %v796
        %v853 = vpack.c.b16 %v801, %v797
        %v854 = vpack.c.b16 %v802, %v798
        %v855 = vpack.c.b16 %v803, %v799
        %v856 = vpack.c.b16 %v808, %v804
        %v857 = vpack.c.b16 %v809, %v805
        %v858 = vpack.c.b16 %v810, %v806
        %v859 = vpack.c.b16 %v811, %v807
        %v860 = vpack.c.b16 %v816, %v812
        %v861 = vpack.c.b16 %v817, %v813
        %v862 = vpack.c.b16 %v818, %v814
        %v863 = vpack.c.b16 %v819, %v815
        %v864 = vpack.c.b16 %v824, %v820
        %v865 = vpack.c.b16 %v825, %v821
        %v866 = vpack.c.b16 %v826, %v822
        %v867 = vpack.c.b16 %v827, %v823
        %v868 = vpack.c.b16 %v832, %v828
        %v869 = vpack.c.b16 %v833, %v829
        %v870 = vpack.c.b16 %v834, %v830
        %v871 = vpack.c.b16 %v835, %v831
        %v872 = vpack.c.b16 %v840, %v836
        %v873 = vpack.c.b16 %v841, %v837
        %v874 = vpack.c.b16 %v842, %v838
        %v875 = vpack.c.b16 %v843, %v839
        %908 = vmatprep.subr.bf16.mxu0 %v845
        %909 = vmatpush1.bf16.msra.mxu0 %v844
        %910 = vmatprep.subr.bf16.mxu0 %v849
        %911 = vmatpush1.bf16.msra.mxu0 %v848
        %912 = vmatprep.subr.bf16.mxu0 %v853
        %913 = vmatpush1.bf16.msra.mxu0 %v852
        %914 = vmatprep.subr.bf16.mxu0 %v857
        %915 = vmatpush1.bf16.msra.mxu0 %v856
        %916 = vmatprep.subr.bf16.mxu0 %v861
        %917 = vmatpush1.bf16.msra.mxu0 %v860
        %918 = vmatprep.subr.bf16.mxu0 %v865
        %919 = vmatpush1.bf16.msra.mxu0 %v864
        %920 = vmatprep.subr.bf16.mxu0 %v869
        %921 = vmatpush1.bf16.msra.mxu0 %v868
        %922 = vmatprep.subr.bf16.mxu0 %v873
        %923 = vmatpush1.bf16.msra.mxu0 %v872
        %924 = vmatprep.subr.bf16.mxu0 0
        %925 = vmatpush1.bf16.msra.mxu0 0
        %926 = vmatprep.subr.bf16.mxu0 0
        %927 = vmatpush1.bf16.msra.mxu0 0
        %928 = vmatprep.subr.bf16.mxu0 0
        %929 = vmatpush1.bf16.msra.mxu0 0
        %930 = vmatprep.subr.bf16.mxu0 0
        %931 = vmatpush1.bf16.msra.mxu0 0
        %932 = vmatprep.subr.bf16.mxu0 0
        %933 = vmatpush1.bf16.msra.mxu0 0
        %934 = vmatprep.subr.bf16.mxu0 0
        %935 = vmatpush1.bf16.msra.mxu0 0
        %936 = vmatprep.subr.bf16.mxu0 0
        %937 = vmatpush1.bf16.msra.mxu0 0
        %938 = vmatprep.subr.bf16.mxu0 0
        %939 = vmatpush1.bf16.msra.mxu0 0
        %940 = vmatprep.mubr.bf16.mxu0 0
        %941 = vmatmul.mubr.bf16.gmra.mrb[0].mxu0 %v686
        %v942 = vpop.f32.mrb[0].mxu0
        %v943 = vadd.f32 %v731, %v942
        %v944 = vpop.f32.mrb[0].mxu0
        %v945 = vadd.f32 %v735, %v944
        %v946 = vpop.f32.mrb[0].mxu0
        %v947 = vadd.f32 %v731, %v946
        %v948 = vpop.f32.mrb[0].mxu0
        %v949 = vadd.f32 %v735, %v948
        %950 = vmatprep.mubr.bf16.mxu0 0
        %951 = vmatmul.mubr.bf16.gmra.mrb[0].mxu0 %v687
        %v952 = vpop.f32.mrb[0].mxu0
        %v953 = vadd.f32 %v731, %v952
        %v954 = vpop.f32.mrb[0].mxu0
        %v955 = vadd.f32 %v735, %v954
        %v956 = vpop.f32.mrb[0].mxu0
        %v957 = vadd.f32 %v731, %v956
        %v958 = vpop.f32.mrb[0].mxu0
        %v959 = vadd.f32 %v735, %v958
        %960 = vmatprep.mubr.bf16.mxu0 0
        %961 = vmatmul.mubr.bf16.gmra.mrb[0].mxu0 %v688
        %v962 = vpop.f32.mrb[0].mxu0
        %v963 = vadd.f32 %v731, %v962
        %v964 = vpop.f32.mrb[0].mxu0
        %v965 = vadd.f32 %v735, %v964
        %v966 = vpop.f32.mrb[0].mxu0
        %v967 = vadd.f32 %v731, %v966
        %v968 = vpop.f32.mrb[0].mxu0
        %v969 = vadd.f32 %v735, %v968
        %970 = vmatprep.mubr.bf16.mxu0 0
        %971 = vmatmul.mubr.bf16.gmra.mrb[0].mxu0 %v689
        %v972 = vpop.f32.mrb[0].mxu0
        %v973 = vadd.f32 %v731, %v972
        %v974 = vpop.f32.mrb[0].mxu0
        %v975 = vadd.f32 %v735, %v974
        %v976 = vpop.f32.mrb[0].mxu0
        %v977 = vadd.f32 %v731, %v976
        %v978 = vpop.f32.mrb[0].mxu0
        %v979 = vadd.f32 %v735, %v978
        %980 = vmatprep.mubr.bf16.mxu0 0
        %981 = vmatmul.mubr.bf16.gmra.mrb[0].mxu0 %v690
        %v982 = vpop.f32.mrb[0].mxu0
        %v983 = vadd.f32 %v731, %v982
        %v984 = vpop.f32.mrb[0].mxu0
        %v985 = vadd.f32 %v735, %v984
        %v986 = vpop.f32.mrb[0].mxu0
        %v987 = vadd.f32 %v731, %v986
        %v988 = vpop.f32.mrb[0].mxu0
        %v989 = vadd.f32 %v735, %v988
        %990 = vmatprep.mubr.bf16.mxu0 0
        %991 = vmatmul.mubr.bf16.gmra.mrb[0].mxu0 %v691
        %v992 = vpop.f32.mrb[0].mxu0
        %v993 = vadd.f32 %v731, %v992
        %v994 = vpop.f32.mrb[0].mxu0
        %v995 = vadd.f32 %v735, %v994
        %v996 = vpop.f32.mrb[0].mxu0
        %v997 = vadd.f32 %v731, %v996
        %v998 = vpop.f32.mrb[0].mxu0
        %v999 = vadd.f32 %v735, %v998
        %1000 = vmatprep.mubr.bf16.mxu0 0
        %1001 = vmatmul.mubr.bf16.gmra.mrb[0].mxu0 %v692
        %v1002 = vpop.f32.mrb[0].mxu0
        %v1003 = vadd.f32 %v731, %v1002
        %v1004 = vpop.f32.mrb[0].mxu0
        %v1005 = vadd.f32 %v735, %v1004
        %v1006 = vpop.f32.mrb[0].mxu0
        %v1007 = vadd.f32 %v731, %v1006
        %v1008 = vpop.f32.mrb[0].mxu0
        %v1009 = vadd.f32 %v735, %v1008
        %1010 = vmatprep.mubr.bf16.mxu0 0
        %1011 = vmatmul.mubr.bf16.gmra.mrb[0].mxu0 %v693
        %v1012 = vpop.f32.mrb[0].mxu0
        %v1013 = vadd.f32 %v731, %v1012
        %v1014 = vpop.f32.mrb[0].mxu0
        %v1015 = vadd.f32 %v735, %v1014
        %v1016 = vpop.f32.mrb[0].mxu0
        %v1017 = vadd.f32 %v731, %v1016
        %v1018 = vpop.f32.mrb[0].mxu0
        %v1019 = vadd.f32 %v735, %v1018
        %1020 = vdwg.mxu0
        %1021 = vmatprep.subr.bf16.mxu0 %v847
        %1022 = vmatpush1.bf16.msra.mxu0 %v846
        %1023 = vmatprep.subr.bf16.mxu0 %v851
        %1024 = vmatpush1.bf16.msra.mxu0 %v850
        %1025 = vmatprep.subr.bf16.mxu0 %v855
        %1026 = vmatpush1.bf16.msra.mxu0 %v854
        %1027 = vmatprep.subr.bf16.mxu0 %v859
        %1028 = vmatpush1.bf16.msra.mxu0 %v858
        %1029 = vmatprep.subr.bf16.mxu0 %v863
        %1030 = vmatpush1.bf16.msra.mxu0 %v862
        %1031 = vmatprep.subr.bf16.mxu0 %v867
        %1032 = vmatpush1.bf16.msra.mxu0 %v866
        %1033 = vmatprep.subr.bf16.mxu0 %v871
        %1034 = vmatpush1.bf16.msra.mxu0 %v870
        %1035 = vmatprep.subr.bf16.mxu0 %v875
        %1036 = vmatpush1.bf16.msra.mxu0 %v874
        %1037 = vmatprep.subr.bf16.mxu0 0
        %1038 = vmatpush1.bf16.msra.mxu0 0
        %1039 = vmatprep.subr.bf16.mxu0 0
        %1040 = vmatpush1.bf16.msra.mxu0 0
        %1041 = vmatprep.subr.bf16.mxu0 0
        %1042 = vmatpush1.bf16.msra.mxu0 0
        %1043 = vmatprep.subr.bf16.mxu0 0
        %1044 = vmatpush1.bf16.msra.mxu0 0
        %1045 = vmatprep.subr.bf16.mxu0 0
        %1046 = vmatpush1.bf16.msra.mxu0 0
        %1047 = vmatprep.subr.bf16.mxu0 0
        %1048 = vmatpush1.bf16.msra.mxu0 0
        %1049 = vmatprep.subr.bf16.mxu0 0
        %1050 = vmatpush1.bf16.msra.mxu0 0
        %1051 = vmatprep.subr.bf16.mxu0 0
        %1052 = vmatpush1.bf16.msra.mxu0 0
        %1053 = vmatprep.mubr.bf16.mxu0 0
        %1054 = vmatmul.mubr.bf16.gmra.mrb[0].mxu0 %v686
        %v1055 = vpop.f32.mrb[0].mxu0
        %v1056 = vadd.f32 %v739, %v1055
        %v1057 = vpop.f32.mrb[0].mxu0
        %v1058 = vadd.f32 %v743, %v1057
        %v1059 = vpop.f32.mrb[0].mxu0
        %v1060 = vadd.f32 %v739, %v1059
        %v1061 = vpop.f32.mrb[0].mxu0
        %v1062 = vadd.f32 %v743, %v1061
        %1063 = vmatprep.mubr.bf16.mxu0 0
        %1064 = vmatmul.mubr.bf16.gmra.mrb[0].mxu0 %v687
        %v1065 = vpop.f32.mrb[0].mxu0
        %v1066 = vadd.f32 %v739, %v1065
        %v1067 = vpop.f32.mrb[0].mxu0
        %v1068 = vadd.f32 %v743, %v1067
        %v1069 = vpop.f32.mrb[0].mxu0
        %v1070 = vadd.f32 %v739, %v1069
        %v1071 = vpop.f32.mrb[0].mxu0
        %v1072 = vadd.f32 %v743, %v1071
        %1073 = vmatprep.mubr.bf16.mxu0 0
        %1074 = vmatmul.mubr.bf16.gmra.mrb[0].mxu0 %v688
        %v1075 = vpop.f32.mrb[0].mxu0
        %v1076 = vadd.f32 %v739, %v1075
        %v1077 = vpop.f32.mrb[0].mxu0
        %v1078 = vadd.f32 %v743, %v1077
        %v1079 = vpop.f32.mrb[0].mxu0
        %v1080 = vadd.f32 %v739, %v1079
        %v1081 = vpop.f32.mrb[0].mxu0
        %v1082 = vadd.f32 %v743, %v1081
        %1083 = vmatprep.mubr.bf16.mxu0 0
        %1084 = vmatmul.mubr.bf16.gmra.mrb[0].mxu0 %v689
        %v1085 = vpop.f32.mrb[0].mxu0
        %v1086 = vadd.f32 %v739, %v1085
        %v1087 = vpop.f32.mrb[0].mxu0
        %v1088 = vadd.f32 %v743, %v1087
        %v1089 = vpop.f32.mrb[0].mxu0
        %v1090 = vadd.f32 %v739, %v1089
        %v1091 = vpop.f32.mrb[0].mxu0
        %v1092 = vadd.f32 %v743, %v1091
        %1093 = vmatprep.mubr.bf16.mxu0 0
        %1094 = vmatmul.mubr.bf16.gmra.mrb[0].mxu0 %v690
        %v1095 = vpop.f32.mrb[0].mxu0
        %v1096 = vadd.f32 %v739, %v1095
        %v1097 = vpop.f32.mrb[0].mxu0
        %v1098 = vadd.f32 %v743, %v1097
        %v1099 = vpop.f32.mrb[0].mxu0
        %v1100 = vadd.f32 %v739, %v1099
        %v1101 = vpop.f32.mrb[0].mxu0
        %v1102 = vadd.f32 %v743, %v1101
        %1103 = vmatprep.mubr.bf16.mxu0 0
        %1104 = vmatmul.mubr.bf16.gmra.mrb[0].mxu0 %v691
        %v1105 = vpop.f32.mrb[0].mxu0
        %v1106 = vadd.f32 %v739, %v1105
        %v1107 = vpop.f32.mrb[0].mxu0
        %v1108 = vadd.f32 %v743, %v1107
        %v1109 = vpop.f32.mrb[0].mxu0
        %v1110 = vadd.f32 %v739, %v1109
        %v1111 = vpop.f32.mrb[0].mxu0
        %v1112 = vadd.f32 %v743, %v1111
        %1113 = vmatprep.mubr.bf16.mxu0 0
        %1114 = vmatmul.mubr.bf16.gmra.mrb[0].mxu0 %v692
        %v1115 = vpop.f32.mrb[0].mxu0
        %v1116 = vadd.f32 %v739, %v1115
        %v1117 = vpop.f32.mrb[0].mxu0
        %v1118 = vadd.f32 %v743, %v1117
        %v1119 = vpop.f32.mrb[0].mxu0
        %v1120 = vadd.f32 %v739, %v1119
        %v1121 = vpop.f32.mrb[0].mxu0
        %v1122 = vadd.f32 %v743, %v1121
        %1123 = vmatprep.mubr.bf16.mxu0 0
        %1124 = vmatmul.mubr.bf16.gmra.mrb[0].mxu0 %v693
        %v1125 = vpop.f32.mrb[0].mxu0
        %v1126 = vadd.f32 %v739, %v1125
        %v1127 = vpop.f32.mrb[0].mxu0
        %v1128 = vadd.f32 %v743, %v1127
        %v1129 = vpop.f32.mrb[0].mxu0
        %v1130 = vadd.f32 %v739, %v1129
        %v1131 = vpop.f32.mrb[0].mxu0
        %v1132 = vadd.f32 %v743, %v1131
        %1133 = vdwg.mxu0
        %v1134 = vmax.f32 %v943, %v947
        %v1135 = vrot.slane %v1134, 4
        %v1136 = vmax.f32 %v1134, %v1135
        %v1137 = vrot.slane %v1136, 2
        %v1138 = vmax.f32 %v1136, %v1137
        %v1139 = vrot.slane %v1138, 1
        %v1140 = vmax.f32 %v1138, %v1139
        %v1141 = vmax.f32 %v945, %v949
        %v1142 = vrot.slane %v1141, 4
        %v1143 = vmax.f32 %v1141, %v1142
        %v1144 = vrot.slane %v1143, 2
        %v1145 = vmax.f32 %v1143, %v1144
        %v1146 = vrot.slane %v1145, 1
        %v1147 = vmax.f32 %v1145, %v1146
        %v1148 = vmax.f32 %v1056, %v1060
        %v1149 = vrot.slane %v1148, 4
        %v1150 = vmax.f32 %v1148, %v1149
        %v1151 = vrot.slane %v1150, 2
        %v1152 = vmax.f32 %v1150, %v1151
        %v1153 = vrot.slane %v1152, 1
        %v1154 = vmax.f32 %v1152, %v1153
        %v1155 = vmax.f32 %v1058, %v1062
        %v1156 = vrot.slane %v1155, 4
        %v1157 = vmax.f32 %v1155, %v1156
        %v1158 = vrot.slane %v1157, 2
        %v1159 = vmax.f32 %v1157, %v1158
        %v1160 = vrot.slane %v1159, 1
        %v1161 = vmax.f32 %v1159, %v1160
        %v1162 = vmax.f32 %v953, %v957
        %v1163 = vrot.slane %v1162, 4
        %v1164 = vmax.f32 %v1162, %v1163
        %v1165 = vrot.slane %v1164, 2
        %v1166 = vmax.f32 %v1164, %v1165
        %v1167 = vrot.slane %v1166, 1
        %v1168 = vmax.f32 %v1166, %v1167
        %v1169 = vmax.f32 %v955, %v959
        %v1170 = vrot.slane %v1169, 4
        %v1171 = vmax.f32 %v1169, %v1170
        %v1172 = vrot.slane %v1171, 2
        %v1173 = vmax.f32 %v1171, %v1172
        %v1174 = vrot.slane %v1173, 1
        %v1175 = vmax.f32 %v1173, %v1174
        %v1176 = vmax.f32 %v1066, %v1070
        %v1177 = vrot.slane %v1176, 4
        %v1178 = vmax.f32 %v1176, %v1177
        %v1179 = vrot.slane %v1178, 2
        %v1180 = vmax.f32 %v1178, %v1179
        %v1181 = vrot.slane %v1180, 1
        %v1182 = vmax.f32 %v1180, %v1181
        %v1183 = vmax.f32 %v1068, %v1072
        %v1184 = vrot.slane %v1183, 4
        %v1185 = vmax.f32 %v1183, %v1184
        %v1186 = vrot.slane %v1185, 2
        %v1187 = vmax.f32 %v1185, %v1186
        %v1188 = vrot.slane %v1187, 1
        %v1189 = vmax.f32 %v1187, %v1188
        %v1190 = vmax.f32 %v963, %v967
        %v1191 = vrot.slane %v1190, 4
        %v1192 = vmax.f32 %v1190, %v1191
        %v1193 = vrot.slane %v1192, 2
        %v1194 = vmax.f32 %v1192, %v1193
        %v1195 = vrot.slane %v1194, 1
        %v1196 = vmax.f32 %v1194, %v1195
        %v1197 = vmax.f32 %v965, %v969
        %v1198 = vrot.slane %v1197, 4
        %v1199 = vmax.f32 %v1197, %v1198
        %v1200 = vrot.slane %v1199, 2
        %v1201 = vmax.f32 %v1199, %v1200
        %v1202 = vrot.slane %v1201, 1
        %v1203 = vmax.f32 %v1201, %v1202
        %v1204 = vmax.f32 %v1076, %v1080
        %v1205 = vrot.slane %v1204, 4
        %v1206 = vmax.f32 %v1204, %v1205
        %v1207 = vrot.slane %v1206, 2
        %v1208 = vmax.f32 %v1206, %v1207
        %v1209 = vrot.slane %v1208, 1
        %v1210 = vmax.f32 %v1208, %v1209
        %v1211 = vmax.f32 %v1078, %v1082
        %v1212 = vrot.slane %v1211, 4
        %v1213 = vmax.f32 %v1211, %v1212
        %v1214 = vrot.slane %v1213, 2
        %v1215 = vmax.f32 %v1213, %v1214
        %v1216 = vrot.slane %v1215, 1
        %v1217 = vmax.f32 %v1215, %v1216
        %v1218 = vmax.f32 %v973, %v977
        %v1219 = vrot.slane %v1218, 4
        %v1220 = vmax.f32 %v1218, %v1219
        %v1221 = vrot.slane %v1220, 2
        %v1222 = vmax.f32 %v1220, %v1221
        %v1223 = vrot.slane %v1222, 1
        %v1224 = vmax.f32 %v1222, %v1223
        %v1225 = vmax.f32 %v975, %v979
        %v1226 = vrot.slane %v1225, 4
        %v1227 = vmax.f32 %v1225, %v1226
        %v1228 = vrot.slane %v1227, 2
        %v1229 = vmax.f32 %v1227, %v1228
        %v1230 = vrot.slane %v1229, 1
        %v1231 = vmax.f32 %v1229, %v1230
        %v1232 = vmax.f32 %v1086, %v1090
        %v1233 = vrot.slane %v1232, 4
        %v1234 = vmax.f32 %v1232, %v1233
        %v1235 = vrot.slane %v1234, 2
        %v1236 = vmax.f32 %v1234, %v1235
        %v1237 = vrot.slane %v1236, 1
        %v1238 = vmax.f32 %v1236, %v1237
        %v1239 = vmax.f32 %v1088, %v1092
        %v1240 = vrot.slane %v1239, 4
        %v1241 = vmax.f32 %v1239, %v1240
        %v1242 = vrot.slane %v1241, 2
        %v1243 = vmax.f32 %v1241, %v1242
        %v1244 = vrot.slane %v1243, 1
        %v1245 = vmax.f32 %v1243, %v1244
        %v1246 = vmax.f32 %v983, %v987
        %v1247 = vrot.slane %v1246, 4
        %v1248 = vmax.f32 %v1246, %v1247
        %v1249 = vrot.slane %v1248, 2
        %v1250 = vmax.f32 %v1248, %v1249
        %v1251 = vrot.slane %v1250, 1
        %v1252 = vmax.f32 %v1250, %v1251
        %v1253 = vmax.f32 %v985, %v989
        %v1254 = vrot.slane %v1253, 4
        %v1255 = vmax.f32 %v1253, %v1254
        %v1256 = vrot.slane %v1255, 2
        %v1257 = vmax.f32 %v1255, %v1256
        %v1258 = vrot.slane %v1257, 1
        %v1259 = vmax.f32 %v1257, %v1258
        %v1260 = vmax.f32 %v1096, %v1100
        %v1261 = vrot.slane %v1260, 4
        %v1262 = vmax.f32 %v1260, %v1261
        %v1263 = vrot.slane %v1262, 2
        %v1264 = vmax.f32 %v1262, %v1263
        %v1265 = vrot.slane %v1264, 1
        %v1266 = vmax.f32 %v1264, %v1265
        %v1267 = vmax.f32 %v1098, %v1102
        %v1268 = vrot.slane %v1267, 4
        %v1269 = vmax.f32 %v1267, %v1268
        %v1270 = vrot.slane %v1269, 2
        %v1271 = vmax.f32 %v1269, %v1270
        %v1272 = vrot.slane %v1271, 1
        %v1273 = vmax.f32 %v1271, %v1272
        %v1274 = vmax.f32 %v993, %v997
        %v1275 = vrot.slane %v1274, 4
        %v1276 = vmax.f32 %v1274, %v1275
        %v1277 = vrot.slane %v1276, 2
        %v1278 = vmax.f32 %v1276, %v1277
        %v1279 = vrot.slane %v1278, 1
        %v1280 = vmax.f32 %v1278, %v1279
        %v1281 = vmax.f32 %v995, %v999
        %v1282 = vrot.slane %v1281, 4
        %v1283 = vmax.f32 %v1281, %v1282
        %v1284 = vrot.slane %v1283, 2
        %v1285 = vmax.f32 %v1283, %v1284
        %v1286 = vrot.slane %v1285, 1
        %v1287 = vmax.f32 %v1285, %v1286
        %v1288 = vmax.f32 %v1106, %v1110
        %v1289 = vrot.slane %v1288, 4
        %v1290 = vmax.f32 %v1288, %v1289
        %v1291 = vrot.slane %v1290, 2
        %v1292 = vmax.f32 %v1290, %v1291
        %v1293 = vrot.slane %v1292, 1
        %v1294 = vmax.f32 %v1292, %v1293
        %v1295 = vmax.f32 %v1108, %v1112
        %v1296 = vrot.slane %v1295, 4
        %v1297 = vmax.f32 %v1295, %v1296
        %v1298 = vrot.slane %v1297, 2
        %v1299 = vmax.f32 %v1297, %v1298
        %v1300 = vrot.slane %v1299, 1
        %v1301 = vmax.f32 %v1299, %v1300
        %v1302 = vmax.f32 %v1003, %v1007
        %v1303 = vrot.slane %v1302, 4
        %v1304 = vmax.f32 %v1302, %v1303
        %v1305 = vrot.slane %v1304, 2
        %v1306 = vmax.f32 %v1304, %v1305
        %v1307 = vrot.slane %v1306, 1
        %v1308 = vmax.f32 %v1306, %v1307
        %v1309 = vmax.f32 %v1005, %v1009
        %v1310 = vrot.slane %v1309, 4
        %v1311 = vmax.f32 %v1309, %v1310
        %v1312 = vrot.slane %v1311, 2
        %v1313 = vmax.f32 %v1311, %v1312
        %v1314 = vrot.slane %v1313, 1
        %v1315 = vmax.f32 %v1313, %v1314
        %v1316 = vmax.f32 %v1116, %v1120
        %v1317 = vrot.slane %v1316, 4
        %v1318 = vmax.f32 %v1316, %v1317
        %v1319 = vrot.slane %v1318, 2
        %v1320 = vmax.f32 %v1318, %v1319
        %v1321 = vrot.slane %v1320, 1
        %v1322 = vmax.f32 %v1320, %v1321
        %v1323 = vmax.f32 %v1118, %v1122
        %v1324 = vrot.slane %v1323, 4
        %v1325 = vmax.f32 %v1323, %v1324
        %v1326 = vrot.slane %v1325, 2
        %v1327 = vmax.f32 %v1325, %v1326
        %v1328 = vrot.slane %v1327, 1
        %v1329 = vmax.f32 %v1327, %v1328
        %v1330 = vmax.f32 %v1013, %v1017
        %v1331 = vrot.slane %v1330, 4
        %v1332 = vmax.f32 %v1330, %v1331
        %v1333 = vrot.slane %v1332, 2
        %v1334 = vmax.f32 %v1332, %v1333
        %v1335 = vrot.slane %v1334, 1
        %v1336 = vmax.f32 %v1334, %v1335
        %v1337 = vmax.f32 %v1015, %v1019
        %v1338 = vrot.slane %v1337, 4
        %v1339 = vmax.f32 %v1337, %v1338
        %v1340 = vrot.slane %v1339, 2
        %v1341 = vmax.f32 %v1339, %v1340
        %v1342 = vrot.slane %v1341, 1
        %v1343 = vmax.f32 %v1341, %v1342
        %v1344 = vmax.f32 %v1126, %v1130
        %v1345 = vrot.slane %v1344, 4
        %v1346 = vmax.f32 %v1344, %v1345
        %v1347 = vrot.slane %v1346, 2
        %v1348 = vmax.f32 %v1346, %v1347
        %v1349 = vrot.slane %v1348, 1
        %v1350 = vmax.f32 %v1348, %v1349
        %v1351 = vmax.f32 %v1128, %v1132
        %v1352 = vrot.slane %v1351, 4
        %v1353 = vmax.f32 %v1351, %v1352
        %v1354 = vrot.slane %v1353, 2
        %v1355 = vmax.f32 %v1353, %v1354
        %v1356 = vrot.slane %v1355, 1
        %v1357 = vmax.f32 %v1355, %v1356
        %v1358 = vpack.c.bf16 %v947, %v943
        %v1359 = vpack.c.bf16 %v949, %v945
        %v1360 = vpack.c.bf16 %v1060, %v1056
        %v1361 = vpack.c.bf16 %v1062, %v1058
        %v1362 = vpack.c.bf16 %v957, %v953
        %v1363 = vpack.c.bf16 %v959, %v955
        %v1364 = vpack.c.bf16 %v1070, %v1066
        %v1365 = vpack.c.bf16 %v1072, %v1068
        %v1366 = vpack.c.bf16 %v967, %v963
        %v1367 = vpack.c.bf16 %v969, %v965
        %v1368 = vpack.c.bf16 %v1080, %v1076
        %v1369 = vpack.c.bf16 %v1082, %v1078
        %v1370 = vpack.c.bf16 %v977, %v973
        %v1371 = vpack.c.bf16 %v979, %v975
        %v1372 = vpack.c.bf16 %v1090, %v1086
        %v1373 = vpack.c.bf16 %v1092, %v1088
        %v1374 = vpack.c.bf16 %v987, %v983
        %v1375 = vpack.c.bf16 %v989, %v985
        %v1376 = vpack.c.bf16 %v1100, %v1096
        %v1377 = vpack.c.bf16 %v1102, %v1098
        %v1378 = vpack.c.bf16 %v997, %v993
        %v1379 = vpack.c.bf16 %v999, %v995
        %v1380 = vpack.c.bf16 %v1110, %v1106
        %v1381 = vpack.c.bf16 %v1112, %v1108
        %v1382 = vpack.c.bf16 %v1007, %v1003
        %v1383 = vpack.c.bf16 %v1009, %v1005
        %v1384 = vpack.c.bf16 %v1120, %v1116
        %v1385 = vpack.c.bf16 %v1122, %v1118
        %v1386 = vpack.c.bf16 %v1017, %v1013
        %v1387 = vpack.c.bf16 %v1019, %v1015
        %v1388 = vpack.c.bf16 %v1130, %v1126
        %v1389 = vpack.c.bf16 %v1132, %v1128
        %v1390 = vld [vmem:[#allocation5] sm:$0xff]
        %v1391 = vld [vmem:[#allocation5 + $0x8] sm:$0xff]
        %v1392 = vld [vmem:[#allocation5 + $0x10] sm:$0xff]
        %v1393 = vld [vmem:[#allocation5 + $0x18] sm:$0xff]
        %v1394 = vld [vmem:[#allocation5 + $0x20] sm:$0xff]
        %v1395 = vld [vmem:[#allocation5 + $0x28] sm:$0xff]
        %v1396 = vld [vmem:[#allocation5 + $0x30] sm:$0xff]
        %v1397 = vld [vmem:[#allocation5 + $0x38] sm:$0xff]
        %v1398 = vld [vmem:[#allocation5 + $0x40] sm:$0xff]
        %v1399 = vld [vmem:[#allocation5 + $0x48] sm:$0xff]
        %v1400 = vld [vmem:[#allocation5 + $0x50] sm:$0xff]
        %v1401 = vld [vmem:[#allocation5 + $0x58] sm:$0xff]
        %v1402 = vld [vmem:[#allocation5 + $0x60] sm:$0xff]
        %v1403 = vld [vmem:[#allocation5 + $0x68] sm:$0xff]
        %v1404 = vld [vmem:[#allocation5 + $0x70] sm:$0xff]
        %v1405 = vld [vmem:[#allocation5 + $0x78] sm:$0xff]
        %v1406 = vld [vmem:[#allocation5 + $0x80] sm:$0xff]
        %v1407 = vld [vmem:[#allocation5 + $0x88] sm:$0xff]
        %v1408 = vld [vmem:[#allocation5 + $0x90] sm:$0xff]
        %v1409 = vld [vmem:[#allocation5 + $0x98] sm:$0xff]
        %v1410 = vld [vmem:[#allocation5 + $0xa0] sm:$0xff]
        %v1411 = vld [vmem:[#allocation5 + $0xa8] sm:$0xff]
        %v1412 = vld [vmem:[#allocation5 + $0xb0] sm:$0xff]
        %v1413 = vld [vmem:[#allocation5 + $0xb8] sm:$0xff]
        %v1414 = vld [vmem:[#allocation5 + $0xc0] sm:$0xff]
        %v1415 = vld [vmem:[#allocation5 + $0xc8] sm:$0xff]
        %v1416 = vld [vmem:[#allocation5 + $0xd0] sm:$0xff]
        %v1417 = vld [vmem:[#allocation5 + $0xd8] sm:$0xff]
        %v1418 = vld [vmem:[#allocation5 + $0xe0] sm:$0xff]
        %v1419 = vld [vmem:[#allocation5 + $0xe8] sm:$0xff]
        %v1420 = vld [vmem:[#allocation5 + $0xf0] sm:$0xff]
        %v1421 = vld [vmem:[#allocation5 + $0xf8] sm:$0xff]
        %v1422 = vld [vmem:[#allocation5 + $0x100] sm:$0xff]
        %v1423 = vld [vmem:[#allocation5 + $0x108] sm:$0xff]
        %v1424 = vld [vmem:[#allocation5 + $0x110] sm:$0xff]
        %v1425 = vld [vmem:[#allocation5 + $0x118] sm:$0xff]
        %v1426 = vld [vmem:[#allocation5 + $0x120] sm:$0xff]
        %v1427 = vld [vmem:[#allocation5 + $0x128] sm:$0xff]
        %v1428 = vld [vmem:[#allocation5 + $0x130] sm:$0xff]
        %v1429 = vld [vmem:[#allocation5 + $0x138] sm:$0xff]
        %v1430 = vld [vmem:[#allocation5 + $0x140] sm:$0xff]
        %v1431 = vld [vmem:[#allocation5 + $0x148] sm:$0xff]
        %v1432 = vld [vmem:[#allocation5 + $0x150] sm:$0xff]
        %v1433 = vld [vmem:[#allocation5 + $0x158] sm:$0xff]
        %v1434 = vld [vmem:[#allocation5 + $0x160] sm:$0xff]
        %v1435 = vld [vmem:[#allocation5 + $0x168] sm:$0xff]
        %v1436 = vld [vmem:[#allocation5 + $0x170] sm:$0xff]
        %v1437 = vld [vmem:[#allocation5 + $0x178] sm:$0xff]
        %v1438 = vld [vmem:[#allocation5 + $0x180] sm:$0xff]
        %v1439 = vld [vmem:[#allocation5 + $0x188] sm:$0xff]
        %v1440 = vld [vmem:[#allocation5 + $0x190] sm:$0xff]
        %v1441 = vld [vmem:[#allocation5 + $0x198] sm:$0xff]
        %v1442 = vld [vmem:[#allocation5 + $0x1a0] sm:$0xff]
        %v1443 = vld [vmem:[#allocation5 + $0x1a8] sm:$0xff]
        %v1444 = vld [vmem:[#allocation5 + $0x1b0] sm:$0xff]
        %v1445 = vld [vmem:[#allocation5 + $0x1b8] sm:$0xff]
        %v1446 = vld [vmem:[#allocation5 + $0x1c0] sm:$0xff]
        %v1447 = vld [vmem:[#allocation5 + $0x1c8] sm:$0xff]
        %v1448 = vld [vmem:[#allocation5 + $0x1d0] sm:$0xff]
        %v1449 = vld [vmem:[#allocation5 + $0x1d8] sm:$0xff]
        %v1450 = vld [vmem:[#allocation5 + $0x1e0] sm:$0xff]
        %v1451 = vld [vmem:[#allocation5 + $0x1e8] sm:$0xff]
        %v1452 = vld [vmem:[#allocation5 + $0x1f0] sm:$0xff]
        %v1453 = vld [vmem:[#allocation5 + $0x1f8] sm:$0xff]
        %v1454 = vld [vmem:[#allocation5 + $0x200] sm:$0xff]
        %v1455 = vld [vmem:[#allocation5 + $0x208] sm:$0xff]
        %v1456 = vld [vmem:[#allocation5 + $0x210] sm:$0xff]
        %v1457 = vld [vmem:[#allocation5 + $0x218] sm:$0xff]
        %v1458 = vld [vmem:[#allocation5 + $0x220] sm:$0xff]
        %v1459 = vld [vmem:[#allocation5 + $0x228] sm:$0xff]
        %v1460 = vld [vmem:[#allocation5 + $0x230] sm:$0xff]
        %v1461 = vld [vmem:[#allocation5 + $0x238] sm:$0xff]
        %v1462 = vld [vmem:[#allocation5 + $0x240] sm:$0xff]
        %v1463 = vld [vmem:[#allocation5 + $0x248] sm:$0xff]
        %v1464 = vld [vmem:[#allocation5 + $0x250] sm:$0xff]
        %v1465 = vld [vmem:[#allocation5 + $0x258] sm:$0xff]
        %v1466 = vld [vmem:[#allocation5 + $0x260] sm:$0xff]
        %v1467 = vld [vmem:[#allocation5 + $0x268] sm:$0xff]
        %v1468 = vld [vmem:[#allocation5 + $0x270] sm:$0xff]
        %v1469 = vld [vmem:[#allocation5 + $0x278] sm:$0xff]
        %v1470 = vld [vmem:[#allocation5 + $0x280] sm:$0xff]
        %v1471 = vld [vmem:[#allocation5 + $0x288] sm:$0xff]
        %v1472 = vld [vmem:[#allocation5 + $0x290] sm:$0xff]
        %v1473 = vld [vmem:[#allocation5 + $0x298] sm:$0xff]
        %v1474 = vld [vmem:[#allocation5 + $0x2a0] sm:$0xff]
        %v1475 = vld [vmem:[#allocation5 + $0x2a8] sm:$0xff]
        %v1476 = vld [vmem:[#allocation5 + $0x2b0] sm:$0xff]
        %v1477 = vld [vmem:[#allocation5 + $0x2b8] sm:$0xff]
        %v1478 = vld [vmem:[#allocation5 + $0x2c0] sm:$0xff]
        %v1479 = vld [vmem:[#allocation5 + $0x2c8] sm:$0xff]
        %v1480 = vld [vmem:[#allocation5 + $0x2d0] sm:$0xff]
        %v1481 = vld [vmem:[#allocation5 + $0x2d8] sm:$0xff]
        %v1482 = vld [vmem:[#allocation5 + $0x2e0] sm:$0xff]
        %v1483 = vld [vmem:[#allocation5 + $0x2e8] sm:$0xff]
        %v1484 = vld [vmem:[#allocation5 + $0x2f0] sm:$0xff]
        %v1485 = vld [vmem:[#allocation5 + $0x2f8] sm:$0xff]
        %v1486 = vld [vmem:[#allocation5 + $0x300] sm:$0xff]
        %v1487 = vld [vmem:[#allocation5 + $0x308] sm:$0xff]
        %v1488 = vld [vmem:[#allocation5 + $0x310] sm:$0xff]
        %v1489 = vld [vmem:[#allocation5 + $0x318] sm:$0xff]
        %v1490 = vld [vmem:[#allocation5 + $0x320] sm:$0xff]
        %v1491 = vld [vmem:[#allocation5 + $0x328] sm:$0xff]
        %v1492 = vld [vmem:[#allocation5 + $0x330] sm:$0xff]
        %v1493 = vld [vmem:[#allocation5 + $0x338] sm:$0xff]
        %v1494 = vld [vmem:[#allocation5 + $0x340] sm:$0xff]
        %v1495 = vld [vmem:[#allocation5 + $0x348] sm:$0xff]
        %v1496 = vld [vmem:[#allocation5 + $0x350] sm:$0xff]
        %v1497 = vld [vmem:[#allocation5 + $0x358] sm:$0xff]
        %v1498 = vld [vmem:[#allocation5 + $0x360] sm:$0xff]
        %v1499 = vld [vmem:[#allocation5 + $0x368] sm:$0xff]
        %v1500 = vld [vmem:[#allocation5 + $0x370] sm:$0xff]
        %v1501 = vld [vmem:[#allocation5 + $0x378] sm:$0xff]
        %v1502 = vld [vmem:[#allocation5 + $0x380] sm:$0xff]
        %v1503 = vld [vmem:[#allocation5 + $0x388] sm:$0xff]
        %v1504 = vld [vmem:[#allocation5 + $0x390] sm:$0xff]
        %v1505 = vld [vmem:[#allocation5 + $0x398] sm:$0xff]
        %v1506 = vld [vmem:[#allocation5 + $0x3a0] sm:$0xff]
        %v1507 = vld [vmem:[#allocation5 + $0x3a8] sm:$0xff]
        %v1508 = vld [vmem:[#allocation5 + $0x3b0] sm:$0xff]
        %v1509 = vld [vmem:[#allocation5 + $0x3b8] sm:$0xff]
        %v1510 = vld [vmem:[#allocation5 + $0x3c0] sm:$0xff]
        %v1511 = vld [vmem:[#allocation5 + $0x3c8] sm:$0xff]
        %v1512 = vld [vmem:[#allocation5 + $0x3d0] sm:$0xff]
        %v1513 = vld [vmem:[#allocation5 + $0x3d8] sm:$0xff]
        %v1514 = vld [vmem:[#allocation5 + $0x3e0] sm:$0xff]
        %v1515 = vld [vmem:[#allocation5 + $0x3e8] sm:$0xff]
        %v1516 = vld [vmem:[#allocation5 + $0x3f0] sm:$0xff]
        %v1517 = vld [vmem:[#allocation5 + $0x3f8] sm:$0xff]
        %v1646 = vunpack.c.l.b16 %v1390
        %v1647 = vunpack.c.h.b16 %v1390
        %v1648 = vunpack.c.l.b16 %v1391
        %v1649 = vunpack.c.h.b16 %v1391
        %v1650 = vunpack.c.l.b16 %v1392
        %v1651 = vunpack.c.h.b16 %v1392
        %v1652 = vunpack.c.l.b16 %v1393
        %v1653 = vunpack.c.h.b16 %v1393
        %v1654 = vunpack.c.l.b16 %v1394
        %v1655 = vunpack.c.h.b16 %v1394
        %v1656 = vunpack.c.l.b16 %v1395
        %v1657 = vunpack.c.h.b16 %v1395
        %v1658 = vunpack.c.l.b16 %v1396
        %v1659 = vunpack.c.h.b16 %v1396
        %v1660 = vunpack.c.l.b16 %v1397
        %v1661 = vunpack.c.h.b16 %v1397
        %v1662 = vunpack.c.l.b16 %v1398
        %v1663 = vunpack.c.h.b16 %v1398
        %v1664 = vunpack.c.l.b16 %v1399
        %v1665 = vunpack.c.h.b16 %v1399
        %v1666 = vunpack.c.l.b16 %v1400
        %v1667 = vunpack.c.h.b16 %v1400
        %v1668 = vunpack.c.l.b16 %v1401
        %v1669 = vunpack.c.h.b16 %v1401
        %v1670 = vunpack.c.l.b16 %v1402
        %v1671 = vunpack.c.h.b16 %v1402
        %v1672 = vunpack.c.l.b16 %v1403
        %v1673 = vunpack.c.h.b16 %v1403
        %v1674 = vunpack.c.l.b16 %v1404
        %v1675 = vunpack.c.h.b16 %v1404
        %v1676 = vunpack.c.l.b16 %v1405
        %v1677 = vunpack.c.h.b16 %v1405
        %v1678 = vunpack.c.l.b16 %v1406
        %v1679 = vunpack.c.h.b16 %v1406
        %v1680 = vunpack.c.l.b16 %v1407
        %v1681 = vunpack.c.h.b16 %v1407
        %v1682 = vunpack.c.l.b16 %v1408
        %v1683 = vunpack.c.h.b16 %v1408
        %v1684 = vunpack.c.l.b16 %v1409
        %v1685 = vunpack.c.h.b16 %v1409
        %v1686 = vunpack.c.l.b16 %v1410
        %v1687 = vunpack.c.h.b16 %v1410
        %v1688 = vunpack.c.l.b16 %v1411
        %v1689 = vunpack.c.h.b16 %v1411
        %v1690 = vunpack.c.l.b16 %v1412
        %v1691 = vunpack.c.h.b16 %v1412
        %v1692 = vunpack.c.l.b16 %v1413
        %v1693 = vunpack.c.h.b16 %v1413
        %v1694 = vunpack.c.l.b16 %v1414
        %v1695 = vunpack.c.h.b16 %v1414
        %v1696 = vunpack.c.l.b16 %v1415
        %v1697 = vunpack.c.h.b16 %v1415
        %v1698 = vunpack.c.l.b16 %v1416
        %v1699 = vunpack.c.h.b16 %v1416
        %v1700 = vunpack.c.l.b16 %v1417
        %v1701 = vunpack.c.h.b16 %v1417
        %v1702 = vunpack.c.l.b16 %v1418
        %v1703 = vunpack.c.h.b16 %v1418
        %v1704 = vunpack.c.l.b16 %v1419
        %v1705 = vunpack.c.h.b16 %v1419
        %v1706 = vunpack.c.l.b16 %v1420
        %v1707 = vunpack.c.h.b16 %v1420
        %v1708 = vunpack.c.l.b16 %v1421
        %v1709 = vunpack.c.h.b16 %v1421
        %v1710 = vunpack.c.l.b16 %v1422
        %v1711 = vunpack.c.h.b16 %v1422
        %v1712 = vunpack.c.l.b16 %v1423
        %v1713 = vunpack.c.h.b16 %v1423
        %v1714 = vunpack.c.l.b16 %v1424
        %v1715 = vunpack.c.h.b16 %v1424
        %v1716 = vunpack.c.l.b16 %v1425
        %v1717 = vunpack.c.h.b16 %v1425
        %v1718 = vunpack.c.l.b16 %v1426
        %v1719 = vunpack.c.h.b16 %v1426
        %v1720 = vunpack.c.l.b16 %v1427
        %v1721 = vunpack.c.h.b16 %v1427
        %v1722 = vunpack.c.l.b16 %v1428
        %v1723 = vunpack.c.h.b16 %v1428
        %v1724 = vunpack.c.l.b16 %v1429
        %v1725 = vunpack.c.h.b16 %v1429
        %v1726 = vunpack.c.l.b16 %v1430
        %v1727 = vunpack.c.h.b16 %v1430
        %v1728 = vunpack.c.l.b16 %v1431
        %v1729 = vunpack.c.h.b16 %v1431
        %v1730 = vunpack.c.l.b16 %v1432
        %v1731 = vunpack.c.h.b16 %v1432
        %v1732 = vunpack.c.l.b16 %v1433
        %v1733 = vunpack.c.h.b16 %v1433
        %v1734 = vunpack.c.l.b16 %v1434
        %v1735 = vunpack.c.h.b16 %v1434
        %v1736 = vunpack.c.l.b16 %v1435
        %v1737 = vunpack.c.h.b16 %v1435
        %v1738 = vunpack.c.l.b16 %v1436
        %v1739 = vunpack.c.h.b16 %v1436
        %v1740 = vunpack.c.l.b16 %v1437
        %v1741 = vunpack.c.h.b16 %v1437
        %v1742 = vunpack.c.l.b16 %v1438
        %v1743 = vunpack.c.h.b16 %v1438
        %v1744 = vunpack.c.l.b16 %v1439
        %v1745 = vunpack.c.h.b16 %v1439
        %v1746 = vunpack.c.l.b16 %v1440
        %v1747 = vunpack.c.h.b16 %v1440
        %v1748 = vunpack.c.l.b16 %v1441
        %v1749 = vunpack.c.h.b16 %v1441
        %v1750 = vunpack.c.l.b16 %v1442
        %v1751 = vunpack.c.h.b16 %v1442
        %v1752 = vunpack.c.l.b16 %v1443
        %v1753 = vunpack.c.h.b16 %v1443
        %v1754 = vunpack.c.l.b16 %v1444
        %v1755 = vunpack.c.h.b16 %v1444
        %v1756 = vunpack.c.l.b16 %v1445
        %v1757 = vunpack.c.h.b16 %v1445
        %v1758 = vunpack.c.l.b16 %v1446
        %v1759 = vunpack.c.h.b16 %v1446
        %v1760 = vunpack.c.l.b16 %v1447
        %v1761 = vunpack.c.h.b16 %v1447
        %v1762 = vunpack.c.l.b16 %v1448
        %v1763 = vunpack.c.h.b16 %v1448
        %v1764 = vunpack.c.l.b16 %v1449
        %v1765 = vunpack.c.h.b16 %v1449
        %v1766 = vunpack.c.l.b16 %v1450
        %v1767 = vunpack.c.h.b16 %v1450
        %v1768 = vunpack.c.l.b16 %v1451
        %v1769 = vunpack.c.h.b16 %v1451
        %v1770 = vunpack.c.l.b16 %v1452
        %v1771 = vunpack.c.h.b16 %v1452
        %v1772 = vunpack.c.l.b16 %v1453
        %v1773 = vunpack.c.h.b16 %v1453
        %v1774 = vunpack.c.l.b16 %v1454
        %v1775 = vunpack.c.h.b16 %v1454
        %v1776 = vunpack.c.l.b16 %v1455
        %v1777 = vunpack.c.h.b16 %v1455
        %v1778 = vunpack.c.l.b16 %v1456
        %v1779 = vunpack.c.h.b16 %v1456
        %v1780 = vunpack.c.l.b16 %v1457
        %v1781 = vunpack.c.h.b16 %v1457
        %v1782 = vunpack.c.l.b16 %v1458
        %v1783 = vunpack.c.h.b16 %v1458
        %v1784 = vunpack.c.l.b16 %v1459
        %v1785 = vunpack.c.h.b16 %v1459
        %v1786 = vunpack.c.l.b16 %v1460
        %v1787 = vunpack.c.h.b16 %v1460
        %v1788 = vunpack.c.l.b16 %v1461
        %v1789 = vunpack.c.h.b16 %v1461
        %v1790 = vunpack.c.l.b16 %v1462
        %v1791 = vunpack.c.h.b16 %v1462
        %v1792 = vunpack.c.l.b16 %v1463
        %v1793 = vunpack.c.h.b16 %v1463
        %v1794 = vunpack.c.l.b16 %v1464
        %v1795 = vunpack.c.h.b16 %v1464
        %v1796 = vunpack.c.l.b16 %v1465
        %v1797 = vunpack.c.h.b16 %v1465
        %v1798 = vunpack.c.l.b16 %v1466
        %v1799 = vunpack.c.h.b16 %v1466
        %v1800 = vunpack.c.l.b16 %v1467
        %v1801 = vunpack.c.h.b16 %v1467
        %v1802 = vunpack.c.l.b16 %v1468
        %v1803 = vunpack.c.h.b16 %v1468
        %v1804 = vunpack.c.l.b16 %v1469
        %v1805 = vunpack.c.h.b16 %v1469
        %v1806 = vunpack.c.l.b16 %v1470
        %v1807 = vunpack.c.h.b16 %v1470
        %v1808 = vunpack.c.l.b16 %v1471
        %v1809 = vunpack.c.h.b16 %v1471
        %v1810 = vunpack.c.l.b16 %v1472
        %v1811 = vunpack.c.h.b16 %v1472
        %v1812 = vunpack.c.l.b16 %v1473
        %v1813 = vunpack.c.h.b16 %v1473
        %v1814 = vunpack.c.l.b16 %v1474
        %v1815 = vunpack.c.h.b16 %v1474
        %v1816 = vunpack.c.l.b16 %v1475
        %v1817 = vunpack.c.h.b16 %v1475
        %v1818 = vunpack.c.l.b16 %v1476
        %v1819 = vunpack.c.h.b16 %v1476
        %v1820 = vunpack.c.l.b16 %v1477
        %v1821 = vunpack.c.h.b16 %v1477
        %v1822 = vunpack.c.l.b16 %v1478
        %v1823 = vunpack.c.h.b16 %v1478
        %v1824 = vunpack.c.l.b16 %v1479
        %v1825 = vunpack.c.h.b16 %v1479
        %v1826 = vunpack.c.l.b16 %v1480
        %v1827 = vunpack.c.h.b16 %v1480
        %v1828 = vunpack.c.l.b16 %v1481
        %v1829 = vunpack.c.h.b16 %v1481
        %v1830 = vunpack.c.l.b16 %v1482
        %v1831 = vunpack.c.h.b16 %v1482
        %v1832 = vunpack.c.l.b16 %v1483
        %v1833 = vunpack.c.h.b16 %v1483
        %v1834 = vunpack.c.l.b16 %v1484
        %v1835 = vunpack.c.h.b16 %v1484
        %v1836 = vunpack.c.l.b16 %v1485
        %v1837 = vunpack.c.h.b16 %v1485
        %v1838 = vunpack.c.l.b16 %v1486
        %v1839 = vunpack.c.h.b16 %v1486
        %v1840 = vunpack.c.l.b16 %v1487
        %v1841 = vunpack.c.h.b16 %v1487
        %v1842 = vunpack.c.l.b16 %v1488
        %v1843 = vunpack.c.h.b16 %v1488
        %v1844 = vunpack.c.l.b16 %v1489
        %v1845 = vunpack.c.h.b16 %v1489
        %v1846 = vunpack.c.l.b16 %v1490
        %v1847 = vunpack.c.h.b16 %v1490
        %v1848 = vunpack.c.l.b16 %v1491
        %v1849 = vunpack.c.h.b16 %v1491
        %v1850 = vunpack.c.l.b16 %v1492
        %v1851 = vunpack.c.h.b16 %v1492
        %v1852 = vunpack.c.l.b16 %v1493
        %v1853 = vunpack.c.h.b16 %v1493
        %v1854 = vunpack.c.l.b16 %v1494
        %v1855 = vunpack.c.h.b16 %v1494
        %v1856 = vunpack.c.l.b16 %v1495
        %v1857 = vunpack.c.h.b16 %v1495
        %v1858 = vunpack.c.l.b16 %v1496
        %v1859 = vunpack.c.h.b16 %v1496
        %v1860 = vunpack.c.l.b16 %v1497
        %v1861 = vunpack.c.h.b16 %v1497
        %v1862 = vunpack.c.l.b16 %v1498
        %v1863 = vunpack.c.h.b16 %v1498
        %v1864 = vunpack.c.l.b16 %v1499
        %v1865 = vunpack.c.h.b16 %v1499
        %v1866 = vunpack.c.l.b16 %v1500
        %v1867 = vunpack.c.h.b16 %v1500
        %v1868 = vunpack.c.l.b16 %v1501
        %v1869 = vunpack.c.h.b16 %v1501
        %v1870 = vunpack.c.l.b16 %v1502
        %v1871 = vunpack.c.h.b16 %v1502
        %v1872 = vunpack.c.l.b16 %v1503
        %v1873 = vunpack.c.h.b16 %v1503
        %v1874 = vunpack.c.l.b16 %v1504
        %v1875 = vunpack.c.h.b16 %v1504
        %v1876 = vunpack.c.l.b16 %v1505
        %v1877 = vunpack.c.h.b16 %v1505
        %v1878 = vunpack.c.l.b16 %v1506
        %v1879 = vunpack.c.h.b16 %v1506
        %v1880 = vunpack.c.l.b16 %v1507
        %v1881 = vunpack.c.h.b16 %v1507
        %v1882 = vunpack.c.l.b16 %v1508
        %v1883 = vunpack.c.h.b16 %v1508
        %v1884 = vunpack.c.l.b16 %v1509
        %v1885 = vunpack.c.h.b16 %v1509
        %v1886 = vunpack.c.l.b16 %v1510
        %v1887 = vunpack.c.h.b16 %v1510
        %v1888 = vunpack.c.l.b16 %v1511
        %v1889 = vunpack.c.h.b16 %v1511
        %v1890 = vunpack.c.l.b16 %v1512
        %v1891 = vunpack.c.h.b16 %v1512
        %v1892 = vunpack.c.l.b16 %v1513
        %v1893 = vunpack.c.h.b16 %v1513
        %v1894 = vunpack.c.l.b16 %v1514
        %v1895 = vunpack.c.h.b16 %v1514
        %v1896 = vunpack.c.l.b16 %v1515
        %v1897 = vunpack.c.h.b16 %v1515
        %v1898 = vunpack.c.l.b16 %v1516
        %v1899 = vunpack.c.h.b16 %v1516
        %v1900 = vunpack.c.l.b16 %v1517
        %v1901 = vunpack.c.h.b16 %v1517
        %v1902 = vpack.c.b16 %v1650, %v1646
        %v1903 = vpack.c.b16 %v1651, %v1647
        %v1904 = vpack.c.b16 %v1652, %v1648
        %v1905 = vpack.c.b16 %v1653, %v1649
        %v1906 = vpack.c.b16 %v1658, %v1654
        %v1907 = vpack.c.b16 %v1659, %v1655
        %v1908 = vpack.c.b16 %v1660, %v1656
        %v1909 = vpack.c.b16 %v1661, %v1657
        %v1910 = vpack.c.b16 %v1666, %v1662
        %v1911 = vpack.c.b16 %v1667, %v1663
        %v1912 = vpack.c.b16 %v1668, %v1664
        %v1913 = vpack.c.b16 %v1669, %v1665
        %v1914 = vpack.c.b16 %v1674, %v1670
        %v1915 = vpack.c.b16 %v1675, %v1671
        %v1916 = vpack.c.b16 %v1676, %v1672
        %v1917 = vpack.c.b16 %v1677, %v1673
        %v1918 = vpack.c.b16 %v1682, %v1678
        %v1919 = vpack.c.b16 %v1683, %v1679
        %v1920 = vpack.c.b16 %v1684, %v1680
        %v1921 = vpack.c.b16 %v1685, %v1681
        %v1922 = vpack.c.b16 %v1690, %v1686
        %v1923 = vpack.c.b16 %v1691, %v1687
        %v1924 = vpack.c.b16 %v1692, %v1688
        %v1925 = vpack.c.b16 %v1693, %v1689
        %v1926 = vpack.c.b16 %v1698, %v1694
        %v1927 = vpack.c.b16 %v1699, %v1695
        %v1928 = vpack.c.b16 %v1700, %v1696
        %v1929 = vpack.c.b16 %v1701, %v1697
        %v1930 = vpack.c.b16 %v1706, %v1702
        %v1931 = vpack.c.b16 %v1707, %v1703
        %v1932 = vpack.c.b16 %v1708, %v1704
        %v1933 = vpack.c.b16 %v1709, %v1705
        %v1934 = vpack.c.b16 %v1714, %v1710
        %v1935 = vpack.c.b16 %v1715, %v1711
        %v1936 = vpack.c.b16 %v1716, %v1712
        %v1937 = vpack.c.b16 %v1717, %v1713
        %v1938 = vpack.c.b16 %v1722, %v1718
        %v1939 = vpack.c.b16 %v1723, %v1719
        %v1940 = vpack.c.b16 %v1724, %v1720
        %v1941 = vpack.c.b16 %v1725, %v1721
        %v1942 = vpack.c.b16 %v1730, %v1726
        %v1943 = vpack.c.b16 %v1731, %v1727
        %v1944 = vpack.c.b16 %v1732, %v1728
        %v1945 = vpack.c.b16 %v1733, %v1729
        %v1946 = vpack.c.b16 %v1738, %v1734
        %v1947 = vpack.c.b16 %v1739, %v1735
        %v1948 = vpack.c.b16 %v1740, %v1736
        %v1949 = vpack.c.b16 %v1741, %v1737
        %v1950 = vpack.c.b16 %v1746, %v1742
        %v1951 = vpack.c.b16 %v1747, %v1743
        %v1952 = vpack.c.b16 %v1748, %v1744
        %v1953 = vpack.c.b16 %v1749, %v1745
        %v1954 = vpack.c.b16 %v1754, %v1750
        %v1955 = vpack.c.b16 %v1755, %v1751
        %v1956 = vpack.c.b16 %v1756, %v1752
        %v1957 = vpack.c.b16 %v1757, %v1753
        %v1958 = vpack.c.b16 %v1762, %v1758
        %v1959 = vpack.c.b16 %v1763, %v1759
        %v1960 = vpack.c.b16 %v1764, %v1760
        %v1961 = vpack.c.b16 %v1765, %v1761
        %v1962 = vpack.c.b16 %v1770, %v1766
        %v1963 = vpack.c.b16 %v1771, %v1767
        %v1964 = vpack.c.b16 %v1772, %v1768
        %v1965 = vpack.c.b16 %v1773, %v1769
        %v1966 = vpack.c.b16 %v1778, %v1774
        %v1967 = vpack.c.b16 %v1779, %v1775
        %v1968 = vpack.c.b16 %v1780, %v1776
        %v1969 = vpack.c.b16 %v1781, %v1777
        %v1970 = vpack.c.b16 %v1786, %v1782
        %v1971 = vpack.c.b16 %v1787, %v1783
        %v1972 = vpack.c.b16 %v1788, %v1784
        %v1973 = vpack.c.b16 %v1789, %v1785
        %v1974 = vpack.c.b16 %v1794, %v1790
        %v1975 = vpack.c.b16 %v1795, %v1791
        %v1976 = vpack.c.b16 %v1796, %v1792
        %v1977 = vpack.c.b16 %v1797, %v1793
        %v1978 = vpack.c.b16 %v1802, %v1798
        %v1979 = vpack.c.b16 %v1803, %v1799
        %v1980 = vpack.c.b16 %v1804, %v1800
        %v1981 = vpack.c.b16 %v1805, %v1801
        %v1982 = vpack.c.b16 %v1810, %v1806
        %v1983 = vpack.c.b16 %v1811, %v1807
        %v1984 = vpack.c.b16 %v1812, %v1808
        %v1985 = vpack.c.b16 %v1813, %v1809
        %v1986 = vpack.c.b16 %v1818, %v1814
        %v1987 = vpack.c.b16 %v1819, %v1815
        %v1988 = vpack.c.b16 %v1820, %v1816
        %v1989 = vpack.c.b16 %v1821, %v1817
        %v1990 = vpack.c.b16 %v1826, %v1822
        %v1991 = vpack.c.b16 %v1827, %v1823
        %v1992 = vpack.c.b16 %v1828, %v1824
        %v1993 = vpack.c.b16 %v1829, %v1825
        %v1994 = vpack.c.b16 %v1834, %v1830
        %v1995 = vpack.c.b16 %v1835, %v1831
        %v1996 = vpack.c.b16 %v1836, %v1832
        %v1997 = vpack.c.b16 %v1837, %v1833
        %v1998 = vpack.c.b16 %v1842, %v1838
        %v1999 = vpack.c.b16 %v1843, %v1839
        %v2000 = vpack.c.b16 %v1844, %v1840
        %v2001 = vpack.c.b16 %v1845, %v1841
        %v2002 = vpack.c.b16 %v1850, %v1846
        %v2003 = vpack.c.b16 %v1851, %v1847
        %v2004 = vpack.c.b16 %v1852, %v1848
        %v2005 = vpack.c.b16 %v1853, %v1849
        %v2006 = vpack.c.b16 %v1858, %v1854
        %v2007 = vpack.c.b16 %v1859, %v1855
        %v2008 = vpack.c.b16 %v1860, %v1856
        %v2009 = vpack.c.b16 %v1861, %v1857
        %v2010 = vpack.c.b16 %v1866, %v1862
        %v2011 = vpack.c.b16 %v1867, %v1863
        %v2012 = vpack.c.b16 %v1868, %v1864
        %v2013 = vpack.c.b16 %v1869, %v1865
        %v2014 = vpack.c.b16 %v1874, %v1870
        %v2015 = vpack.c.b16 %v1875, %v1871
        %v2016 = vpack.c.b16 %v1876, %v1872
        %v2017 = vpack.c.b16 %v1877, %v1873
        %v2018 = vpack.c.b16 %v1882, %v1878
        %v2019 = vpack.c.b16 %v1883, %v1879
        %v2020 = vpack.c.b16 %v1884, %v1880
        %v2021 = vpack.c.b16 %v1885, %v1881
        %v2022 = vpack.c.b16 %v1890, %v1886
        %v2023 = vpack.c.b16 %v1891, %v1887
        %v2024 = vpack.c.b16 %v1892, %v1888
        %v2025 = vpack.c.b16 %v1893, %v1889
        %v2026 = vpack.c.b16 %v1898, %v1894
        %v2027 = vpack.c.b16 %v1899, %v1895
        %v2028 = vpack.c.b16 %v1900, %v1896
        %v2029 = vpack.c.b16 %v1901, %v1897
        %2158 = vmatprep.subr.bf16.mxu0 %v1903
        %2159 = vmatpush1.bf16.msra.mxu0 %v1902
        %2160 = vmatprep.subr.bf16.mxu0 %v1907
        %2161 = vmatpush1.bf16.msra.mxu0 %v1906
        %2162 = vmatprep.subr.bf16.mxu0 %v1911
        %2163 = vmatpush1.bf16.msra.mxu0 %v1910
        %2164 = vmatprep.subr.bf16.mxu0 %v1915
        %2165 = vmatpush1.bf16.msra.mxu0 %v1914
        %2166 = vmatprep.subr.bf16.mxu0 %v1919
        %2167 = vmatpush1.bf16.msra.mxu0 %v1918
        %2168 = vmatprep.subr.bf16.mxu0 %v1923
        %2169 = vmatpush1.bf16.msra.mxu0 %v1922
        %2170 = vmatprep.subr.bf16.mxu0 %v1927
        %2171 = vmatpush1.bf16.msra.mxu0 %v1926
        %2172 = vmatprep.subr.bf16.mxu0 %v1931
        %2173 = vmatpush1.bf16.msra.mxu0 %v1930
        %2174 = vmatprep.subr.bf16.mxu0 %v1935
        %2175 = vmatpush1.bf16.msra.mxu0 %v1934
        %2176 = vmatprep.subr.bf16.mxu0 %v1939
        %2177 = vmatpush1.bf16.msra.mxu0 %v1938
        %2178 = vmatprep.subr.bf16.mxu0 %v1943
        %2179 = vmatpush1.bf16.msra.mxu0 %v1942
        %2180 = vmatprep.subr.bf16.mxu0 %v1947
        %2181 = vmatpush1.bf16.msra.mxu0 %v1946
        %2182 = vmatprep.subr.bf16.mxu0 %v1951
        %2183 = vmatpush1.bf16.msra.mxu0 %v1950
        %2184 = vmatprep.subr.bf16.mxu0 %v1955
        %2185 = vmatpush1.bf16.msra.mxu0 %v1954
        %2186 = vmatprep.subr.bf16.mxu0 %v1959
        %2187 = vmatpush1.bf16.msra.mxu0 %v1958
        %2188 = vmatprep.subr.bf16.mxu0 %v1963
        %2189 = vmatpush1.bf16.msra.mxu0 %v1962
        %2190 = vmatprep.mubr.bf16.mxu0 %v1359
        %2191 = vmatmul.mubr.bf16.gmra.mrb[0].mxu0 %v1358
        %v2192 = vpop.f32.mrb[0].mxu0
        %v2193 = vadd.f32 0.0, %v2192
        %v2194 = vpop.f32.mrb[0].mxu0
        %v2195 = vadd.f32 0.0, %v2194
        %v2196 = vpop.f32.mrb[0].mxu0
        %v2197 = vadd.f32 0.0, %v2196
        %v2198 = vpop.f32.mrb[0].mxu0
        %v2199 = vadd.f32 0.0, %v2198
        %2200 = vmatprep.mubr.bf16.mxu0 %v1363
        %2201 = vmatmul.mubr.bf16.gmra.mrb[0].mxu0 %v1362
        %v2202 = vpop.f32.mrb[0].mxu0
        %v2203 = vadd.f32 0.0, %v2202
        %v2204 = vpop.f32.mrb[0].mxu0
        %v2205 = vadd.f32 0.0, %v2204
        %v2206 = vpop.f32.mrb[0].mxu0
        %v2207 = vadd.f32 0.0, %v2206
        %v2208 = vpop.f32.mrb[0].mxu0
        %v2209 = vadd.f32 0.0, %v2208
        %2210 = vmatprep.mubr.bf16.mxu0 %v1367
        %2211 = vmatmul.mubr.bf16.gmra.mrb[0].mxu0 %v1366
        %v2212 = vpop.f32.mrb[0].mxu0
        %v2213 = vadd.f32 0.0, %v2212
        %v2214 = vpop.f32.mrb[0].mxu0
        %v2215 = vadd.f32 0.0, %v2214
        %v2216 = vpop.f32.mrb[0].mxu0
        %v2217 = vadd.f32 0.0, %v2216
        %v2218 = vpop.f32.mrb[0].mxu0
        %v2219 = vadd.f32 0.0, %v2218
        %2220 = vmatprep.mubr.bf16.mxu0 %v1371
        %2221 = vmatmul.mubr.bf16.gmra.mrb[0].mxu0 %v1370
        %v2222 = vpop.f32.mrb[0].mxu0
        %v2223 = vadd.f32 0.0, %v2222
        %v2224 = vpop.f32.mrb[0].mxu0
        %v2225 = vadd.f32 0.0, %v2224
        %v2226 = vpop.f32.mrb[0].mxu0
        %v2227 = vadd.f32 0.0, %v2226
        %v2228 = vpop.f32.mrb[0].mxu0
        %v2229 = vadd.f32 0.0, %v2228
        %2230 = vmatprep.mubr.bf16.mxu0 %v1375
        %2231 = vmatmul.mubr.bf16.gmra.mrb[0].mxu0 %v1374
        %v2232 = vpop.f32.mrb[0].mxu0
        %v2233 = vadd.f32 0.0, %v2232
        %v2234 = vpop.f32.mrb[0].mxu0
        %v2235 = vadd.f32 0.0, %v2234
        %v2236 = vpop.f32.mrb[0].mxu0
        %v2237 = vadd.f32 0.0, %v2236
        %v2238 = vpop.f32.mrb[0].mxu0
        %v2239 = vadd.f32 0.0, %v2238
        %2240 = vmatprep.mubr.bf16.mxu0 %v1379
        %2241 = vmatmul.mubr.bf16.gmra.mrb[0].mxu0 %v1378
        %v2242 = vpop.f32.mrb[0].mxu0
        %v2243 = vadd.f32 0.0, %v2242
        %v2244 = vpop.f32.mrb[0].mxu0
        %v2245 = vadd.f32 0.0, %v2244
        %v2246 = vpop.f32.mrb[0].mxu0
        %v2247 = vadd.f32 0.0, %v2246
        %v2248 = vpop.f32.mrb[0].mxu0
        %v2249 = vadd.f32 0.0, %v2248
        %2250 = vmatprep.mubr.bf16.mxu0 %v1383
        %2251 = vmatmul.mubr.bf16.gmra.mrb[0].mxu0 %v1382
        %v2252 = vpop.f32.mrb[0].mxu0
        %v2253 = vadd.f32 0.0, %v2252
        %v2254 = vpop.f32.mrb[0].mxu0
        %v2255 = vadd.f32 0.0, %v2254
        %v2256 = vpop.f32.mrb[0].mxu0
        %v2257 = vadd.f32 0.0, %v2256
        %v2258 = vpop.f32.mrb[0].mxu0
        %v2259 = vadd.f32 0.0, %v2258
        %2260 = vmatprep.mubr.bf16.mxu0 %v1387
        %2261 = vmatmul.mubr.bf16.gmra.mrb[0].mxu0 %v1386
        %v2262 = vpop.f32.mrb[0].mxu0
        %v2263 = vadd.f32 0.0, %v2262
        %v2264 = vpop.f32.mrb[0].mxu0
        %v2265 = vadd.f32 0.0, %v2264
        %v2266 = vpop.f32.mrb[0].mxu0
        %v2267 = vadd.f32 0.0, %v2266
        %v2268 = vpop.f32.mrb[0].mxu0
        %v2269 = vadd.f32 0.0, %v2268
        %2270 = vdwg.mxu0
        %2271 = vmatprep.subr.bf16.mxu0 %v1967
        %2272 = vmatpush1.bf16.msra.mxu0 %v1966
        %2273 = vmatprep.subr.bf16.mxu0 %v1971
        %2274 = vmatpush1.bf16.msra.mxu0 %v1970
        %2275 = vmatprep.subr.bf16.mxu0 %v1975
        %2276 = vmatpush1.bf16.msra.mxu0 %v1974
        %2277 = vmatprep.subr.bf16.mxu0 %v1979
        %2278 = vmatpush1.bf16.msra.mxu0 %v1978
        %2279 = vmatprep.subr.bf16.mxu0 %v1983
        %2280 = vmatpush1.bf16.msra.mxu0 %v1982
        %2281 = vmatprep.subr.bf16.mxu0 %v1987
        %2282 = vmatpush1.bf16.msra.mxu0 %v1986
        %2283 = vmatprep.subr.bf16.mxu0 %v1991
        %2284 = vmatpush1.bf16.msra.mxu0 %v1990
        %2285 = vmatprep.subr.bf16.mxu0 %v1995
        %2286 = vmatpush1.bf16.msra.mxu0 %v1994
        %2287 = vmatprep.subr.bf16.mxu0 %v1999
        %2288 = vmatpush1.bf16.msra.mxu0 %v1998
        %2289 = vmatprep.subr.bf16.mxu0 %v2003
        %2290 = vmatpush1.bf16.msra.mxu0 %v2002
        %2291 = vmatprep.subr.bf16.mxu0 %v2007
        %2292 = vmatpush1.bf16.msra.mxu0 %v2006
        %2293 = vmatprep.subr.bf16.mxu0 %v2011
        %2294 = vmatpush1.bf16.msra.mxu0 %v2010
        %2295 = vmatprep.subr.bf16.mxu0 %v2015
        %2296 = vmatpush1.bf16.msra.mxu0 %v2014
        %2297 = vmatprep.subr.bf16.mxu0 %v2019
        %2298 = vmatpush1.bf16.msra.mxu0 %v2018
        %2299 = vmatprep.subr.bf16.mxu0 %v2023
        %2300 = vmatpush1.bf16.msra.mxu0 %v2022
        %2301 = vmatprep.subr.bf16.mxu0 %v2027
        %2302 = vmatpush1.bf16.msra.mxu0 %v2026
        %2303 = vmatprep.mubr.bf16.mxu0 %v1361
        %2304 = vmatmul.mubr.bf16.gmra.mrb[0].mxu0 %v1360
        %v2305 = vpop.f32.mrb[0].mxu0
        %v2306 = vadd.f32 %v2193, %v2305
        %v2307 = vpop.f32.mrb[0].mxu0
        %v2308 = vadd.f32 %v2195, %v2307
        %v2309 = vpop.f32.mrb[0].mxu0
        %v2310 = vadd.f32 %v2197, %v2309
        %v2311 = vpop.f32.mrb[0].mxu0
        %v2312 = vadd.f32 %v2199, %v2311
        %2313 = vmatprep.mubr.bf16.mxu0 %v1365
        %2314 = vmatmul.mubr.bf16.gmra.mrb[0].mxu0 %v1364
        %v2315 = vpop.f32.mrb[0].mxu0
        %v2316 = vadd.f32 %v2203, %v2315
        %v2317 = vpop.f32.mrb[0].mxu0
        %v2318 = vadd.f32 %v2205, %v2317
        %v2319 = vpop.f32.mrb[0].mxu0
        %v2320 = vadd.f32 %v2207, %v2319
        %v2321 = vpop.f32.mrb[0].mxu0
        %v2322 = vadd.f32 %v2209, %v2321
        %2323 = vmatprep.mubr.bf16.mxu0 %v1369
        %2324 = vmatmul.mubr.bf16.gmra.mrb[0].mxu0 %v1368
        %v2325 = vpop.f32.mrb[0].mxu0
        %v2326 = vadd.f32 %v2213, %v2325
        %v2327 = vpop.f32.mrb[0].mxu0
        %v2328 = vadd.f32 %v2215, %v2327
        %v2329 = vpop.f32.mrb[0].mxu0
        %v2330 = vadd.f32 %v2217, %v2329
        %v2331 = vpop.f32.mrb[0].mxu0
        %v2332 = vadd.f32 %v2219, %v2331
        %2333 = vmatprep.mubr.bf16.mxu0 %v1373
        %2334 = vmatmul.mubr.bf16.gmra.mrb[0].mxu0 %v1372
        %v2335 = vpop.f32.mrb[0].mxu0
        %v2336 = vadd.f32 %v2223, %v2335
        %v2337 = vpop.f32.mrb[0].mxu0
        %v2338 = vadd.f32 %v2225, %v2337
        %v2339 = vpop.f32.mrb[0].mxu0
        %v2340 = vadd.f32 %v2227, %v2339
        %v2341 = vpop.f32.mrb[0].mxu0
        %v2342 = vadd.f32 %v2229, %v2341
        %2343 = vmatprep.mubr.bf16.mxu0 %v1377
        %2344 = vmatmul.mubr.bf16.gmra.mrb[0].mxu0 %v1376
        %v2345 = vpop.f32.mrb[0].mxu0
        %v2346 = vadd.f32 %v2233, %v2345
        %v2347 = vpop.f32.mrb[0].mxu0
        %v2348 = vadd.f32 %v2235, %v2347
        %v2349 = vpop.f32.mrb[0].mxu0
        %v2350 = vadd.f32 %v2237, %v2349
        %v2351 = vpop.f32.mrb[0].mxu0
        %v2352 = vadd.f32 %v2239, %v2351
        %2353 = vmatprep.mubr.bf16.mxu0 %v1381
        %2354 = vmatmul.mubr.bf16.gmra.mrb[0].mxu0 %v1380
        %v2355 = vpop.f32.mrb[0].mxu0
        %v2356 = vadd.f32 %v2243, %v2355
        %v2357 = vpop.f32.mrb[0].mxu0
        %v2358 = vadd.f32 %v2245, %v2357
        %v2359 = vpop.f32.mrb[0].mxu0
        %v2360 = vadd.f32 %v2247, %v2359
        %v2361 = vpop.f32.mrb[0].mxu0
        %v2362 = vadd.f32 %v2249, %v2361
        %2363 = vmatprep.mubr.bf16.mxu0 %v1385
        %2364 = vmatmul.mubr.bf16.gmra.mrb[0].mxu0 %v1384
        %v2365 = vpop.f32.mrb[0].mxu0
        %v2366 = vadd.f32 %v2253, %v2365
        %v2367 = vpop.f32.mrb[0].mxu0
        %v2368 = vadd.f32 %v2255, %v2367
        %v2369 = vpop.f32.mrb[0].mxu0
        %v2370 = vadd.f32 %v2257, %v2369
        %v2371 = vpop.f32.mrb[0].mxu0
        %v2372 = vadd.f32 %v2259, %v2371
        %2373 = vmatprep.mubr.bf16.mxu0 %v1389
        %2374 = vmatmul.mubr.bf16.gmra.mrb[0].mxu0 %v1388
        %v2375 = vpop.f32.mrb[0].mxu0
        %v2376 = vadd.f32 %v2263, %v2375
        %v2377 = vpop.f32.mrb[0].mxu0
        %v2378 = vadd.f32 %v2265, %v2377
        %v2379 = vpop.f32.mrb[0].mxu0
        %v2380 = vadd.f32 %v2267, %v2379
        %v2381 = vpop.f32.mrb[0].mxu0
        %v2382 = vadd.f32 %v2269, %v2381
        %2383 = vdwg.mxu0
        %2384 = vmatprep.subr.bf16.mxu0 %v1905
        %2385 = vmatpush1.bf16.msra.mxu0 %v1904
        %2386 = vmatprep.subr.bf16.mxu0 %v1909
        %2387 = vmatpush1.bf16.msra.mxu0 %v1908
        %2388 = vmatprep.subr.bf16.mxu0 %v1913
        %2389 = vmatpush1.bf16.msra.mxu0 %v1912
        %2390 = vmatprep.subr.bf16.mxu0 %v1917
        %2391 = vmatpush1.bf16.msra.mxu0 %v1916
        %2392 = vmatprep.subr.bf16.mxu0 %v1921
        %2393 = vmatpush1.bf16.msra.mxu0 %v1920
        %2394 = vmatprep.subr.bf16.mxu0 %v1925
        %2395 = vmatpush1.bf16.msra.mxu0 %v1924
        %2396 = vmatprep.subr.bf16.mxu0 %v1929
        %2397 = vmatpush1.bf16.msra.mxu0 %v1928
        %2398 = vmatprep.subr.bf16.mxu0 %v1933
        %2399 = vmatpush1.bf16.msra.mxu0 %v1932
        %2400 = vmatprep.subr.bf16.mxu0 %v1937
        %2401 = vmatpush1.bf16.msra.mxu0 %v1936
        %2402 = vmatprep.subr.bf16.mxu0 %v1941
        %2403 = vmatpush1.bf16.msra.mxu0 %v1940
        %2404 = vmatprep.subr.bf16.mxu0 %v1945
        %2405 = vmatpush1.bf16.msra.mxu0 %v1944
        %2406 = vmatprep.subr.bf16.mxu0 %v1949
        %2407 = vmatpush1.bf16.msra.mxu0 %v1948
        %2408 = vmatprep.subr.bf16.mxu0 %v1953
        %2409 = vmatpush1.bf16.msra.mxu0 %v1952
        %2410 = vmatprep.subr.bf16.mxu0 %v1957
        %2411 = vmatpush1.bf16.msra.mxu0 %v1956
        %2412 = vmatprep.subr.bf16.mxu0 %v1961
        %2413 = vmatpush1.bf16.msra.mxu0 %v1960
        %2414 = vmatprep.subr.bf16.mxu0 %v1965
        %2415 = vmatpush1.bf16.msra.mxu0 %v1964
        %2416 = vmatprep.mubr.bf16.mxu0 %v1359
        %2417 = vmatmul.mubr.bf16.gmra.mrb[0].mxu0 %v1358
        %v2418 = vpop.f32.mrb[0].mxu0
        %v2419 = vadd.f32 0.0, %v2418
        %v2420 = vpop.f32.mrb[0].mxu0
        %v2421 = vadd.f32 0.0, %v2420
        %v2422 = vpop.f32.mrb[0].mxu0
        %v2423 = vadd.f32 0.0, %v2422
        %v2424 = vpop.f32.mrb[0].mxu0
        %v2425 = vadd.f32 0.0, %v2424
        %2426 = vmatprep.mubr.bf16.mxu0 %v1363
        %2427 = vmatmul.mubr.bf16.gmra.mrb[0].mxu0 %v1362
        %v2428 = vpop.f32.mrb[0].mxu0
        %v2429 = vadd.f32 0.0, %v2428
        %v2430 = vpop.f32.mrb[0].mxu0
        %v2431 = vadd.f32 0.0, %v2430
        %v2432 = vpop.f32.mrb[0].mxu0
        %v2433 = vadd.f32 0.0, %v2432
        %v2434 = vpop.f32.mrb[0].mxu0
        %v2435 = vadd.f32 0.0, %v2434
        %2436 = vmatprep.mubr.bf16.mxu0 %v1367
        %2437 = vmatmul.mubr.bf16.gmra.mrb[0].mxu0 %v1366
        %v2438 = vpop.f32.mrb[0].mxu0
        %v2439 = vadd.f32 0.0, %v2438
        %v2440 = vpop.f32.mrb[0].mxu0
        %v2441 = vadd.f32 0.0, %v2440
        %v2442 = vpop.f32.mrb[0].mxu0
        %v2443 = vadd.f32 0.0, %v2442
        %v2444 = vpop.f32.mrb[0].mxu0
        %v2445 = vadd.f32 0.0, %v2444
        %2446 = vmatprep.mubr.bf16.mxu0 %v1371
        %2447 = vmatmul.mubr.bf16.gmra.mrb[0].mxu0 %v1370
        %v2448 = vpop.f32.mrb[0].mxu0
        %v2449 = vadd.f32 0.0, %v2448
        %v2450 = vpop.f32.mrb[0].mxu0
        %v2451 = vadd.f32 0.0, %v2450
        %v2452 = vpop.f32.mrb[0].mxu0
        %v2453 = vadd.f32 0.0, %v2452
        %v2454 = vpop.f32.mrb[0].mxu0
        %v2455 = vadd.f32 0.0, %v2454
        %2456 = vmatprep.mubr.bf16.mxu0 %v1375
        %2457 = vmatmul.mubr.bf16.gmra.mrb[0].mxu0 %v1374
        %v2458 = vpop.f32.mrb[0].mxu0
        %v2459 = vadd.f32 0.0, %v2458
        %v2460 = vpop.f32.mrb[0].mxu0
        %v2461 = vadd.f32 0.0, %v2460
        %v2462 = vpop.f32.mrb[0].mxu0
        %v2463 = vadd.f32 0.0, %v2462
        %v2464 = vpop.f32.mrb[0].mxu0
        %v2465 = vadd.f32 0.0, %v2464
        %2466 = vmatprep.mubr.bf16.mxu0 %v1379
        %2467 = vmatmul.mubr.bf16.gmra.mrb[0].mxu0 %v1378
        %v2468 = vpop.f32.mrb[0].mxu0
        %v2469 = vadd.f32 0.0, %v2468
        %v2470 = vpop.f32.mrb[0].mxu0
        %v2471 = vadd.f32 0.0, %v2470
        %v2472 = vpop.f32.mrb[0].mxu0
        %v2473 = vadd.f32 0.0, %v2472
        %v2474 = vpop.f32.mrb[0].mxu0
        %v2475 = vadd.f32 0.0, %v2474
        %2476 = vmatprep.mubr.bf16.mxu0 %v1383
        %2477 = vmatmul.mubr.bf16.gmra.mrb[0].mxu0 %v1382
        %v2478 = vpop.f32.mrb[0].mxu0
        %v2479 = vadd.f32 0.0, %v2478
        %v2480 = vpop.f32.mrb[0].mxu0
        %v2481 = vadd.f32 0.0, %v2480
        %v2482 = vpop.f32.mrb[0].mxu0
        %v2483 = vadd.f32 0.0, %v2482
        %v2484 = vpop.f32.mrb[0].mxu0
        %v2485 = vadd.f32 0.0, %v2484
        %2486 = vmatprep.mubr.bf16.mxu0 %v1387
        %2487 = vmatmul.mubr.bf16.gmra.mrb[0].mxu0 %v1386
        %v2488 = vpop.f32.mrb[0].mxu0
        %v2489 = vadd.f32 0.0, %v2488
        %v2490 = vpop.f32.mrb[0].mxu0
        %v2491 = vadd.f32 0.0, %v2490
        %v2492 = vpop.f32.mrb[0].mxu0
        %v2493 = vadd.f32 0.0, %v2492
        %v2494 = vpop.f32.mrb[0].mxu0
        %v2495 = vadd.f32 0.0, %v2494
        %2496 = vdwg.mxu0
        %2497 = vmatprep.subr.bf16.mxu0 %v1969
        %2498 = vmatpush1.bf16.msra.mxu0 %v1968
        %2499 = vmatprep.subr.bf16.mxu0 %v1973
        %2500 = vmatpush1.bf16.msra.mxu0 %v1972
        %2501 = vmatprep.subr.bf16.mxu0 %v1977
        %2502 = vmatpush1.bf16.msra.mxu0 %v1976
        %2503 = vmatprep.subr.bf16.mxu0 %v1981
        %2504 = vmatpush1.bf16.msra.mxu0 %v1980
        %2505 = vmatprep.subr.bf16.mxu0 %v1985
        %2506 = vmatpush1.bf16.msra.mxu0 %v1984
        %2507 = vmatprep.subr.bf16.mxu0 %v1989
        %2508 = vmatpush1.bf16.msra.mxu0 %v1988
        %2509 = vmatprep.subr.bf16.mxu0 %v1993
        %2510 = vmatpush1.bf16.msra.mxu0 %v1992
        %2511 = vmatprep.subr.bf16.mxu0 %v1997
        %2512 = vmatpush1.bf16.msra.mxu0 %v1996
        %2513 = vmatprep.subr.bf16.mxu0 %v2001
        %2514 = vmatpush1.bf16.msra.mxu0 %v2000
        %2515 = vmatprep.subr.bf16.mxu0 %v2005
        %2516 = vmatpush1.bf16.msra.mxu0 %v2004
        %2517 = vmatprep.subr.bf16.mxu0 %v2009
        %2518 = vmatpush1.bf16.msra.mxu0 %v2008
        %2519 = vmatprep.subr.bf16.mxu0 %v2013
        %2520 = vmatpush1.bf16.msra.mxu0 %v2012
        %2521 = vmatprep.subr.bf16.mxu0 %v2017
        %2522 = vmatpush1.bf16.msra.mxu0 %v2016
        %2523 = vmatprep.subr.bf16.mxu0 %v2021
        %2524 = vmatpush1.bf16.msra.mxu0 %v2020
        %2525 = vmatprep.subr.bf16.mxu0 %v2025
        %2526 = vmatpush1.bf16.msra.mxu0 %v2024
        %2527 = vmatprep.subr.bf16.mxu0 %v2029
        %2528 = vmatpush1.bf16.msra.mxu0 %v2028
        %2529 = vmatprep.mubr.bf16.mxu0 %v1361
        %2530 = vmatmul.mubr.bf16.gmra.mrb[0].mxu0 %v1360
        %v2531 = vpop.f32.mrb[0].mxu0
        %v2532 = vadd.f32 %v2419, %v2531
        %v2533 = vpop.f32.mrb[0].mxu0
        %v2534 = vadd.f32 %v2421, %v2533
        %v2535 = vpop.f32.mrb[0].mxu0
        %v2536 = vadd.f32 %v2423, %v2535
        %v2537 = vpop.f32.mrb[0].mxu0
        %v2538 = vadd.f32 %v2425, %v2537
        %2539 = vmatprep.mubr.bf16.mxu0 %v1365
        %2540 = vmatmul.mubr.bf16.gmra.mrb[0].mxu0 %v1364
        %v2541 = vpop.f32.mrb[0].mxu0
        %v2542 = vadd.f32 %v2429, %v2541
        %v2543 = vpop.f32.mrb[0].mxu0
        %v2544 = vadd.f32 %v2431, %v2543
        %v2545 = vpop.f32.mrb[0].mxu0
        %v2546 = vadd.f32 %v2433, %v2545
        %v2547 = vpop.f32.mrb[0].mxu0
        %v2548 = vadd.f32 %v2435, %v2547
        %2549 = vmatprep.mubr.bf16.mxu0 %v1369
        %2550 = vmatmul.mubr.bf16.gmra.mrb[0].mxu0 %v1368
        %v2551 = vpop.f32.mrb[0].mxu0
        %v2552 = vadd.f32 %v2439, %v2551
        %v2553 = vpop.f32.mrb[0].mxu0
        %v2554 = vadd.f32 %v2441, %v2553
        %v2555 = vpop.f32.mrb[0].mxu0
        %v2556 = vadd.f32 %v2443, %v2555
        %v2557 = vpop.f32.mrb[0].mxu0
        %v2558 = vadd.f32 %v2445, %v2557
        %2559 = vmatprep.mubr.bf16.mxu0 %v1373
        %2560 = vmatmul.mubr.bf16.gmra.mrb[0].mxu0 %v1372
        %v2561 = vpop.f32.mrb[0].mxu0
        %v2562 = vadd.f32 %v2449, %v2561
        %v2563 = vpop.f32.mrb[0].mxu0
        %v2564 = vadd.f32 %v2451, %v2563
        %v2565 = vpop.f32.mrb[0].mxu0
        %v2566 = vadd.f32 %v2453, %v2565
        %v2567 = vpop.f32.mrb[0].mxu0
        %v2568 = vadd.f32 %v2455, %v2567
        %2569 = vmatprep.mubr.bf16.mxu0 %v1377
        %2570 = vmatmul.mubr.bf16.gmra.mrb[0].mxu0 %v1376
        %v2571 = vpop.f32.mrb[0].mxu0
        %v2572 = vadd.f32 %v2459, %v2571
        %v2573 = vpop.f32.mrb[0].mxu0
        %v2574 = vadd.f32 %v2461, %v2573
        %v2575 = vpop.f32.mrb[0].mxu0
        %v2576 = vadd.f32 %v2463, %v2575
        %v2577 = vpop.f32.mrb[0].mxu0
        %v2578 = vadd.f32 %v2465, %v2577
        %2579 = vmatprep.mubr.bf16.mxu0 %v1381
        %2580 = vmatmul.mubr.bf16.gmra.mrb[0].mxu0 %v1380
        %v2581 = vpop.f32.mrb[0].mxu0
        %v2582 = vadd.f32 %v2469, %v2581
        %v2583 = vpop.f32.mrb[0].mxu0
        %v2584 = vadd.f32 %v2471, %v2583
        %v2585 = vpop.f32.mrb[0].mxu0
        %v2586 = vadd.f32 %v2473, %v2585
        %v2587 = vpop.f32.mrb[0].mxu0
        %v2588 = vadd.f32 %v2475, %v2587
        %2589 = vmatprep.mubr.bf16.mxu0 %v1385
        %2590 = vmatmul.mubr.bf16.gmra.mrb[0].mxu0 %v1384
        %v2591 = vpop.f32.mrb[0].mxu0
        %v2592 = vadd.f32 %v2479, %v2591
        %v2593 = vpop.f32.mrb[0].mxu0
        %v2594 = vadd.f32 %v2481, %v2593
        %v2595 = vpop.f32.mrb[0].mxu0
        %v2596 = vadd.f32 %v2483, %v2595
        %v2597 = vpop.f32.mrb[0].mxu0
        %v2598 = vadd.f32 %v2485, %v2597
        %2599 = vmatprep.mubr.bf16.mxu0 %v1389
        %2600 = vmatmul.mubr.bf16.gmra.mrb[0].mxu0 %v1388
        %v2601 = vpop.f32.mrb[0].mxu0
        %v2602 = vadd.f32 %v2489, %v2601
        %v2603 = vpop.f32.mrb[0].mxu0
        %v2604 = vadd.f32 %v2491, %v2603
        %v2605 = vpop.f32.mrb[0].mxu0
        %v2606 = vadd.f32 %v2493, %v2605
        %v2607 = vpop.f32.mrb[0].mxu0
        %v2608 = vadd.f32 %v2495, %v2607
        %2609 = vdwg.mxu0
        %v2610 = vpack.c.bf16 %v1140, %v1140
        %v2611 = vpack.c.bf16 %v1147, %v1147
        %v2612 = vpack.c.bf16 %v1154, %v1154
        %v2613 = vpack.c.bf16 %v1161, %v1161
        %v2614 = vpack.c.bf16 %v1168, %v1168
        %v2615 = vpack.c.bf16 %v1175, %v1175
        %v2616 = vpack.c.bf16 %v1182, %v1182
        %v2617 = vpack.c.bf16 %v1189, %v1189
        %v2618 = vpack.c.bf16 %v1196, %v1196
        %v2619 = vpack.c.bf16 %v1203, %v1203
        %v2620 = vpack.c.bf16 %v1210, %v1210
        %v2621 = vpack.c.bf16 %v1217, %v1217
        %v2622 = vpack.c.bf16 %v1224, %v1224
        %v2623 = vpack.c.bf16 %v1231, %v1231
        %v2624 = vpack.c.bf16 %v1238, %v1238
        %v2625 = vpack.c.bf16 %v1245, %v1245
        %v2626 = vpack.c.bf16 %v1252, %v1252
        %v2627 = vpack.c.bf16 %v1259, %v1259
        %v2628 = vpack.c.bf16 %v1266, %v1266
        %v2629 = vpack.c.bf16 %v1273, %v1273
        %v2630 = vpack.c.bf16 %v1280, %v1280
        %v2631 = vpack.c.bf16 %v1287, %v1287
        %v2632 = vpack.c.bf16 %v1294, %v1294
        %v2633 = vpack.c.bf16 %v1301, %v1301
        %v2634 = vpack.c.bf16 %v1308, %v1308
        %v2635 = vpack.c.bf16 %v1315, %v1315
        %v2636 = vpack.c.bf16 %v1322, %v1322
        %v2637 = vpack.c.bf16 %v1329, %v1329
        %v2638 = vpack.c.bf16 %v1336, %v1336
        %v2639 = vpack.c.bf16 %v1343, %v1343
        %v2640 = vpack.c.bf16 %v1350, %v1350
        %v2641 = vpack.c.bf16 %v1357, %v1357
        %v2642 = vld [vmem:[#allocation7] sm:$0xff]
        %v2643 = vld [vmem:[#allocation7 + $0x8] sm:$0xff]
        %v2644 = vld [vmem:[#allocation7 + $0x10] sm:$0xff]
        %v2645 = vld [vmem:[#allocation7 + $0x18] sm:$0xff]
        %v2646 = vld [vmem:[#allocation7 + $0x20] sm:$0xff]
        %v2647 = vld [vmem:[#allocation7 + $0x28] sm:$0xff]
        %v2648 = vld [vmem:[#allocation7 + $0x30] sm:$0xff]
        %v2649 = vld [vmem:[#allocation7 + $0x38] sm:$0xff]
        %v2650 = vld [vmem:[#allocation7 + $0x40] sm:$0xff]
        %v2651 = vld [vmem:[#allocation7 + $0x48] sm:$0xff]
        %v2652 = vld [vmem:[#allocation7 + $0x50] sm:$0xff]
        %v2653 = vld [vmem:[#allocation7 + $0x58] sm:$0xff]
        %v2654 = vld [vmem:[#allocation7 + $0x60] sm:$0xff]
        %v2655 = vld [vmem:[#allocation7 + $0x68] sm:$0xff]
        %v2656 = vld [vmem:[#allocation7 + $0x70] sm:$0xff]
        %v2657 = vld [vmem:[#allocation7 + $0x78] sm:$0xff]
        %v2658 = vld [vmem:[#allocation7 + $0x80] sm:$0xff]
        %v2659 = vld [vmem:[#allocation7 + $0x88] sm:$0xff]
        %v2660 = vld [vmem:[#allocation7 + $0x90] sm:$0xff]
        %v2661 = vld [vmem:[#allocation7 + $0x98] sm:$0xff]
        %v2662 = vld [vmem:[#allocation7 + $0xa0] sm:$0xff]
        %v2663 = vld [vmem:[#allocation7 + $0xa8] sm:$0xff]
        %v2664 = vld [vmem:[#allocation7 + $0xb0] sm:$0xff]
        %v2665 = vld [vmem:[#allocation7 + $0xb8] sm:$0xff]
        %v2666 = vld [vmem:[#allocation7 + $0xc0] sm:$0xff]
        %v2667 = vld [vmem:[#allocation7 + $0xc8] sm:$0xff]
        %v2668 = vld [vmem:[#allocation7 + $0xd0] sm:$0xff]
        %v2669 = vld [vmem:[#allocation7 + $0xd8] sm:$0xff]
        %v2670 = vld [vmem:[#allocation7 + $0xe0] sm:$0xff]
        %v2671 = vld [vmem:[#allocation7 + $0xe8] sm:$0xff]
        %v2672 = vld [vmem:[#allocation7 + $0xf0] sm:$0xff]
        %v2673 = vld [vmem:[#allocation7 + $0xf8] sm:$0xff]
        %v2674 = vld [vmem:[#allocation7 + $0x100] sm:$0xff]
        %v2675 = vld [vmem:[#allocation7 + $0x108] sm:$0xff]
        %v2676 = vld [vmem:[#allocation7 + $0x110] sm:$0xff]
        %v2677 = vld [vmem:[#allocation7 + $0x118] sm:$0xff]
        %v2678 = vld [vmem:[#allocation7 + $0x120] sm:$0xff]
        %v2679 = vld [vmem:[#allocation7 + $0x128] sm:$0xff]
        %v2680 = vld [vmem:[#allocation7 + $0x130] sm:$0xff]
        %v2681 = vld [vmem:[#allocation7 + $0x138] sm:$0xff]
        %v2682 = vld [vmem:[#allocation7 + $0x140] sm:$0xff]
        %v2683 = vld [vmem:[#allocation7 + $0x148] sm:$0xff]
        %v2684 = vld [vmem:[#allocation7 + $0x150] sm:$0xff]
        %v2685 = vld [vmem:[#allocation7 + $0x158] sm:$0xff]
        %v2686 = vld [vmem:[#allocation7 + $0x160] sm:$0xff]
        %v2687 = vld [vmem:[#allocation7 + $0x168] sm:$0xff]
        %v2688 = vld [vmem:[#allocation7 + $0x170] sm:$0xff]
        %v2689 = vld [vmem:[#allocation7 + $0x178] sm:$0xff]
        %v2690 = vld [vmem:[#allocation7 + $0x180] sm:$0xff]
        %v2691 = vld [vmem:[#allocation7 + $0x188] sm:$0xff]
        %v2692 = vld [vmem:[#allocation7 + $0x190] sm:$0xff]
        %v2693 = vld [vmem:[#allocation7 + $0x198] sm:$0xff]
        %v2694 = vld [vmem:[#allocation7 + $0x1a0] sm:$0xff]
        %v2695 = vld [vmem:[#allocation7 + $0x1a8] sm:$0xff]
        %v2696 = vld [vmem:[#allocation7 + $0x1b0] sm:$0xff]
        %v2697 = vld [vmem:[#allocation7 + $0x1b8] sm:$0xff]
        %v2698 = vld [vmem:[#allocation7 + $0x1c0] sm:$0xff]
        %v2699 = vld [vmem:[#allocation7 + $0x1c8] sm:$0xff]
        %v2700 = vld [vmem:[#allocation7 + $0x1d0] sm:$0xff]
        %v2701 = vld [vmem:[#allocation7 + $0x1d8] sm:$0xff]
        %v2702 = vld [vmem:[#allocation7 + $0x1e0] sm:$0xff]
        %v2703 = vld [vmem:[#allocation7 + $0x1e8] sm:$0xff]
        %v2704 = vld [vmem:[#allocation7 + $0x1f0] sm:$0xff]
        %v2705 = vld [vmem:[#allocation7 + $0x1f8] sm:$0xff]
        %v2706 = vld [vmem:[#allocation7 + $0x200] sm:$0xff]
        %v2707 = vld [vmem:[#allocation7 + $0x208] sm:$0xff]
        %v2708 = vld [vmem:[#allocation7 + $0x210] sm:$0xff]
        %v2709 = vld [vmem:[#allocation7 + $0x218] sm:$0xff]
        %v2710 = vld [vmem:[#allocation7 + $0x220] sm:$0xff]
        %v2711 = vld [vmem:[#allocation7 + $0x228] sm:$0xff]
        %v2712 = vld [vmem:[#allocation7 + $0x230] sm:$0xff]
        %v2713 = vld [vmem:[#allocation7 + $0x238] sm:$0xff]
        %v2714 = vld [vmem:[#allocation7 + $0x240] sm:$0xff]
        %v2715 = vld [vmem:[#allocation7 + $0x248] sm:$0xff]
        %v2716 = vld [vmem:[#allocation7 + $0x250] sm:$0xff]
        %v2717 = vld [vmem:[#allocation7 + $0x258] sm:$0xff]
        %v2718 = vld [vmem:[#allocation7 + $0x260] sm:$0xff]
        %v2719 = vld [vmem:[#allocation7 + $0x268] sm:$0xff]
        %v2720 = vld [vmem:[#allocation7 + $0x270] sm:$0xff]
        %v2721 = vld [vmem:[#allocation7 + $0x278] sm:$0xff]
        %v2722 = vld [vmem:[#allocation7 + $0x280] sm:$0xff]
        %v2723 = vld [vmem:[#allocation7 + $0x288] sm:$0xff]
        %v2724 = vld [vmem:[#allocation7 + $0x290] sm:$0xff]
        %v2725 = vld [vmem:[#allocation7 + $0x298] sm:$0xff]
        %v2726 = vld [vmem:[#allocation7 + $0x2a0] sm:$0xff]
        %v2727 = vld [vmem:[#allocation7 + $0x2a8] sm:$0xff]
        %v2728 = vld [vmem:[#allocation7 + $0x2b0] sm:$0xff]
        %v2729 = vld [vmem:[#allocation7 + $0x2b8] sm:$0xff]
        %v2730 = vld [vmem:[#allocation7 + $0x2c0] sm:$0xff]
        %v2731 = vld [vmem:[#allocation7 + $0x2c8] sm:$0xff]
        %v2732 = vld [vmem:[#allocation7 + $0x2d0] sm:$0xff]
        %v2733 = vld [vmem:[#allocation7 + $0x2d8] sm:$0xff]
        %v2734 = vld [vmem:[#allocation7 + $0x2e0] sm:$0xff]
        %v2735 = vld [vmem:[#allocation7 + $0x2e8] sm:$0xff]
        %v2736 = vld [vmem:[#allocation7 + $0x2f0] sm:$0xff]
        %v2737 = vld [vmem:[#allocation7 + $0x2f8] sm:$0xff]
        %v2738 = vld [vmem:[#allocation7 + $0x300] sm:$0xff]
        %v2739 = vld [vmem:[#allocation7 + $0x308] sm:$0xff]
        %v2740 = vld [vmem:[#allocation7 + $0x310] sm:$0xff]
        %v2741 = vld [vmem:[#allocation7 + $0x318] sm:$0xff]
        %v2742 = vld [vmem:[#allocation7 + $0x320] sm:$0xff]
        %v2743 = vld [vmem:[#allocation7 + $0x328] sm:$0xff]
        %v2744 = vld [vmem:[#allocation7 + $0x330] sm:$0xff]
        %v2745 = vld [vmem:[#allocation7 + $0x338] sm:$0xff]
        %v2746 = vld [vmem:[#allocation7 + $0x340] sm:$0xff]
        %v2747 = vld [vmem:[#allocation7 + $0x348] sm:$0xff]
        %v2748 = vld [vmem:[#allocation7 + $0x350] sm:$0xff]
        %v2749 = vld [vmem:[#allocation7 + $0x358] sm:$0xff]
        %v2750 = vld [vmem:[#allocation7 + $0x360] sm:$0xff]
        %v2751 = vld [vmem:[#allocation7 + $0x368] sm:$0xff]
        %v2752 = vld [vmem:[#allocation7 + $0x370] sm:$0xff]
        %v2753 = vld [vmem:[#allocation7 + $0x378] sm:$0xff]
        %v2754 = vld [vmem:[#allocation7 + $0x380] sm:$0xff]
        %v2755 = vld [vmem:[#allocation7 + $0x388] sm:$0xff]
        %v2756 = vld [vmem:[#allocation7 + $0x390] sm:$0xff]
        %v2757 = vld [vmem:[#allocation7 + $0x398] sm:$0xff]
        %v2758 = vld [vmem:[#allocation7 + $0x3a0] sm:$0xff]
        %v2759 = vld [vmem:[#allocation7 + $0x3a8] sm:$0xff]
        %v2760 = vld [vmem:[#allocation7 + $0x3b0] sm:$0xff]
        %v2761 = vld [vmem:[#allocation7 + $0x3b8] sm:$0xff]
        %v2762 = vld [vmem:[#allocation7 + $0x3c0] sm:$0xff]
        %v2763 = vld [vmem:[#allocation7 + $0x3c8] sm:$0xff]
        %v2764 = vld [vmem:[#allocation7 + $0x3d0] sm:$0xff]
        %v2765 = vld [vmem:[#allocation7 + $0x3d8] sm:$0xff]
        %v2766 = vld [vmem:[#allocation7 + $0x3e0] sm:$0xff]
        %v2767 = vld [vmem:[#allocation7 + $0x3e8] sm:$0xff]
        %v2768 = vld [vmem:[#allocation7 + $0x3f0] sm:$0xff]
        %v2769 = vld [vmem:[#allocation7 + $0x3f8] sm:$0xff]
        %v2770 = vld [vmem:[%s7] sm:$0xf]
        %v2772 = vlaneseq
        %v2773 = vshrl.u32 %v2772, 7
        %v2774 = vsub.s32 0, %v2773
        %v2775 = vrot.slane %v2770, %v2774
        %v2776 = vlaneseq
        %v2777 = vshrl.u32 %v2776, 7
        %v2778 = vsub.s32 1, %v2777
        %v2779 = vrot.slane %v2770, %v2778
        %v2780 = vlaneseq
        %v2781 = vshrl.u32 %v2780, 7
        %v2782 = vsub.s32 2, %v2781
        %v2783 = vrot.slane %v2770, %v2782
        %v2784 = vlaneseq
        %v2785 = vshrl.u32 %v2784, 7
        %v2786 = vsub.s32 3, %v2785
        %v2787 = vrot.slane %v2770, %v2786
        %v2824 = vunpack.c.l.b16 %v2610
        %v2825 = vunpack.c.l.b16 %v2611
        %v2826 = vunpack.c.l.b16 %v2612
        %v2827 = vunpack.c.l.b16 %v2613
        %v2828 = vunpack.c.l.b16 %v2614
        %v2829 = vunpack.c.l.b16 %v2615
        %v2830 = vunpack.c.l.b16 %v2616
        %v2831 = vunpack.c.l.b16 %v2617
        %v2832 = vunpack.c.l.b16 %v2618
        %v2833 = vunpack.c.l.b16 %v2619
        %v2834 = vunpack.c.l.b16 %v2620
        %v2835 = vunpack.c.l.b16 %v2621
        %v2836 = vunpack.c.l.b16 %v2622
        %v2837 = vunpack.c.l.b16 %v2623
        %v2838 = vunpack.c.l.b16 %v2624
        %v2839 = vunpack.c.l.b16 %v2625
        %v2840 = vunpack.c.l.b16 %v2626
        %v2841 = vunpack.c.l.b16 %v2627
        %v2842 = vunpack.c.l.b16 %v2628
        %v2843 = vunpack.c.l.b16 %v2629
        %v2844 = vunpack.c.l.b16 %v2630
        %v2845 = vunpack.c.l.b16 %v2631
        %v2846 = vunpack.c.l.b16 %v2632
        %v2847 = vunpack.c.l.b16 %v2633
        %v2848 = vunpack.c.l.b16 %v2634
        %v2849 = vunpack.c.l.b16 %v2635
        %v2850 = vunpack.c.l.b16 %v2636
        %v2851 = vunpack.c.l.b16 %v2637
        %v2852 = vunpack.c.l.b16 %v2638
        %v2853 = vunpack.c.l.b16 %v2639
        %v2854 = vunpack.c.l.b16 %v2640
        %v2855 = vunpack.c.l.b16 %v2641
        %vm2856 = vcmask 1041409
        %v2857 = vsel %vm2856, %v2828, %v2824
        %vm2858 = vcmask 1042434
        %v2859 = vsel %vm2858, %v2832, %v2857
        %vm2860 = vcmask 1043459
        %v2861 = vsel %vm2860, %v2836, %v2859
        %vm2862 = vcmask 1044484
        %v2863 = vsel %vm2862, %v2840, %v2861
        %vm2864 = vcmask 1045509
        %v2865 = vsel %vm2864, %v2844, %v2863
        %vm2866 = vcmask 1046534
        %v2867 = vsel %vm2866, %v2848, %v2865
        %vm2868 = vcmask 1047559
        %v2869 = vsel %vm2868, %v2852, %v2867
        %v2870 = vsel %vm2856, %v2829, %v2825
        %v2871 = vsel %vm2858, %v2833, %v2870
        %v2872 = vsel %vm2860, %v2837, %v2871
        %v2873 = vsel %vm2862, %v2841, %v2872
        %v2874 = vsel %vm2864, %v2845, %v2873
        %v2875 = vsel %vm2866, %v2849, %v2874
        %v2876 = vsel %vm2868, %v2853, %v2875
        %v2877 = vsel %vm2856, %v2830, %v2826
        %v2878 = vsel %vm2858, %v2834, %v2877
        %v2879 = vsel %vm2860, %v2838, %v2878
        %v2880 = vsel %vm2862, %v2842, %v2879
        %v2881 = vsel %vm2864, %v2846, %v2880
        %v2882 = vsel %vm2866, %v2850, %v2881
        %v2883 = vsel %vm2868, %v2854, %v2882
        %v2884 = vsel %vm2856, %v2831, %v2827
        %v2885 = vsel %vm2858, %v2835, %v2884
        %v2886 = vsel %vm2860, %v2839, %v2885
        %v2887 = vsel %vm2862, %v2843, %v2886
        %v2888 = vsel %vm2864, %v2847, %v2887
        %v2889 = vsel %vm2866, %v2851, %v2888
        %v2890 = vsel %vm2868, %v2855, %v2889
        %v2891 = vpack.c.b16 %v2869, %v2869
        %v2892 = vpack.c.b16 %v2876, %v2876
        %v2893 = vpack.c.b16 %v2883, %v2883
        %v2894 = vpack.c.b16 %v2890, %v2890
        %v3027 = vunpack.c.l.b16 %v2642
        %v3028 = vunpack.c.h.b16 %v2642
        %v3029 = vunpack.c.l.b16 %v2643
        %v3030 = vunpack.c.h.b16 %v2643
        %v3031 = vunpack.c.l.b16 %v2644
        %v3032 = vunpack.c.h.b16 %v2644
        %v3033 = vunpack.c.l.b16 %v2645
        %v3034 = vunpack.c.h.b16 %v2645
        %v3035 = vunpack.c.l.b16 %v2646
        %v3036 = vunpack.c.h.b16 %v2646
        %v3037 = vunpack.c.l.b16 %v2647
        %v3038 = vunpack.c.h.b16 %v2647
        %v3039 = vunpack.c.l.b16 %v2648
        %v3040 = vunpack.c.h.b16 %v2648
        %v3041 = vunpack.c.l.b16 %v2649
        %v3042 = vunpack.c.h.b16 %v2649
        %v3043 = vunpack.c.l.b16 %v2650
        %v3044 = vunpack.c.h.b16 %v2650
        %v3045 = vunpack.c.l.b16 %v2651
        %v3046 = vunpack.c.h.b16 %v2651
        %v3047 = vunpack.c.l.b16 %v2652
        %v3048 = vunpack.c.h.b16 %v2652
        %v3049 = vunpack.c.l.b16 %v2653
        %v3050 = vunpack.c.h.b16 %v2653
        %v3051 = vunpack.c.l.b16 %v2654
        %v3052 = vunpack.c.h.b16 %v2654
        %v3053 = vunpack.c.l.b16 %v2655
        %v3054 = vunpack.c.h.b16 %v2655
        %v3055 = vunpack.c.l.b16 %v2656
        %v3056 = vunpack.c.h.b16 %v2656
        %v3057 = vunpack.c.l.b16 %v2657
        %v3058 = vunpack.c.h.b16 %v2657
        %v3059 = vunpack.c.l.b16 %v2658
        %v3060 = vunpack.c.h.b16 %v2658
        %v3061 = vunpack.c.l.b16 %v2659
        %v3062 = vunpack.c.h.b16 %v2659
        %v3063 = vunpack.c.l.b16 %v2660
        %v3064 = vunpack.c.h.b16 %v2660
        %v3065 = vunpack.c.l.b16 %v2661
        %v3066 = vunpack.c.h.b16 %v2661
        %v3067 = vunpack.c.l.b16 %v2662
        %v3068 = vunpack.c.h.b16 %v2662
        %v3069 = vunpack.c.l.b16 %v2663
        %v3070 = vunpack.c.h.b16 %v2663
        %v3071 = vunpack.c.l.b16 %v2664
        %v3072 = vunpack.c.h.b16 %v2664
        %v3073 = vunpack.c.l.b16 %v2665
        %v3074 = vunpack.c.h.b16 %v2665
        %v3075 = vunpack.c.l.b16 %v2666
        %v3076 = vunpack.c.h.b16 %v2666
        %v3077 = vunpack.c.l.b16 %v2667
        %v3078 = vunpack.c.h.b16 %v2667
        %v3079 = vunpack.c.l.b16 %v2668
        %v3080 = vunpack.c.h.b16 %v2668
        %v3081 = vunpack.c.l.b16 %v2669
        %v3082 = vunpack.c.h.b16 %v2669
        %v3083 = vunpack.c.l.b16 %v2670
        %v3084 = vunpack.c.h.b16 %v2670
        %v3085 = vunpack.c.l.b16 %v2671
        %v3086 = vunpack.c.h.b16 %v2671
        %v3087 = vunpack.c.l.b16 %v2672
        %v3088 = vunpack.c.h.b16 %v2672
        %v3089 = vunpack.c.l.b16 %v2673
        %v3090 = vunpack.c.h.b16 %v2673
        %v3091 = vunpack.c.l.b16 %v2674
        %v3092 = vunpack.c.h.b16 %v2674
        %v3093 = vunpack.c.l.b16 %v2675
        %v3094 = vunpack.c.h.b16 %v2675
        %v3095 = vunpack.c.l.b16 %v2676
        %v3096 = vunpack.c.h.b16 %v2676
        %v3097 = vunpack.c.l.b16 %v2677
        %v3098 = vunpack.c.h.b16 %v2677
        %v3099 = vunpack.c.l.b16 %v2678
        %v3100 = vunpack.c.h.b16 %v2678
        %v3101 = vunpack.c.l.b16 %v2679
        %v3102 = vunpack.c.h.b16 %v2679
        %v3103 = vunpack.c.l.b16 %v2680
        %v3104 = vunpack.c.h.b16 %v2680
        %v3105 = vunpack.c.l.b16 %v2681
        %v3106 = vunpack.c.h.b16 %v2681
        %v3107 = vunpack.c.l.b16 %v2682
        %v3108 = vunpack.c.h.b16 %v2682
        %v3109 = vunpack.c.l.b16 %v2683
        %v3110 = vunpack.c.h.b16 %v2683
        %v3111 = vunpack.c.l.b16 %v2684
        %v3112 = vunpack.c.h.b16 %v2684
        %v3113 = vunpack.c.l.b16 %v2685
        %v3114 = vunpack.c.h.b16 %v2685
        %v3115 = vunpack.c.l.b16 %v2686
        %v3116 = vunpack.c.h.b16 %v2686
        %v3117 = vunpack.c.l.b16 %v2687
        %v3118 = vunpack.c.h.b16 %v2687
        %v3119 = vunpack.c.l.b16 %v2688
        %v3120 = vunpack.c.h.b16 %v2688
        %v3121 = vunpack.c.l.b16 %v2689
        %v3122 = vunpack.c.h.b16 %v2689
        %v3123 = vunpack.c.l.b16 %v2690
        %v3124 = vunpack.c.h.b16 %v2690
        %v3125 = vunpack.c.l.b16 %v2691
        %v3126 = vunpack.c.h.b16 %v2691
        %v3127 = vunpack.c.l.b16 %v2692
        %v3128 = vunpack.c.h.b16 %v2692
        %v3129 = vunpack.c.l.b16 %v2693
        %v3130 = vunpack.c.h.b16 %v2693
        %v3131 = vunpack.c.l.b16 %v2694
        %v3132 = vunpack.c.h.b16 %v2694
        %v3133 = vunpack.c.l.b16 %v2695
        %v3134 = vunpack.c.h.b16 %v2695
        %v3135 = vunpack.c.l.b16 %v2696
        %v3136 = vunpack.c.h.b16 %v2696
        %v3137 = vunpack.c.l.b16 %v2697
        %v3138 = vunpack.c.h.b16 %v2697
        %v3139 = vunpack.c.l.b16 %v2698
        %v3140 = vunpack.c.h.b16 %v2698
        %v3141 = vunpack.c.l.b16 %v2699
        %v3142 = vunpack.c.h.b16 %v2699
        %v3143 = vunpack.c.l.b16 %v2700
        %v3144 = vunpack.c.h.b16 %v2700
        %v3145 = vunpack.c.l.b16 %v2701
        %v3146 = vunpack.c.h.b16 %v2701
        %v3147 = vunpack.c.l.b16 %v2702
        %v3148 = vunpack.c.h.b16 %v2702
        %v3149 = vunpack.c.l.b16 %v2703
        %v3150 = vunpack.c.h.b16 %v2703
        %v3151 = vunpack.c.l.b16 %v2704
        %v3152 = vunpack.c.h.b16 %v2704
        %v3153 = vunpack.c.l.b16 %v2705
        %v3154 = vunpack.c.h.b16 %v2705
        %v3155 = vunpack.c.l.b16 %v2706
        %v3156 = vunpack.c.h.b16 %v2706
        %v3157 = vunpack.c.l.b16 %v2707
        %v3158 = vunpack.c.h.b16 %v2707
        %v3159 = vunpack.c.l.b16 %v2708
        %v3160 = vunpack.c.h.b16 %v2708
        %v3161 = vunpack.c.l.b16 %v2709
        %v3162 = vunpack.c.h.b16 %v2709
        %v3163 = vunpack.c.l.b16 %v2710
        %v3164 = vunpack.c.h.b16 %v2710
        %v3165 = vunpack.c.l.b16 %v2711
        %v3166 = vunpack.c.h.b16 %v2711
        %v3167 = vunpack.c.l.b16 %v2712
        %v3168 = vunpack.c.h.b16 %v2712
        %v3169 = vunpack.c.l.b16 %v2713
        %v3170 = vunpack.c.h.b16 %v2713
        %v3171 = vunpack.c.l.b16 %v2714
        %v3172 = vunpack.c.h.b16 %v2714
        %v3173 = vunpack.c.l.b16 %v2715
        %v3174 = vunpack.c.h.b16 %v2715
        %v3175 = vunpack.c.l.b16 %v2716
        %v3176 = vunpack.c.h.b16 %v2716
        %v3177 = vunpack.c.l.b16 %v2717
        %v3178 = vunpack.c.h.b16 %v2717
        %v3179 = vunpack.c.l.b16 %v2718
        %v3180 = vunpack.c.h.b16 %v2718
        %v3181 = vunpack.c.l.b16 %v2719
        %v3182 = vunpack.c.h.b16 %v2719
        %v3183 = vunpack.c.l.b16 %v2720
        %v3184 = vunpack.c.h.b16 %v2720
        %v3185 = vunpack.c.l.b16 %v2721
        %v3186 = vunpack.c.h.b16 %v2721
        %v3187 = vunpack.c.l.b16 %v2722
        %v3188 = vunpack.c.h.b16 %v2722
        %v3189 = vunpack.c.l.b16 %v2723
        %v3190 = vunpack.c.h.b16 %v2723
        %v3191 = vunpack.c.l.b16 %v2724
        %v3192 = vunpack.c.h.b16 %v2724
        %v3193 = vunpack.c.l.b16 %v2725
        %v3194 = vunpack.c.h.b16 %v2725
        %v3195 = vunpack.c.l.b16 %v2726
        %v3196 = vunpack.c.h.b16 %v2726
        %v3197 = vunpack.c.l.b16 %v2727
        %v3198 = vunpack.c.h.b16 %v2727
        %v3199 = vunpack.c.l.b16 %v2728
        %v3200 = vunpack.c.h.b16 %v2728
        %v3201 = vunpack.c.l.b16 %v2729
        %v3202 = vunpack.c.h.b16 %v2729
        %v3203 = vunpack.c.l.b16 %v2730
        %v3204 = vunpack.c.h.b16 %v2730
        %v3205 = vunpack.c.l.b16 %v2731
        %v3206 = vunpack.c.h.b16 %v2731
        %v3207 = vunpack.c.l.b16 %v2732
        %v3208 = vunpack.c.h.b16 %v2732
        %v3209 = vunpack.c.l.b16 %v2733
        %v3210 = vunpack.c.h.b16 %v2733
        %v3211 = vunpack.c.l.b16 %v2734
        %v3212 = vunpack.c.h.b16 %v2734
        %v3213 = vunpack.c.l.b16 %v2735
        %v3214 = vunpack.c.h.b16 %v2735
        %v3215 = vunpack.c.l.b16 %v2736
        %v3216 = vunpack.c.h.b16 %v2736
        %v3217 = vunpack.c.l.b16 %v2737
        %v3218 = vunpack.c.h.b16 %v2737
        %v3219 = vunpack.c.l.b16 %v2738
        %v3220 = vunpack.c.h.b16 %v2738
        %v3221 = vunpack.c.l.b16 %v2739
        %v3222 = vunpack.c.h.b16 %v2739
        %v3223 = vunpack.c.l.b16 %v2740
        %v3224 = vunpack.c.h.b16 %v2740
        %v3225 = vunpack.c.l.b16 %v2741
        %v3226 = vunpack.c.h.b16 %v2741
        %v3227 = vunpack.c.l.b16 %v2742
        %v3228 = vunpack.c.h.b16 %v2742
        %v3229 = vunpack.c.l.b16 %v2743
        %v3230 = vunpack.c.h.b16 %v2743
        %v3231 = vunpack.c.l.b16 %v2744
        %v3232 = vunpack.c.h.b16 %v2744
        %v3233 = vunpack.c.l.b16 %v2745
        %v3234 = vunpack.c.h.b16 %v2745
        %v3235 = vunpack.c.l.b16 %v2746
        %v3236 = vunpack.c.h.b16 %v2746
        %v3237 = vunpack.c.l.b16 %v2747
        %v3238 = vunpack.c.h.b16 %v2747
        %v3239 = vunpack.c.l.b16 %v2748
        %v3240 = vunpack.c.h.b16 %v2748
        %v3241 = vunpack.c.l.b16 %v2749
        %v3242 = vunpack.c.h.b16 %v2749
        %v3243 = vunpack.c.l.b16 %v2750
        %v3244 = vunpack.c.h.b16 %v2750
        %v3245 = vunpack.c.l.b16 %v2751
        %v3246 = vunpack.c.h.b16 %v2751
        %v3247 = vunpack.c.l.b16 %v2752
        %v3248 = vunpack.c.h.b16 %v2752
        %v3249 = vunpack.c.l.b16 %v2753
        %v3250 = vunpack.c.h.b16 %v2753
        %v3251 = vunpack.c.l.b16 %v2754
        %v3252 = vunpack.c.h.b16 %v2754
        %v3253 = vunpack.c.l.b16 %v2755
        %v3254 = vunpack.c.h.b16 %v2755
        %v3255 = vunpack.c.l.b16 %v2756
        %v3256 = vunpack.c.h.b16 %v2756
        %v3257 = vunpack.c.l.b16 %v2757
        %v3258 = vunpack.c.h.b16 %v2757
        %v3259 = vunpack.c.l.b16 %v2758
        %v3260 = vunpack.c.h.b16 %v2758
        %v3261 = vunpack.c.l.b16 %v2759
        %v3262 = vunpack.c.h.b16 %v2759
        %v3263 = vunpack.c.l.b16 %v2760
        %v3264 = vunpack.c.h.b16 %v2760
        %v3265 = vunpack.c.l.b16 %v2761
        %v3266 = vunpack.c.h.b16 %v2761
        %v3267 = vunpack.c.l.b16 %v2762
        %v3268 = vunpack.c.h.b16 %v2762
        %v3269 = vunpack.c.l.b16 %v2763
        %v3270 = vunpack.c.h.b16 %v2763
        %v3271 = vunpack.c.l.b16 %v2764
        %v3272 = vunpack.c.h.b16 %v2764
        %v3273 = vunpack.c.l.b16 %v2765
        %v3274 = vunpack.c.h.b16 %v2765
        %v3275 = vunpack.c.l.b16 %v2766
        %v3276 = vunpack.c.h.b16 %v2766
        %v3277 = vunpack.c.l.b16 %v2767
        %v3278 = vunpack.c.h.b16 %v2767
        %v3279 = vunpack.c.l.b16 %v2768
        %v3280 = vunpack.c.h.b16 %v2768
        %v3281 = vunpack.c.l.b16 %v2769
        %v3282 = vunpack.c.h.b16 %v2769
        %v3283 = vpack.c.b16 %v3031, %v3027
        %v3284 = vpack.c.b16 %v3032, %v3028
        %v3285 = vpack.c.b16 %v3033, %v3029
        %v3286 = vpack.c.b16 %v3034, %v3030
        %v3287 = vpack.c.b16 %v3039, %v3035
        %v3288 = vpack.c.b16 %v3040, %v3036
        %v3289 = vpack.c.b16 %v3041, %v3037
        %v3290 = vpack.c.b16 %v3042, %v3038
        %v3291 = vpack.c.b16 %v3047, %v3043
        %v3292 = vpack.c.b16 %v3048, %v3044
        %v3293 = vpack.c.b16 %v3049, %v3045
        %v3294 = vpack.c.b16 %v3050, %v3046
        %v3295 = vpack.c.b16 %v3055, %v3051
        %v3296 = vpack.c.b16 %v3056, %v3052
        %v3297 = vpack.c.b16 %v3057, %v3053
        %v3298 = vpack.c.b16 %v3058, %v3054
        %v3299 = vpack.c.b16 %v3063, %v3059
        %v3300 = vpack.c.b16 %v3064, %v3060
        %v3301 = vpack.c.b16 %v3065, %v3061
        %v3302 = vpack.c.b16 %v3066, %v3062
        %v3303 = vpack.c.b16 %v3071, %v3067
        %v3304 = vpack.c.b16 %v3072, %v3068
        %v3305 = vpack.c.b16 %v3073, %v3069
        %v3306 = vpack.c.b16 %v3074, %v3070
        %v3307 = vpack.c.b16 %v3079, %v3075
        %v3308 = vpack.c.b16 %v3080, %v3076
        %v3309 = vpack.c.b16 %v3081, %v3077
        %v3310 = vpack.c.b16 %v3082, %v3078
        %v3311 = vpack.c.b16 %v3087, %v3083
        %v3312 = vpack.c.b16 %v3088, %v3084
        %v3313 = vpack.c.b16 %v3089, %v3085
        %v3314 = vpack.c.b16 %v3090, %v3086
        %v3315 = vpack.c.b16 %v3095, %v3091
        %v3316 = vpack.c.b16 %v3096, %v3092
        %v3317 = vpack.c.b16 %v3097, %v3093
        %v3318 = vpack.c.b16 %v3098, %v3094
        %v3319 = vpack.c.b16 %v3103, %v3099
        %v3320 = vpack.c.b16 %v3104, %v3100
        %v3321 = vpack.c.b16 %v3105, %v3101
        %v3322 = vpack.c.b16 %v3106, %v3102
        %v3323 = vpack.c.b16 %v3111, %v3107
        %v3324 = vpack.c.b16 %v3112, %v3108
        %v3325 = vpack.c.b16 %v3113, %v3109
        %v3326 = vpack.c.b16 %v3114, %v3110
        %v3327 = vpack.c.b16 %v3119, %v3115
        %v3328 = vpack.c.b16 %v3120, %v3116
        %v3329 = vpack.c.b16 %v3121, %v3117
        %v3330 = vpack.c.b16 %v3122, %v3118
        %v3331 = vpack.c.b16 %v3127, %v3123
        %v3332 = vpack.c.b16 %v3128, %v3124
        %v3333 = vpack.c.b16 %v3129, %v3125
        %v3334 = vpack.c.b16 %v3130, %v3126
        %v3335 = vpack.c.b16 %v3135, %v3131
        %v3336 = vpack.c.b16 %v3136, %v3132
        %v3337 = vpack.c.b16 %v3137, %v3133
        %v3338 = vpack.c.b16 %v3138, %v3134
        %v3339 = vpack.c.b16 %v3143, %v3139
        %v3340 = vpack.c.b16 %v3144, %v3140
        %v3341 = vpack.c.b16 %v3145, %v3141
        %v3342 = vpack.c.b16 %v3146, %v3142
        %v3343 = vpack.c.b16 %v3151, %v3147
        %v3344 = vpack.c.b16 %v3152, %v3148
        %v3345 = vpack.c.b16 %v3153, %v3149
        %v3346 = vpack.c.b16 %v3154, %v3150
        %v3347 = vpack.c.b16 %v3159, %v3155
        %v3348 = vpack.c.b16 %v3160, %v3156
        %v3349 = vpack.c.b16 %v3161, %v3157
        %v3350 = vpack.c.b16 %v3162, %v3158
        %v3351 = vpack.c.b16 %v3167, %v3163
        %v3352 = vpack.c.b16 %v3168, %v3164
        %v3353 = vpack.c.b16 %v3169, %v3165
        %v3354 = vpack.c.b16 %v3170, %v3166
        %v3355 = vpack.c.b16 %v3175, %v3171
        %v3356 = vpack.c.b16 %v3176, %v3172
        %v3357 = vpack.c.b16 %v3177, %v3173
        %v3358 = vpack.c.b16 %v3178, %v3174
        %v3359 = vpack.c.b16 %v3183, %v3179
        %v3360 = vpack.c.b16 %v3184, %v3180
        %v3361 = vpack.c.b16 %v3185, %v3181
        %v3362 = vpack.c.b16 %v3186, %v3182
        %v3363 = vpack.c.b16 %v3191, %v3187
        %v3364 = vpack.c.b16 %v3192, %v3188
        %v3365 = vpack.c.b16 %v3193, %v3189
        %v3366 = vpack.c.b16 %v3194, %v3190
        %v3367 = vpack.c.b16 %v3199, %v3195
        %v3368 = vpack.c.b16 %v3200, %v3196
        %v3369 = vpack.c.b16 %v3201, %v3197
        %v3370 = vpack.c.b16 %v3202, %v3198
        %v3371 = vpack.c.b16 %v3207, %v3203
        %v3372 = vpack.c.b16 %v3208, %v3204
        %v3373 = vpack.c.b16 %v3209, %v3205
        %v3374 = vpack.c.b16 %v3210, %v3206
        %v3375 = vpack.c.b16 %v3215, %v3211
        %v3376 = vpack.c.b16 %v3216, %v3212
        %v3377 = vpack.c.b16 %v3217, %v3213
        %v3378 = vpack.c.b16 %v3218, %v3214
        %v3379 = vpack.c.b16 %v3223, %v3219
        %v3380 = vpack.c.b16 %v3224, %v3220
        %v3381 = vpack.c.b16 %v3225, %v3221
        %v3382 = vpack.c.b16 %v3226, %v3222
        %v3383 = vpack.c.b16 %v3231, %v3227
        %v3384 = vpack.c.b16 %v3232, %v3228
        %v3385 = vpack.c.b16 %v3233, %v3229
        %v3386 = vpack.c.b16 %v3234, %v3230
        %v3387 = vpack.c.b16 %v3239, %v3235
        %v3388 = vpack.c.b16 %v3240, %v3236
        %v3389 = vpack.c.b16 %v3241, %v3237
        %v3390 = vpack.c.b16 %v3242, %v3238
        %v3391 = vpack.c.b16 %v3247, %v3243
        %v3392 = vpack.c.b16 %v3248, %v3244
        %v3393 = vpack.c.b16 %v3249, %v3245
        %v3394 = vpack.c.b16 %v3250, %v3246
        %v3395 = vpack.c.b16 %v3255, %v3251
        %v3396 = vpack.c.b16 %v3256, %v3252
        %v3397 = vpack.c.b16 %v3257, %v3253
        %v3398 = vpack.c.b16 %v3258, %v3254
        %v3399 = vpack.c.b16 %v3263, %v3259
        %v3400 = vpack.c.b16 %v3264, %v3260
        %v3401 = vpack.c.b16 %v3265, %v3261
        %v3402 = vpack.c.b16 %v3266, %v3262
        %v3403 = vpack.c.b16 %v3271, %v3267
        %v3404 = vpack.c.b16 %v3272, %v3268
        %v3405 = vpack.c.b16 %v3273, %v3269
        %v3406 = vpack.c.b16 %v3274, %v3270
        %v3407 = vpack.c.b16 %v3279, %v3275
        %v3408 = vpack.c.b16 %v3280, %v3276
        %v3409 = vpack.c.b16 %v3281, %v3277
        %v3410 = vpack.c.b16 %v3282, %v3278
        %3539 = vmatprep.subr.bf16.mxu0 %v3284
        %3540 = vmatpush1.bf16.msra.mxu0 %v3283
        %3541 = vmatprep.subr.bf16.mxu0 %v3288
        %3542 = vmatpush1.bf16.msra.mxu0 %v3287
        %3543 = vmatprep.subr.bf16.mxu0 %v3292
        %3544 = vmatpush1.bf16.msra.mxu0 %v3291
        %3545 = vmatprep.subr.bf16.mxu0 %v3296
        %3546 = vmatpush1.bf16.msra.mxu0 %v3295
        %3547 = vmatprep.subr.bf16.mxu0 %v3300
        %3548 = vmatpush1.bf16.msra.mxu0 %v3299
        %3549 = vmatprep.subr.bf16.mxu0 %v3304
        %3550 = vmatpush1.bf16.msra.mxu0 %v3303
        %3551 = vmatprep.subr.bf16.mxu0 %v3308
        %3552 = vmatpush1.bf16.msra.mxu0 %v3307
        %3553 = vmatprep.subr.bf16.mxu0 %v3312
        %3554 = vmatpush1.bf16.msra.mxu0 %v3311
        %3555 = vmatprep.subr.bf16.mxu0 %v3316
        %3556 = vmatpush1.bf16.msra.mxu0 %v3315
        %3557 = vmatprep.subr.bf16.mxu0 %v3320
        %3558 = vmatpush1.bf16.msra.mxu0 %v3319
        %3559 = vmatprep.subr.bf16.mxu0 %v3324
        %3560 = vmatpush1.bf16.msra.mxu0 %v3323
        %3561 = vmatprep.subr.bf16.mxu0 %v3328
        %3562 = vmatpush1.bf16.msra.mxu0 %v3327
        %3563 = vmatprep.subr.bf16.mxu0 %v3332
        %3564 = vmatpush1.bf16.msra.mxu0 %v3331
        %3565 = vmatprep.subr.bf16.mxu0 %v3336
        %3566 = vmatpush1.bf16.msra.mxu0 %v3335
        %3567 = vmatprep.subr.bf16.mxu0 %v3340
        %3568 = vmatpush1.bf16.msra.mxu0 %v3339
        %3569 = vmatprep.subr.bf16.mxu0 %v3344
        %3570 = vmatpush1.bf16.msra.mxu0 %v3343
        %3571 = vmatprep.mubr.bf16.mxu0 %v2892
        %3572 = vmatmul.mubr.bf16.gmra.mrb[0].mxu0 %v2891
        %v3573 = vpop.f32.mrb[0].mxu0
        %v3574 = vadd.f32 %v2775, %v3573
        %v3575 = vpop.f32.mrb[0].mxu0
        %v3576 = vadd.f32 %v2779, %v3575
        %v3577 = vpop.f32.mrb[0].mxu0
        %v3578 = vpop.f32.mrb[0].mxu0
        %3579 = vdwg.mxu0
        %3580 = vmatprep.subr.bf16.mxu0 %v3348
        %3581 = vmatpush1.bf16.msra.mxu0 %v3347
        %3582 = vmatprep.subr.bf16.mxu0 %v3352
        %3583 = vmatpush1.bf16.msra.mxu0 %v3351
        %3584 = vmatprep.subr.bf16.mxu0 %v3356
        %3585 = vmatpush1.bf16.msra.mxu0 %v3355
        %3586 = vmatprep.subr.bf16.mxu0 %v3360
        %3587 = vmatpush1.bf16.msra.mxu0 %v3359
        %3588 = vmatprep.subr.bf16.mxu0 %v3364
        %3589 = vmatpush1.bf16.msra.mxu0 %v3363
        %3590 = vmatprep.subr.bf16.mxu0 %v3368
        %3591 = vmatpush1.bf16.msra.mxu0 %v3367
        %3592 = vmatprep.subr.bf16.mxu0 %v3372
        %3593 = vmatpush1.bf16.msra.mxu0 %v3371
        %3594 = vmatprep.subr.bf16.mxu0 %v3376
        %3595 = vmatpush1.bf16.msra.mxu0 %v3375
        %3596 = vmatprep.subr.bf16.mxu0 %v3380
        %3597 = vmatpush1.bf16.msra.mxu0 %v3379
        %3598 = vmatprep.subr.bf16.mxu0 %v3384
        %3599 = vmatpush1.bf16.msra.mxu0 %v3383
        %3600 = vmatprep.subr.bf16.mxu0 %v3388
        %3601 = vmatpush1.bf16.msra.mxu0 %v3387
        %3602 = vmatprep.subr.bf16.mxu0 %v3392
        %3603 = vmatpush1.bf16.msra.mxu0 %v3391
        %3604 = vmatprep.subr.bf16.mxu0 %v3396
        %3605 = vmatpush1.bf16.msra.mxu0 %v3395
        %3606 = vmatprep.subr.bf16.mxu0 %v3400
        %3607 = vmatpush1.bf16.msra.mxu0 %v3399
        %3608 = vmatprep.subr.bf16.mxu0 %v3404
        %3609 = vmatpush1.bf16.msra.mxu0 %v3403
        %3610 = vmatprep.subr.bf16.mxu0 %v3408
        %3611 = vmatpush1.bf16.msra.mxu0 %v3407
        %3612 = vmatprep.mubr.bf16.mxu0 %v2894
        %3613 = vmatmul.mubr.bf16.gmra.mrb[0].mxu0 %v2893
        %v3614 = vpop.f32.mrb[0].mxu0
        %v3615 = vadd.f32 %v3574, %v3614
        %v3616 = vpop.f32.mrb[0].mxu0
        %v3617 = vadd.f32 %v3576, %v3616
        %v3618 = vpop.f32.mrb[0].mxu0
        %v3619 = vpop.f32.mrb[0].mxu0
        %3620 = vdwg.mxu0
        %3621 = vmatprep.subr.bf16.mxu0 %v3286
        %3622 = vmatpush1.bf16.msra.mxu0 %v3285
        %3623 = vmatprep.subr.bf16.mxu0 %v3290
        %3624 = vmatpush1.bf16.msra.mxu0 %v3289
        %3625 = vmatprep.subr.bf16.mxu0 %v3294
        %3626 = vmatpush1.bf16.msra.mxu0 %v3293
        %3627 = vmatprep.subr.bf16.mxu0 %v3298
        %3628 = vmatpush1.bf16.msra.mxu0 %v3297
        %3629 = vmatprep.subr.bf16.mxu0 %v3302
        %3630 = vmatpush1.bf16.msra.mxu0 %v3301
        %3631 = vmatprep.subr.bf16.mxu0 %v3306
        %3632 = vmatpush1.bf16.msra.mxu0 %v3305
        %3633 = vmatprep.subr.bf16.mxu0 %v3310
        %3634 = vmatpush1.bf16.msra.mxu0 %v3309
        %3635 = vmatprep.subr.bf16.mxu0 %v3314
        %3636 = vmatpush1.bf16.msra.mxu0 %v3313
        %3637 = vmatprep.subr.bf16.mxu0 %v3318
        %3638 = vmatpush1.bf16.msra.mxu0 %v3317
        %3639 = vmatprep.subr.bf16.mxu0 %v3322
        %3640 = vmatpush1.bf16.msra.mxu0 %v3321
        %3641 = vmatprep.subr.bf16.mxu0 %v3326
        %3642 = vmatpush1.bf16.msra.mxu0 %v3325
        %3643 = vmatprep.subr.bf16.mxu0 %v3330
        %3644 = vmatpush1.bf16.msra.mxu0 %v3329
        %3645 = vmatprep.subr.bf16.mxu0 %v3334
        %3646 = vmatpush1.bf16.msra.mxu0 %v3333
        %3647 = vmatprep.subr.bf16.mxu0 %v3338
        %3648 = vmatpush1.bf16.msra.mxu0 %v3337
        %3649 = vmatprep.subr.bf16.mxu0 %v3342
        %3650 = vmatpush1.bf16.msra.mxu0 %v3341
        %3651 = vmatprep.subr.bf16.mxu0 %v3346
        %3652 = vmatpush1.bf16.msra.mxu0 %v3345
        %3653 = vmatprep.mubr.bf16.mxu0 %v2892
        %3654 = vmatmul.mubr.bf16.gmra.mrb[0].mxu0 %v2891
        %v3655 = vpop.f32.mrb[0].mxu0
        %v3656 = vadd.f32 %v2783, %v3655
        %v3657 = vpop.f32.mrb[0].mxu0
        %v3658 = vadd.f32 %v2787, %v3657
        %v3659 = vpop.f32.mrb[0].mxu0
        %v3660 = vpop.f32.mrb[0].mxu0
        %3661 = vdwg.mxu0
        %3662 = vmatprep.subr.bf16.mxu0 %v3350
        %3663 = vmatpush1.bf16.msra.mxu0 %v3349
        %3664 = vmatprep.subr.bf16.mxu0 %v3354
        %3665 = vmatpush1.bf16.msra.mxu0 %v3353
        %3666 = vmatprep.subr.bf16.mxu0 %v3358
        %3667 = vmatpush1.bf16.msra.mxu0 %v3357
        %3668 = vmatprep.subr.bf16.mxu0 %v3362
        %3669 = vmatpush1.bf16.msra.mxu0 %v3361
        %3670 = vmatprep.subr.bf16.mxu0 %v3366
        %3671 = vmatpush1.bf16.msra.mxu0 %v3365
        %3672 = vmatprep.subr.bf16.mxu0 %v3370
        %3673 = vmatpush1.bf16.msra.mxu0 %v3369
        %3674 = vmatprep.subr.bf16.mxu0 %v3374
        %3675 = vmatpush1.bf16.msra.mxu0 %v3373
        %3676 = vmatprep.subr.bf16.mxu0 %v3378
        %3677 = vmatpush1.bf16.msra.mxu0 %v3377
        %3678 = vmatprep.subr.bf16.mxu0 %v3382
        %3679 = vmatpush1.bf16.msra.mxu0 %v3381
        %3680 = vmatprep.subr.bf16.mxu0 %v3386
        %3681 = vmatpush1.bf16.msra.mxu0 %v3385
        %3682 = vmatprep.subr.bf16.mxu0 %v3390
        %3683 = vmatpush1.bf16.msra.mxu0 %v3389
        %3684 = vmatprep.subr.bf16.mxu0 %v3394
        %3685 = vmatpush1.bf16.msra.mxu0 %v3393
        %3686 = vmatprep.subr.bf16.mxu0 %v3398
        %3687 = vmatpush1.bf16.msra.mxu0 %v3397
        %3688 = vmatprep.subr.bf16.mxu0 %v3402
        %3689 = vmatpush1.bf16.msra.mxu0 %v3401
        %3690 = vmatprep.subr.bf16.mxu0 %v3406
        %3691 = vmatpush1.bf16.msra.mxu0 %v3405
        %3692 = vmatprep.subr.bf16.mxu0 %v3410
        %3693 = vmatpush1.bf16.msra.mxu0 %v3409
        %3694 = vmatprep.mubr.bf16.mxu0 %v2894
        %3695 = vmatmul.mubr.bf16.gmra.mrb[0].mxu0 %v2893
        %v3696 = vpop.f32.mrb[0].mxu0
        %v3697 = vadd.f32 %v3656, %v3696
        %v3698 = vpop.f32.mrb[0].mxu0
        %v3699 = vadd.f32 %v3658, %v3698
        %v3700 = vpop.f32.mrb[0].mxu0
        %v3701 = vpop.f32.mrb[0].mxu0
        %3702 = vdwg.mxu0
        %v3703 = vpack.c.bf16 %v2310, %v2306
        %v3704 = vpack.c.bf16 %v2312, %v2308
        %v3705 = vpack.c.bf16 %v2536, %v2532
        %v3706 = vpack.c.bf16 %v2538, %v2534
        %v3707 = vpack.c.bf16 %v2320, %v2316
        %v3708 = vpack.c.bf16 %v2322, %v2318
        %v3709 = vpack.c.bf16 %v2546, %v2542
        %v3710 = vpack.c.bf16 %v2548, %v2544
        %v3711 = vpack.c.bf16 %v2330, %v2326
        %v3712 = vpack.c.bf16 %v2332, %v2328
        %v3713 = vpack.c.bf16 %v2556, %v2552
        %v3714 = vpack.c.bf16 %v2558, %v2554
        %v3715 = vpack.c.bf16 %v2340, %v2336
        %v3716 = vpack.c.bf16 %v2342, %v2338
        %v3717 = vpack.c.bf16 %v2566, %v2562
        %v3718 = vpack.c.bf16 %v2568, %v2564
        %v3719 = vpack.c.bf16 %v2350, %v2346
        %v3720 = vpack.c.bf16 %v2352, %v2348
        %v3721 = vpack.c.bf16 %v2576, %v2572
        %v3722 = vpack.c.bf16 %v2578, %v2574
        %v3723 = vpack.c.bf16 %v2360, %v2356
        %v3724 = vpack.c.bf16 %v2362, %v2358
        %v3725 = vpack.c.bf16 %v2586, %v2582
        %v3726 = vpack.c.bf16 %v2588, %v2584
        %v3727 = vpack.c.bf16 %v2370, %v2366
        %v3728 = vpack.c.bf16 %v2372, %v2368
        %v3729 = vpack.c.bf16 %v2596, %v2592
        %v3730 = vpack.c.bf16 %v2598, %v2594
        %v3731 = vpack.c.bf16 %v2380, %v2376
        %v3732 = vpack.c.bf16 %v2382, %v2378
        %v3733 = vpack.c.bf16 %v2606, %v2602
        %v3734 = vpack.c.bf16 %v2608, %v2604
        %v3739 = vcombine.low %v3615, %v3617
        %v3740 = vcombine.high %v3615, %v3617
        %v3741 = vcombine.low %v3697, %v3699
        %v3742 = vcombine.high %v3697, %v3699
        %v3744 = vunpack.c.l.s4 1966171168
        %v3745 = vunpack.c.0.s8 %v3744
        %v3746 = vlaneseq
        %v3747 = vshrl.u32 %v3746, 7
        %v3748 = vsub.s32 %v3745, %v3747
        %v3749 = vrot.slane %v3739, %v3748
        %v3751 = vunpack.c.l.s4 1966171168
        %v3752 = vunpack.c.0.s8 %v3751
        %v3753 = vlaneseq
        %v3754 = vshrl.u32 %v3753, 7
        %v3755 = vsub.s32 %v3752, %v3754
        %v3756 = vrot.slane %v3740, %v3755
        %v3758 = vunpack.c.l.s4 1966171168
        %v3759 = vunpack.c.0.s8 %v3758
        %v3760 = vlaneseq
        %v3761 = vshrl.u32 %v3760, 7
        %v3762 = vsub.s32 %v3759, %v3761
        %v3763 = vrot.slane %v3741, %v3762
        %v3765 = vunpack.c.l.s4 1966171168
        %v3766 = vunpack.c.0.s8 %v3765
        %v3767 = vlaneseq
        %v3768 = vshrl.u32 %v3767, 7
        %v3769 = vsub.s32 %v3766, %v3768
        %v3770 = vrot.slane %v3742, %v3769
        %v3771 = vcombine.low %v3749, %v3763
        %v3772 = vcombine.high %v3749, %v3763
        %v3773 = vcombine.low %v3756, %v3770
        %v3774 = vcombine.high %v3756, %v3770
        %v3776 = vunpack.c.l.s4 1966171168
        %v3777 = vunpack.c.0.s8 %v3776
        %v3778 = vlaneseq
        %v3779 = vshrl.u32 %v3778, 7
        %v3780 = vsub.s32 %v3777, %v3779
        %v3781 = vrot.slane %v3771, %v3780
        %v3783 = vunpack.c.l.s4 1966171168
        %v3784 = vunpack.c.0.s8 %v3783
        %v3785 = vlaneseq
        %v3786 = vshrl.u32 %v3785, 7
        %v3787 = vsub.s32 %v3784, %v3786
        %v3788 = vrot.slane %v3773, %v3787
        %v3790 = vunpack.c.l.s4 1966171168
        %v3791 = vunpack.c.0.s8 %v3790
        %v3792 = vlaneseq
        %v3793 = vshrl.u32 %v3792, 7
        %v3794 = vsub.s32 %v3791, %v3793
        %v3795 = vrot.slane %v3772, %v3794
        %v3797 = vunpack.c.l.s4 1966171168
        %v3798 = vunpack.c.0.s8 %v3797
        %v3799 = vlaneseq
        %v3800 = vshrl.u32 %v3799, 7
        %v3801 = vsub.s32 %v3798, %v3800
        %v3802 = vrot.slane %v3774, %v3801
        %v3803 = vcombine.high %v3781, %v3781
        %v3804 = vcombine.high %v3788, %v3788
        %v3805 = vcombine.high %v3795, %v3795
        %v3806 = vcombine.high %v3802, %v3802
        %v3807 = vlaneseq
        %v3808 = vshrl.u32 %v3807, 7
        %v3809 = vsub.s32 0, %v3808
        %v3810 = vrot.slane %v3781, %v3809
        %v3811 = vlaneseq
        %v3812 = vshrl.u32 %v3811, 7
        %v3813 = vsub.s32 1, %v3812
        %v3814 = vrot.slane %v3781, %v3813
        %v3815 = vlaneseq
        %v3816 = vshrl.u32 %v3815, 7
        %v3817 = vsub.s32 2, %v3816
        %v3818 = vrot.slane %v3781, %v3817
        %v3819 = vlaneseq
        %v3820 = vshrl.u32 %v3819, 7
        %v3821 = vsub.s32 3, %v3820
        %v3822 = vrot.slane %v3781, %v3821
        %v3823 = vlaneseq
        %v3824 = vshrl.u32 %v3823, 7
        %v3825 = vsub.s32 0, %v3824
        %v3826 = vrot.slane %v3795, %v3825
        %v3827 = vlaneseq
        %v3828 = vshrl.u32 %v3827, 7
        %v3829 = vsub.s32 1, %v3828
        %v3830 = vrot.slane %v3795, %v3829
        %v3831 = vlaneseq
        %v3832 = vshrl.u32 %v3831, 7
        %v3833 = vsub.s32 2, %v3832
        %v3834 = vrot.slane %v3795, %v3833
        %v3835 = vlaneseq
        %v3836 = vshrl.u32 %v3835, 7
        %v3837 = vsub.s32 3, %v3836
        %v3838 = vrot.slane %v3795, %v3837
        %v3839 = vlaneseq
        %v3840 = vshrl.u32 %v3839, 7
        %v3841 = vsub.s32 0, %v3840
        %v3842 = vrot.slane %v3803, %v3841
        %v3843 = vlaneseq
        %v3844 = vshrl.u32 %v3843, 7
        %v3845 = vsub.s32 1, %v3844
        %v3846 = vrot.slane %v3803, %v3845
        %v3847 = vlaneseq
        %v3848 = vshrl.u32 %v3847, 7
        %v3849 = vsub.s32 2, %v3848
        %v3850 = vrot.slane %v3803, %v3849
        %v3851 = vlaneseq
        %v3852 = vshrl.u32 %v3851, 7
        %v3853 = vsub.s32 3, %v3852
        %v3854 = vrot.slane %v3803, %v3853
        %v3855 = vlaneseq
        %v3856 = vshrl.u32 %v3855, 7
        %v3857 = vsub.s32 0, %v3856
        %v3858 = vrot.slane %v3805, %v3857
        %v3859 = vlaneseq
        %v3860 = vshrl.u32 %v3859, 7
        %v3861 = vsub.s32 1, %v3860
        %v3862 = vrot.slane %v3805, %v3861
        %v3863 = vlaneseq
        %v3864 = vshrl.u32 %v3863, 7
        %v3865 = vsub.s32 2, %v3864
        %v3866 = vrot.slane %v3805, %v3865
        %v3867 = vlaneseq
        %v3868 = vshrl.u32 %v3867, 7
        %v3869 = vsub.s32 3, %v3868
        %v3870 = vrot.slane %v3805, %v3869
        %v3871 = vlaneseq
        %v3872 = vshrl.u32 %v3871, 7
        %v3873 = vsub.s32 0, %v3872
        %v3874 = vrot.slane %v3788, %v3873
        %v3875 = vlaneseq
        %v3876 = vshrl.u32 %v3875, 7
        %v3877 = vsub.s32 1, %v3876
        %v3878 = vrot.slane %v3788, %v3877
        %v3879 = vlaneseq
        %v3880 = vshrl.u32 %v3879, 7
        %v3881 = vsub.s32 2, %v3880
        %v3882 = vrot.slane %v3788, %v3881
        %v3883 = vlaneseq
        %v3884 = vshrl.u32 %v3883, 7
        %v3885 = vsub.s32 3, %v3884
        %v3886 = vrot.slane %v3788, %v3885
        %v3887 = vlaneseq
        %v3888 = vshrl.u32 %v3887, 7
        %v3889 = vsub.s32 0, %v3888
        %v3890 = vrot.slane %v3802, %v3889
        %v3891 = vlaneseq
        %v3892 = vshrl.u32 %v3891, 7
        %v3893 = vsub.s32 1, %v3892
        %v3894 = vrot.slane %v3802, %v3893
        %v3895 = vlaneseq
        %v3896 = vshrl.u32 %v3895, 7
        %v3897 = vsub.s32 2, %v3896
        %v3898 = vrot.slane %v3802, %v3897
        %v3899 = vlaneseq
        %v3900 = vshrl.u32 %v3899, 7
        %v3901 = vsub.s32 3, %v3900
        %v3902 = vrot.slane %v3802, %v3901
        %v3903 = vlaneseq
        %v3904 = vshrl.u32 %v3903, 7
        %v3905 = vsub.s32 0, %v3904
        %v3906 = vrot.slane %v3804, %v3905
        %v3907 = vlaneseq
        %v3908 = vshrl.u32 %v3907, 7
        %v3909 = vsub.s32 1, %v3908
        %v3910 = vrot.slane %v3804, %v3909
        %v3911 = vlaneseq
        %v3912 = vshrl.u32 %v3911, 7
        %v3913 = vsub.s32 2, %v3912
        %v3914 = vrot.slane %v3804, %v3913
        %v3915 = vlaneseq
        %v3916 = vshrl.u32 %v3915, 7
        %v3917 = vsub.s32 3, %v3916
        %v3918 = vrot.slane %v3804, %v3917
        %v3919 = vlaneseq
        %v3920 = vshrl.u32 %v3919, 7
        %v3921 = vsub.s32 0, %v3920
        %v3922 = vrot.slane %v3806, %v3921
        %v3923 = vlaneseq
        %v3924 = vshrl.u32 %v3923, 7
        %v3925 = vsub.s32 1, %v3924
        %v3926 = vrot.slane %v3806, %v3925
        %v3927 = vlaneseq
        %v3928 = vshrl.u32 %v3927, 7
        %v3929 = vsub.s32 2, %v3928
        %v3930 = vrot.slane %v3806, %v3929
        %v3931 = vlaneseq
        %v3932 = vshrl.u32 %v3931, 7
        %v3933 = vsub.s32 3, %v3932
        %v3934 = vrot.slane %v3806, %v3933
        %v3967 = vpack.c.bf16 %v3810, %v3810
        %v3968 = vpack.c.bf16 %v3814, %v3814
        %v3969 = vpack.c.bf16 %v3818, %v3818
        %v3970 = vpack.c.bf16 %v3822, %v3822
        %v3971 = vpack.c.bf16 %v3826, %v3826
        %v3972 = vpack.c.bf16 %v3830, %v3830
        %v3973 = vpack.c.bf16 %v3834, %v3834
        %v3974 = vpack.c.bf16 %v3838, %v3838
        %v3975 = vpack.c.bf16 %v3842, %v3842
        %v3976 = vpack.c.bf16 %v3846, %v3846
        %v3977 = vpack.c.bf16 %v3850, %v3850
        %v3978 = vpack.c.bf16 %v3854, %v3854
        %v3979 = vpack.c.bf16 %v3858, %v3858
        %v3980 = vpack.c.bf16 %v3862, %v3862
        %v3981 = vpack.c.bf16 %v3866, %v3866
        %v3982 = vpack.c.bf16 %v3870, %v3870
        %v3983 = vpack.c.bf16 %v3874, %v3874
        %v3984 = vpack.c.bf16 %v3878, %v3878
        %v3985 = vpack.c.bf16 %v3882, %v3882
        %v3986 = vpack.c.bf16 %v3886, %v3886
        %v3987 = vpack.c.bf16 %v3890, %v3890
        %v3988 = vpack.c.bf16 %v3894, %v3894
        %v3989 = vpack.c.bf16 %v3898, %v3898
        %v3990 = vpack.c.bf16 %v3902, %v3902
        %v3991 = vpack.c.bf16 %v3906, %v3906
        %v3992 = vpack.c.bf16 %v3910, %v3910
        %v3993 = vpack.c.bf16 %v3914, %v3914
        %v3994 = vpack.c.bf16 %v3918, %v3918
        %v3995 = vpack.c.bf16 %v3922, %v3922
        %v3996 = vpack.c.bf16 %v3926, %v3926
        %v3997 = vpack.c.bf16 %v3930, %v3930
        %v3998 = vpack.c.bf16 %v3934, %v3934
        %v4000 = vpack.i.b16 %v3967, %v3967
        %v4002 = vlaneseq
        %v4003 = vshrl.u32 %v4002, 7
        %v4004 = vsub.s32 0, %v4003
        %v4005 = vrot.slane %v4000, %v4004
        %v4007 = vpack.i.b16 %v3968, %v3968
        %v4009 = vlaneseq
        %v4010 = vshrl.u32 %v4009, 7
        %v4011 = vsub.s32 0, %v4010
        %v4012 = vrot.slane %v4007, %v4011
        %v4014 = vpack.i.b16 %v3969, %v3969
        %v4016 = vlaneseq
        %v4017 = vshrl.u32 %v4016, 7
        %v4018 = vsub.s32 0, %v4017
        %v4019 = vrot.slane %v4014, %v4018
        %v4021 = vpack.i.b16 %v3970, %v3970
        %v4023 = vlaneseq
        %v4024 = vshrl.u32 %v4023, 7
        %v4025 = vsub.s32 0, %v4024
        %v4026 = vrot.slane %v4021, %v4025
        %v4028 = vpack.i.b16 %v3971, %v3971
        %v4030 = vlaneseq
        %v4031 = vshrl.u32 %v4030, 7
        %v4032 = vsub.s32 0, %v4031
        %v4033 = vrot.slane %v4028, %v4032
        %v4035 = vpack.i.b16 %v3972, %v3972
        %v4037 = vlaneseq
        %v4038 = vshrl.u32 %v4037, 7
        %v4039 = vsub.s32 0, %v4038
        %v4040 = vrot.slane %v4035, %v4039
        %v4042 = vpack.i.b16 %v3973, %v3973
        %v4044 = vlaneseq
        %v4045 = vshrl.u32 %v4044, 7
        %v4046 = vsub.s32 0, %v4045
        %v4047 = vrot.slane %v4042, %v4046
        %v4049 = vpack.i.b16 %v3974, %v3974
        %v4051 = vlaneseq
        %v4052 = vshrl.u32 %v4051, 7
        %v4053 = vsub.s32 0, %v4052
        %v4054 = vrot.slane %v4049, %v4053
        %v4056 = vpack.i.b16 %v3975, %v3975
        %v4058 = vlaneseq
        %v4059 = vshrl.u32 %v4058, 7
        %v4060 = vsub.s32 0, %v4059
        %v4061 = vrot.slane %v4056, %v4060
        %v4063 = vpack.i.b16 %v3976, %v3976
        %v4065 = vlaneseq
        %v4066 = vshrl.u32 %v4065, 7
        %v4067 = vsub.s32 0, %v4066
        %v4068 = vrot.slane %v4063, %v4067
        %v4070 = vpack.i.b16 %v3977, %v3977
        %v4072 = vlaneseq
        %v4073 = vshrl.u32 %v4072, 7
        %v4074 = vsub.s32 0, %v4073
        %v4075 = vrot.slane %v4070, %v4074
        %v4077 = vpack.i.b16 %v3978, %v3978
        %v4079 = vlaneseq
        %v4080 = vshrl.u32 %v4079, 7
        %v4081 = vsub.s32 0, %v4080
        %v4082 = vrot.slane %v4077, %v4081
        %v4084 = vpack.i.b16 %v3979, %v3979
        %v4086 = vlaneseq
        %v4087 = vshrl.u32 %v4086, 7
        %v4088 = vsub.s32 0, %v4087
        %v4089 = vrot.slane %v4084, %v4088
        %v4091 = vpack.i.b16 %v3980, %v3980
        %v4093 = vlaneseq
        %v4094 = vshrl.u32 %v4093, 7
        %v4095 = vsub.s32 0, %v4094
        %v4096 = vrot.slane %v4091, %v4095
        %v4098 = vpack.i.b16 %v3981, %v3981
        %v4100 = vlaneseq
        %v4101 = vshrl.u32 %v4100, 7
        %v4102 = vsub.s32 0, %v4101
        %v4103 = vrot.slane %v4098, %v4102
        %v4105 = vpack.i.b16 %v3982, %v3982
        %v4107 = vlaneseq
        %v4108 = vshrl.u32 %v4107, 7
        %v4109 = vsub.s32 0, %v4108
        %v4110 = vrot.slane %v4105, %v4109
        %v4112 = vpack.i.b16 %v3983, %v3983
        %v4114 = vlaneseq
        %v4115 = vshrl.u32 %v4114, 7
        %v4116 = vsub.s32 0, %v4115
        %v4117 = vrot.slane %v4112, %v4116
        %v4119 = vpack.i.b16 %v3984, %v3984
        %v4121 = vlaneseq
        %v4122 = vshrl.u32 %v4121, 7
        %v4123 = vsub.s32 0, %v4122
        %v4124 = vrot.slane %v4119, %v4123
        %v4126 = vpack.i.b16 %v3985, %v3985
        %v4128 = vlaneseq
        %v4129 = vshrl.u32 %v4128, 7
        %v4130 = vsub.s32 0, %v4129
        %v4131 = vrot.slane %v4126, %v4130
        %v4133 = vpack.i.b16 %v3986, %v3986
        %v4135 = vlaneseq
        %v4136 = vshrl.u32 %v4135, 7
        %v4137 = vsub.s32 0, %v4136
        %v4138 = vrot.slane %v4133, %v4137
        %v4140 = vpack.i.b16 %v3987, %v3987
        %v4142 = vlaneseq
        %v4143 = vshrl.u32 %v4142, 7
        %v4144 = vsub.s32 0, %v4143
        %v4145 = vrot.slane %v4140, %v4144
        %v4147 = vpack.i.b16 %v3988, %v3988
        %v4149 = vlaneseq
        %v4150 = vshrl.u32 %v4149, 7
        %v4151 = vsub.s32 0, %v4150
        %v4152 = vrot.slane %v4147, %v4151
        %v4154 = vpack.i.b16 %v3989, %v3989
        %v4156 = vlaneseq
        %v4157 = vshrl.u32 %v4156, 7
        %v4158 = vsub.s32 0, %v4157
        %v4159 = vrot.slane %v4154, %v4158
        %v4161 = vpack.i.b16 %v3990, %v3990
        %v4163 = vlaneseq
        %v4164 = vshrl.u32 %v4163, 7
        %v4165 = vsub.s32 0, %v4164
        %v4166 = vrot.slane %v4161, %v4165
        %v4168 = vpack.i.b16 %v3991, %v3991
        %v4170 = vlaneseq
        %v4171 = vshrl.u32 %v4170, 7
        %v4172 = vsub.s32 0, %v4171
        %v4173 = vrot.slane %v4168, %v4172
        %v4175 = vpack.i.b16 %v3992, %v3992
        %v4177 = vlaneseq
        %v4178 = vshrl.u32 %v4177, 7
        %v4179 = vsub.s32 0, %v4178
        %v4180 = vrot.slane %v4175, %v4179
        %v4182 = vpack.i.b16 %v3993, %v3993
        %v4184 = vlaneseq
        %v4185 = vshrl.u32 %v4184, 7
        %v4186 = vsub.s32 0, %v4185
        %v4187 = vrot.slane %v4182, %v4186
        %v4189 = vpack.i.b16 %v3994, %v3994
        %v4191 = vlaneseq
        %v4192 = vshrl.u32 %v4191, 7
        %v4193 = vsub.s32 0, %v4192
        %v4194 = vrot.slane %v4189, %v4193
        %v4196 = vpack.i.b16 %v3995, %v3995
        %v4198 = vlaneseq
        %v4199 = vshrl.u32 %v4198, 7
        %v4200 = vsub.s32 0, %v4199
        %v4201 = vrot.slane %v4196, %v4200
        %v4203 = vpack.i.b16 %v3996, %v3996
        %v4205 = vlaneseq
        %v4206 = vshrl.u32 %v4205, 7
        %v4207 = vsub.s32 0, %v4206
        %v4208 = vrot.slane %v4203, %v4207
        %v4210 = vpack.i.b16 %v3997, %v3997
        %v4212 = vlaneseq
        %v4213 = vshrl.u32 %v4212, 7
        %v4214 = vsub.s32 0, %v4213
        %v4215 = vrot.slane %v4210, %v4214
        %v4217 = vpack.i.b16 %v3998, %v3998
        %v4219 = vlaneseq
        %v4220 = vshrl.u32 %v4219, 7
        %v4221 = vsub.s32 0, %v4220
        %v4222 = vrot.slane %v4217, %v4221
        %v4223 = vadd.bf16 %v3703, %v4005
        %v4224 = vadd.bf16 %v3704, %v4012
        %v4225 = vadd.bf16 %v3705, %v4019
        %v4226 = vadd.bf16 %v3706, %v4026
        %v4227 = vadd.bf16 %v3707, %v4033
        %v4228 = vadd.bf16 %v3708, %v4040
        %v4229 = vadd.bf16 %v3709, %v4047
        %v4230 = vadd.bf16 %v3710, %v4054
        %v4231 = vadd.bf16 %v3711, %v4061
        %v4232 = vadd.bf16 %v3712, %v4068
        %v4233 = vadd.bf16 %v3713, %v4075
        %v4234 = vadd.bf16 %v3714, %v4082
        %v4235 = vadd.bf16 %v3715, %v4089
        %v4236 = vadd.bf16 %v3716, %v4096
        %v4237 = vadd.bf16 %v3717, %v4103
        %v4238 = vadd.bf16 %v3718, %v4110
        %v4239 = vadd.bf16 %v3719, %v4117
        %v4240 = vadd.bf16 %v3720, %v4124
        %v4241 = vadd.bf16 %v3721, %v4131
        %v4242 = vadd.bf16 %v3722, %v4138
        %v4243 = vadd.bf16 %v3723, %v4145
        %v4244 = vadd.bf16 %v3724, %v4152
        %v4245 = vadd.bf16 %v3725, %v4159
        %v4246 = vadd.bf16 %v3726, %v4166
        %v4247 = vadd.bf16 %v3727, %v4173
        %v4248 = vadd.bf16 %v3728, %v4180
        %v4249 = vadd.bf16 %v3729, %v4187
        %v4250 = vadd.bf16 %v3730, %v4194
        %v4251 = vadd.bf16 %v3731, %v4201
        %v4252 = vadd.bf16 %v3732, %v4208
        %v4253 = vadd.bf16 %v3733, %v4215
        %v4254 = vadd.bf16 %v3734, %v4222
        %v4255 = vmul.bf16 %v4223, 1056980736
        %v4256 = vmul.bf16 %v4224, 1056980736
        %v4257 = vmul.bf16 %v4225, 1056980736
        %v4258 = vmul.bf16 %v4226, 1056980736
        %v4259 = vmul.bf16 %v4227, 1056980736
        %v4260 = vmul.bf16 %v4228, 1056980736
        %v4261 = vmul.bf16 %v4229, 1056980736
        %v4262 = vmul.bf16 %v4230, 1056980736
        %v4263 = vmul.bf16 %v4231, 1056980736
        %v4264 = vmul.bf16 %v4232, 1056980736
        %v4265 = vmul.bf16 %v4233, 1056980736
        %v4266 = vmul.bf16 %v4234, 1056980736
        %v4267 = vmul.bf16 %v4235, 1056980736
        %v4268 = vmul.bf16 %v4236, 1056980736
        %v4269 = vmul.bf16 %v4237, 1056980736
        %v4270 = vmul.bf16 %v4238, 1056980736
        %v4271 = vmul.bf16 %v4239, 1056980736
        %v4272 = vmul.bf16 %v4240, 1056980736
        %v4273 = vmul.bf16 %v4241, 1056980736
        %v4274 = vmul.bf16 %v4242, 1056980736
        %v4275 = vmul.bf16 %v4243, 1056980736
        %v4276 = vmul.bf16 %v4244, 1056980736
        %v4277 = vmul.bf16 %v4245, 1056980736
        %v4278 = vmul.bf16 %v4246, 1056980736
        %v4279 = vmul.bf16 %v4247, 1056980736
        %v4280 = vmul.bf16 %v4248, 1056980736
        %v4281 = vmul.bf16 %v4249, 1056980736
        %v4282 = vmul.bf16 %v4250, 1056980736
        %v4283 = vmul.bf16 %v4251, 1056980736
        %v4284 = vmul.bf16 %v4252, 1056980736
        %v4285 = vmul.bf16 %v4253, 1056980736
        %v4286 = vmul.bf16 %v4254, 1056980736
        %v4287 = vmul.bf16 %v4223, %v4223
        %v4288 = vmul.bf16 %v4224, %v4224
        %v4289 = vmul.bf16 %v4225, %v4225
        %v4290 = vmul.bf16 %v4226, %v4226
        %v4291 = vmul.bf16 %v4227, %v4227
        %v4292 = vmul.bf16 %v4228, %v4228
        %v4293 = vmul.bf16 %v4229, %v4229
        %v4294 = vmul.bf16 %v4230, %v4230
        %v4295 = vmul.bf16 %v4231, %v4231
        %v4296 = vmul.bf16 %v4232, %v4232
        %v4297 = vmul.bf16 %v4233, %v4233
        %v4298 = vmul.bf16 %v4234, %v4234
        %v4299 = vmul.bf16 %v4235, %v4235
        %v4300 = vmul.bf16 %v4236, %v4236
        %v4301 = vmul.bf16 %v4237, %v4237
        %v4302 = vmul.bf16 %v4238, %v4238
        %v4303 = vmul.bf16 %v4239, %v4239
        %v4304 = vmul.bf16 %v4240, %v4240
        %v4305 = vmul.bf16 %v4241, %v4241
        %v4306 = vmul.bf16 %v4242, %v4242
        %v4307 = vmul.bf16 %v4243, %v4243
        %v4308 = vmul.bf16 %v4244, %v4244
        %v4309 = vmul.bf16 %v4245, %v4245
        %v4310 = vmul.bf16 %v4246, %v4246
        %v4311 = vmul.bf16 %v4247, %v4247
        %v4312 = vmul.bf16 %v4248, %v4248
        %v4313 = vmul.bf16 %v4249, %v4249
        %v4314 = vmul.bf16 %v4250, %v4250
        %v4315 = vmul.bf16 %v4251, %v4251
        %v4316 = vmul.bf16 %v4252, %v4252
        %v4317 = vmul.bf16 %v4253, %v4253
        %v4318 = vmul.bf16 %v4254, %v4254
        %v4319 = vmul.bf16 %v4287, %v4223
        %v4320 = vmul.bf16 %v4288, %v4224
        %v4321 = vmul.bf16 %v4289, %v4225
        %v4322 = vmul.bf16 %v4290, %v4226
        %v4323 = vmul.bf16 %v4291, %v4227
        %v4324 = vmul.bf16 %v4292, %v4228
        %v4325 = vmul.bf16 %v4293, %v4229
        %v4326 = vmul.bf16 %v4294, %v4230
        %v4327 = vmul.bf16 %v4295, %v4231
        %v4328 = vmul.bf16 %v4296, %v4232
        %v4329 = vmul.bf16 %v4297, %v4233
        %v4330 = vmul.bf16 %v4298, %v4234
        %v4331 = vmul.bf16 %v4299, %v4235
        %v4332 = vmul.bf16 %v4300, %v4236
        %v4333 = vmul.bf16 %v4301, %v4237
        %v4334 = vmul.bf16 %v4302, %v4238
        %v4335 = vmul.bf16 %v4303, %v4239
        %v4336 = vmul.bf16 %v4304, %v4240
        %v4337 = vmul.bf16 %v4305, %v4241
        %v4338 = vmul.bf16 %v4306, %v4242
        %v4339 = vmul.bf16 %v4307, %v4243
        %v4340 = vmul.bf16 %v4308, %v4244
        %v4341 = vmul.bf16 %v4309, %v4245
        %v4342 = vmul.bf16 %v4310, %v4246
        %v4343 = vmul.bf16 %v4311, %v4247
        %v4344 = vmul.bf16 %v4312, %v4248
        %v4345 = vmul.bf16 %v4313, %v4249
        %v4346 = vmul.bf16 %v4314, %v4250
        %v4347 = vmul.bf16 %v4315, %v4251
        %v4348 = vmul.bf16 %v4316, %v4252
        %v4349 = vmul.bf16 %v4317, %v4253
        %v4350 = vmul.bf16 %v4318, %v4254
        %v4351 = vmul.bf16 %v4319, 1027030327
        %v4352 = vmul.bf16 %v4320, 1027030327
        %v4353 = vmul.bf16 %v4321, 1027030327
        %v4354 = vmul.bf16 %v4322, 1027030327
        %v4355 = vmul.bf16 %v4323, 1027030327
        %v4356 = vmul.bf16 %v4324, 1027030327
        %v4357 = vmul.bf16 %v4325, 1027030327
        %v4358 = vmul.bf16 %v4326, 1027030327
        %v4359 = vmul.bf16 %v4327, 1027030327
        %v4360 = vmul.bf16 %v4328, 1027030327
        %v4361 = vmul.bf16 %v4329, 1027030327
        %v4362 = vmul.bf16 %v4330, 1027030327
        %v4363 = vmul.bf16 %v4331, 1027030327
        %v4364 = vmul.bf16 %v4332, 1027030327
        %v4365 = vmul.bf16 %v4333, 1027030327
        %v4366 = vmul.bf16 %v4334, 1027030327
        %v4367 = vmul.bf16 %v4335, 1027030327
        %v4368 = vmul.bf16 %v4336, 1027030327
        %v4369 = vmul.bf16 %v4337, 1027030327
        %v4370 = vmul.bf16 %v4338, 1027030327
        %v4371 = vmul.bf16 %v4339, 1027030327
        %v4372 = vmul.bf16 %v4340, 1027030327
        %v4373 = vmul.bf16 %v4341, 1027030327
        %v4374 = vmul.bf16 %v4342, 1027030327
        %v4375 = vmul.bf16 %v4343, 1027030327
        %v4376 = vmul.bf16 %v4344, 1027030327
        %v4377 = vmul.bf16 %v4345, 1027030327
        %v4378 = vmul.bf16 %v4346, 1027030327
        %v4379 = vmul.bf16 %v4347, 1027030327
        %v4380 = vmul.bf16 %v4348, 1027030327
        %v4381 = vmul.bf16 %v4349, 1027030327
        %v4382 = vmul.bf16 %v4350, 1027030327
        %v4383 = vadd.bf16 %v4223, %v4351
        %v4384 = vadd.bf16 %v4224, %v4352
        %v4385 = vadd.bf16 %v4225, %v4353
        %v4386 = vadd.bf16 %v4226, %v4354
        %v4387 = vadd.bf16 %v4227, %v4355
        %v4388 = vadd.bf16 %v4228, %v4356
        %v4389 = vadd.bf16 %v4229, %v4357
        %v4390 = vadd.bf16 %v4230, %v4358
        %v4391 = vadd.bf16 %v4231, %v4359
        %v4392 = vadd.bf16 %v4232, %v4360
        %v4393 = vadd.bf16 %v4233, %v4361
        %v4394 = vadd.bf16 %v4234, %v4362
        %v4395 = vadd.bf16 %v4235, %v4363
        %v4396 = vadd.bf16 %v4236, %v4364
        %v4397 = vadd.bf16 %v4237, %v4365
        %v4398 = vadd.bf16 %v4238, %v4366
        %v4399 = vadd.bf16 %v4239, %v4367
        %v4400 = vadd.bf16 %v4240, %v4368
        %v4401 = vadd.bf16 %v4241, %v4369
        %v4402 = vadd.bf16 %v4242, %v4370
        %v4403 = vadd.bf16 %v4243, %v4371
        %v4404 = vadd.bf16 %v4244, %v4372
        %v4405 = vadd.bf16 %v4245, %v4373
        %v4406 = vadd.bf16 %v4246, %v4374
        %v4407 = vadd.bf16 %v4247, %v4375
        %v4408 = vadd.bf16 %v4248, %v4376
        %v4409 = vadd.bf16 %v4249, %v4377
        %v4410 = vadd.bf16 %v4250, %v4378
        %v4411 = vadd.bf16 %v4251, %v4379
        %v4412 = vadd.bf16 %v4252, %v4380
        %v4413 = vadd.bf16 %v4253, %v4381
        %v4414 = vadd.bf16 %v4254, %v4382
        %v4415 = vmul.bf16 %v4383, 1061961548
        %v4416 = vmul.bf16 %v4384, 1061961548
        %v4417 = vmul.bf16 %v4385, 1061961548
        %v4418 = vmul.bf16 %v4386, 1061961548
        %v4419 = vmul.bf16 %v4387, 1061961548
        %v4420 = vmul.bf16 %v4388, 1061961548
        %v4421 = vmul.bf16 %v4389, 1061961548
        %v4422 = vmul.bf16 %v4390, 1061961548
        %v4423 = vmul.bf16 %v4391, 1061961548
        %v4424 = vmul.bf16 %v4392, 1061961548
        %v4425 = vmul.bf16 %v4393, 1061961548
        %v4426 = vmul.bf16 %v4394, 1061961548
        %v4427 = vmul.bf16 %v4395, 1061961548
        %v4428 = vmul.bf16 %v4396, 1061961548
        %v4429 = vmul.bf16 %v4397, 1061961548
        %v4430 = vmul.bf16 %v4398, 1061961548
        %v4431 = vmul.bf16 %v4399, 1061961548
        %v4432 = vmul.bf16 %v4400, 1061961548
        %v4433 = vmul.bf16 %v4401, 1061961548
        %v4434 = vmul.bf16 %v4402, 1061961548
        %v4435 = vmul.bf16 %v4403, 1061961548
        %v4436 = vmul.bf16 %v4404, 1061961548
        %v4437 = vmul.bf16 %v4405, 1061961548
        %v4438 = vmul.bf16 %v4406, 1061961548
        %v4439 = vmul.bf16 %v4407, 1061961548
        %v4440 = vmul.bf16 %v4408, 1061961548
        %v4441 = vmul.bf16 %v4409, 1061961548
        %v4442 = vmul.bf16 %v4410, 1061961548
        %v4443 = vmul.bf16 %v4411, 1061961548
        %v4444 = vmul.bf16 %v4412, 1061961548
        %v4445 = vmul.bf16 %v4413, 1061961548
        %v4446 = vmul.bf16 %v4414, 1061961548
        %v4447 = vtanh.bf16.pop %v4415
        %v4448 = vtanh.bf16.pop %v4416
        %v4449 = vtanh.bf16.pop %v4417
        %v4450 = vtanh.bf16.pop %v4418
        %v4451 = vtanh.bf16.pop %v4419
        %v4452 = vtanh.bf16.pop %v4420
        %v4453 = vtanh.bf16.pop %v4421
        %v4454 = vtanh.bf16.pop %v4422
        %v4455 = vtanh.bf16.pop %v4423
        %v4456 = vtanh.bf16.pop %v4424
        %v4457 = vtanh.bf16.pop %v4425
        %v4458 = vtanh.bf16.pop %v4426
        %v4459 = vtanh.bf16.pop %v4427
        %v4460 = vtanh.bf16.pop %v4428
        %v4461 = vtanh.bf16.pop %v4429
        %v4462 = vtanh.bf16.pop %v4430
        %v4463 = vtanh.bf16.pop %v4431
        %v4464 = vtanh.bf16.pop %v4432
        %v4465 = vtanh.bf16.pop %v4433
        %v4466 = vtanh.bf16.pop %v4434
        %v4467 = vtanh.bf16.pop %v4435
        %v4468 = vtanh.bf16.pop %v4436
        %v4469 = vtanh.bf16.pop %v4437
        %v4470 = vtanh.bf16.pop %v4438
        %v4471 = vtanh.bf16.pop %v4439
        %v4472 = vtanh.bf16.pop %v4440
        %v4473 = vtanh.bf16.pop %v4441
        %v4474 = vtanh.bf16.pop %v4442
        %v4475 = vtanh.bf16.pop %v4443
        %v4476 = vtanh.bf16.pop %v4444
        %v4477 = vtanh.bf16.pop %v4445
        %v4478 = vtanh.bf16.pop %v4446
        %v4479 = vadd.bf16 %v4447, 1065369472
        %v4480 = vadd.bf16 %v4448, 1065369472
        %v4481 = vadd.bf16 %v4449, 1065369472
        %v4482 = vadd.bf16 %v4450, 1065369472
        %v4483 = vadd.bf16 %v4451, 1065369472
        %v4484 = vadd.bf16 %v4452, 1065369472
        %v4485 = vadd.bf16 %v4453, 1065369472
        %v4486 = vadd.bf16 %v4454, 1065369472
        %v4487 = vadd.bf16 %v4455, 1065369472
        %v4488 = vadd.bf16 %v4456, 1065369472
        %v4489 = vadd.bf16 %v4457, 1065369472
        %v4490 = vadd.bf16 %v4458, 1065369472
        %v4491 = vadd.bf16 %v4459, 1065369472
        %v4492 = vadd.bf16 %v4460, 1065369472
        %v4493 = vadd.bf16 %v4461, 1065369472
        %v4494 = vadd.bf16 %v4462, 1065369472
        %v4495 = vadd.bf16 %v4463, 1065369472
        %v4496 = vadd.bf16 %v4464, 1065369472
        %v4497 = vadd.bf16 %v4465, 1065369472
        %v4498 = vadd.bf16 %v4466, 1065369472
        %v4499 = vadd.bf16 %v4467, 1065369472
        %v4500 = vadd.bf16 %v4468, 1065369472
        %v4501 = vadd.bf16 %v4469, 1065369472
        %v4502 = vadd.bf16 %v4470, 1065369472
        %v4503 = vadd.bf16 %v4471, 1065369472
        %v4504 = vadd.bf16 %v4472, 1065369472
        %v4505 = vadd.bf16 %v4473, 1065369472
        %v4506 = vadd.bf16 %v4474, 1065369472
        %v4507 = vadd.bf16 %v4475, 1065369472
        %v4508 = vadd.bf16 %v4476, 1065369472
        %v4509 = vadd.bf16 %v4477, 1065369472
        %v4510 = vadd.bf16 %v4478, 1065369472
        %v4511 = vmul.bf16 %v4255, %v4479
        %v4512 = vmul.bf16 %v4256, %v4480
        %v4513 = vmul.bf16 %v4257, %v4481
        %v4514 = vmul.bf16 %v4258, %v4482
        %v4515 = vmul.bf16 %v4259, %v4483
        %v4516 = vmul.bf16 %v4260, %v4484
        %v4517 = vmul.bf16 %v4261, %v4485
        %v4518 = vmul.bf16 %v4262, %v4486
        %v4519 = vmul.bf16 %v4263, %v4487
        %v4520 = vmul.bf16 %v4264, %v4488
        %v4521 = vmul.bf16 %v4265, %v4489
        %v4522 = vmul.bf16 %v4266, %v4490
        %v4523 = vmul.bf16 %v4267, %v4491
        %v4524 = vmul.bf16 %v4268, %v4492
        %v4525 = vmul.bf16 %v4269, %v4493
        %v4526 = vmul.bf16 %v4270, %v4494
        %v4527 = vmul.bf16 %v4271, %v4495
        %v4528 = vmul.bf16 %v4272, %v4496
        %v4529 = vmul.bf16 %v4273, %v4497
        %v4530 = vmul.bf16 %v4274, %v4498
        %v4531 = vmul.bf16 %v4275, %v4499
        %v4532 = vmul.bf16 %v4276, %v4500
        %v4533 = vmul.bf16 %v4277, %v4501
        %v4534 = vmul.bf16 %v4278, %v4502
        %v4535 = vmul.bf16 %v4279, %v4503
        %v4536 = vmul.bf16 %v4280, %v4504
        %v4537 = vmul.bf16 %v4281, %v4505
        %v4538 = vmul.bf16 %v4282, %v4506
        %v4539 = vmul.bf16 %v4283, %v4507
        %v4540 = vmul.bf16 %v4284, %v4508
        %v4541 = vmul.bf16 %v4285, %v4509
        %v4542 = vmul.bf16 %v4286, %v4510
        %v4543 = vld [vmem:[#allocation8] sm:$0xf]
        %v4544 = vld [vmem:[#allocation8 + $0x4] sm:$0xf]
        %v4545 = vld [vmem:[#allocation8 + $0x8] sm:$0xf]
        %v4546 = vld [vmem:[#allocation8 + $0xc] sm:$0xf]
        %v4547 = vld [vmem:[#allocation8 + $0x10] sm:$0xf]
        %v4548 = vld [vmem:[#allocation8 + $0x14] sm:$0xf]
        %v4549 = vld [vmem:[#allocation8 + $0x18] sm:$0xf]
        %v4550 = vld [vmem:[#allocation8 + $0x1c] sm:$0xf]
        %v4551 = vld [vmem:[#allocation8 + $0x20] sm:$0xf]
        %v4552 = vld [vmem:[#allocation8 + $0x24] sm:$0xf]
        %v4553 = vld [vmem:[#allocation8 + $0x28] sm:$0xf]
        %v4554 = vld [vmem:[#allocation8 + $0x2c] sm:$0xf]
        %v4555 = vld [vmem:[#allocation8 + $0x30] sm:$0xf]
        %v4556 = vld [vmem:[#allocation8 + $0x34] sm:$0xf]
        %v4557 = vld [vmem:[#allocation8 + $0x38] sm:$0xf]
        %v4558 = vld [vmem:[#allocation8 + $0x3c] sm:$0xf]
        %v4559 = vld [vmem:[#allocation8 + $0x40] sm:$0xf]
        %v4560 = vld [vmem:[#allocation8 + $0x44] sm:$0xf]
        %v4561 = vld [vmem:[#allocation8 + $0x48] sm:$0xf]
        %v4562 = vld [vmem:[#allocation8 + $0x4c] sm:$0xf]
        %v4563 = vld [vmem:[#allocation8 + $0x50] sm:$0xf]
        %v4564 = vld [vmem:[#allocation8 + $0x54] sm:$0xf]
        %v4565 = vld [vmem:[#allocation8 + $0x58] sm:$0xf]
        %v4566 = vld [vmem:[#allocation8 + $0x5c] sm:$0xf]
        %v4567 = vld [vmem:[#allocation8 + $0x60] sm:$0xf]
        %v4568 = vld [vmem:[#allocation8 + $0x64] sm:$0xf]
        %v4569 = vld [vmem:[#allocation8 + $0x68] sm:$0xf]
        %v4570 = vld [vmem:[#allocation8 + $0x6c] sm:$0xf]
        %v4571 = vld [vmem:[#allocation8 + $0x70] sm:$0xf]
        %v4572 = vld [vmem:[#allocation8 + $0x74] sm:$0xf]
        %v4573 = vld [vmem:[#allocation8 + $0x78] sm:$0xf]
        %v4574 = vld [vmem:[#allocation8 + $0x7c] sm:$0xf]
        %v4575 = vld [vmem:[#allocation8 + $0x80] sm:$0xf]
        %v4576 = vld [vmem:[#allocation8 + $0x84] sm:$0xf]
        %v4577 = vld [vmem:[#allocation8 + $0x88] sm:$0xf]
        %v4578 = vld [vmem:[#allocation8 + $0x8c] sm:$0xf]
        %v4579 = vld [vmem:[#allocation8 + $0x90] sm:$0xf]
        %v4580 = vld [vmem:[#allocation8 + $0x94] sm:$0xf]
        %v4581 = vld [vmem:[#allocation8 + $0x98] sm:$0xf]
        %v4582 = vld [vmem:[#allocation8 + $0x9c] sm:$0xf]
        %v4583 = vld [vmem:[#allocation8 + $0xa0] sm:$0xf]
        %v4584 = vld [vmem:[#allocation8 + $0xa4] sm:$0xf]
        %v4585 = vld [vmem:[#allocation8 + $0xa8] sm:$0xf]
        %v4586 = vld [vmem:[#allocation8 + $0xac] sm:$0xf]
        %v4587 = vld [vmem:[#allocation8 + $0xb0] sm:$0xf]
        %v4588 = vld [vmem:[#allocation8 + $0xb4] sm:$0xf]
        %v4589 = vld [vmem:[#allocation8 + $0xb8] sm:$0xf]
        %v4590 = vld [vmem:[#allocation8 + $0xbc] sm:$0xf]
        %v4591 = vld [vmem:[#allocation8 + $0xc0] sm:$0xf]
        %v4592 = vld [vmem:[#allocation8 + $0xc4] sm:$0xf]
        %v4593 = vld [vmem:[#allocation8 + $0xc8] sm:$0xf]
        %v4594 = vld [vmem:[#allocation8 + $0xcc] sm:$0xf]
        %v4595 = vld [vmem:[#allocation8 + $0xd0] sm:$0xf]
        %v4596 = vld [vmem:[#allocation8 + $0xd4] sm:$0xf]
        %v4597 = vld [vmem:[#allocation8 + $0xd8] sm:$0xf]
        %v4598 = vld [vmem:[#allocation8 + $0xdc] sm:$0xf]
        %v4599 = vld [vmem:[#allocation8 + $0xe0] sm:$0xf]
        %v4600 = vld [vmem:[#allocation8 + $0xe4] sm:$0xf]
        %v4601 = vld [vmem:[#allocation8 + $0xe8] sm:$0xf]
        %v4602 = vld [vmem:[#allocation8 + $0xec] sm:$0xf]
        %v4603 = vld [vmem:[#allocation8 + $0xf0] sm:$0xf]
        %v4604 = vld [vmem:[#allocation8 + $0xf4] sm:$0xf]
        %v4605 = vld [vmem:[#allocation8 + $0xf8] sm:$0xf]
        %v4606 = vld [vmem:[#allocation8 + $0xfc] sm:$0xf]
        %v4607 = vld [vmem:[%s9] sm:$0x1]
        %v4609 = vlaneseq
        %v4610 = vshrl.u32 %v4609, 7
        %v4611 = vsub.s32 0, %v4610
        %v4612 = vrot.slane %v4607, %v4611
        %v4678 = vunpack.c.l.b16 %v4543
        %v4679 = vunpack.c.l.b16 %v4544
        %v4680 = vunpack.c.l.b16 %v4545
        %v4681 = vunpack.c.l.b16 %v4546
        %v4682 = vunpack.c.l.b16 %v4547
        %v4683 = vunpack.c.l.b16 %v4548
        %v4684 = vunpack.c.l.b16 %v4549
        %v4685 = vunpack.c.l.b16 %v4550
        %v4686 = vunpack.c.l.b16 %v4551
        %v4687 = vunpack.c.l.b16 %v4552
        %v4688 = vunpack.c.l.b16 %v4553
        %v4689 = vunpack.c.l.b16 %v4554
        %v4690 = vunpack.c.l.b16 %v4555
        %v4691 = vunpack.c.l.b16 %v4556
        %v4692 = vunpack.c.l.b16 %v4557
        %v4693 = vunpack.c.l.b16 %v4558
        %v4694 = vunpack.c.l.b16 %v4559
        %v4695 = vunpack.c.l.b16 %v4560
        %v4696 = vunpack.c.l.b16 %v4561
        %v4697 = vunpack.c.l.b16 %v4562
        %v4698 = vunpack.c.l.b16 %v4563
        %v4699 = vunpack.c.l.b16 %v4564
        %v4700 = vunpack.c.l.b16 %v4565
        %v4701 = vunpack.c.l.b16 %v4566
        %v4702 = vunpack.c.l.b16 %v4567
        %v4703 = vunpack.c.l.b16 %v4568
        %v4704 = vunpack.c.l.b16 %v4569
        %v4705 = vunpack.c.l.b16 %v4570
        %v4706 = vunpack.c.l.b16 %v4571
        %v4707 = vunpack.c.l.b16 %v4572
        %v4708 = vunpack.c.l.b16 %v4573
        %v4709 = vunpack.c.l.b16 %v4574
        %v4710 = vunpack.c.l.b16 %v4575
        %v4711 = vunpack.c.l.b16 %v4576
        %v4712 = vunpack.c.l.b16 %v4577
        %v4713 = vunpack.c.l.b16 %v4578
        %v4714 = vunpack.c.l.b16 %v4579
        %v4715 = vunpack.c.l.b16 %v4580
        %v4716 = vunpack.c.l.b16 %v4581
        %v4717 = vunpack.c.l.b16 %v4582
        %v4718 = vunpack.c.l.b16 %v4583
        %v4719 = vunpack.c.l.b16 %v4584
        %v4720 = vunpack.c.l.b16 %v4585
        %v4721 = vunpack.c.l.b16 %v4586
        %v4722 = vunpack.c.l.b16 %v4587
        %v4723 = vunpack.c.l.b16 %v4588
        %v4724 = vunpack.c.l.b16 %v4589
        %v4725 = vunpack.c.l.b16 %v4590
        %v4726 = vunpack.c.l.b16 %v4591
        %v4727 = vunpack.c.l.b16 %v4592
        %v4728 = vunpack.c.l.b16 %v4593
        %v4729 = vunpack.c.l.b16 %v4594
        %v4730 = vunpack.c.l.b16 %v4595
        %v4731 = vunpack.c.l.b16 %v4596
        %v4732 = vunpack.c.l.b16 %v4597
        %v4733 = vunpack.c.l.b16 %v4598
        %v4734 = vunpack.c.l.b16 %v4599
        %v4735 = vunpack.c.l.b16 %v4600
        %v4736 = vunpack.c.l.b16 %v4601
        %v4737 = vunpack.c.l.b16 %v4602
        %v4738 = vunpack.c.l.b16 %v4603
        %v4739 = vunpack.c.l.b16 %v4604
        %v4740 = vunpack.c.l.b16 %v4605
        %v4741 = vunpack.c.l.b16 %v4606
        %v4742 = vpack.c.b16 %v4679, %v4678
        %v4743 = vpack.c.b16 %v4681, %v4680
        %v4744 = vpack.c.b16 %v4683, %v4682
        %v4745 = vpack.c.b16 %v4685, %v4684
        %v4746 = vpack.c.b16 %v4687, %v4686
        %v4747 = vpack.c.b16 %v4689, %v4688
        %v4748 = vpack.c.b16 %v4691, %v4690
        %v4749 = vpack.c.b16 %v4693, %v4692
        %v4750 = vpack.c.b16 %v4695, %v4694
        %v4751 = vpack.c.b16 %v4697, %v4696
        %v4752 = vpack.c.b16 %v4699, %v4698
        %v4753 = vpack.c.b16 %v4701, %v4700
        %v4754 = vpack.c.b16 %v4703, %v4702
        %v4755 = vpack.c.b16 %v4705, %v4704
        %v4756 = vpack.c.b16 %v4707, %v4706
        %v4757 = vpack.c.b16 %v4709, %v4708
        %v4758 = vpack.c.b16 %v4711, %v4710
        %v4759 = vpack.c.b16 %v4713, %v4712
        %v4760 = vpack.c.b16 %v4715, %v4714
        %v4761 = vpack.c.b16 %v4717, %v4716
        %v4762 = vpack.c.b16 %v4719, %v4718
        %v4763 = vpack.c.b16 %v4721, %v4720
        %v4764 = vpack.c.b16 %v4723, %v4722
        %v4765 = vpack.c.b16 %v4725, %v4724
        %v4766 = vpack.c.b16 %v4727, %v4726
        %v4767 = vpack.c.b16 %v4729, %v4728
        %v4768 = vpack.c.b16 %v4731, %v4730
        %v4769 = vpack.c.b16 %v4733, %v4732
        %v4770 = vpack.c.b16 %v4735, %v4734
        %v4771 = vpack.c.b16 %v4737, %v4736
        %v4772 = vpack.c.b16 %v4739, %v4738
        %v4773 = vpack.c.b16 %v4741, %v4740
        %4806 = vmatprep.subr.bf16.mxu0 0
        %4807 = vmatpush1.bf16.msra.mxu0 %v4742
        %4808 = vmatprep.subr.bf16.mxu0 0
        %4809 = vmatpush1.bf16.msra.mxu0 %v4743
        %4810 = vmatprep.subr.bf16.mxu0 0
        %4811 = vmatpush1.bf16.msra.mxu0 %v4744
        %4812 = vmatprep.subr.bf16.mxu0 0
        %4813 = vmatpush1.bf16.msra.mxu0 %v4745
        %4814 = vmatprep.subr.bf16.mxu0 0
        %4815 = vmatpush1.bf16.msra.mxu0 %v4746
        %4816 = vmatprep.subr.bf16.mxu0 0
        %4817 = vmatpush1.bf16.msra.mxu0 %v4747
        %4818 = vmatprep.subr.bf16.mxu0 0
        %4819 = vmatpush1.bf16.msra.mxu0 %v4748
        %4820 = vmatprep.subr.bf16.mxu0 0
        %4821 = vmatpush1.bf16.msra.mxu0 %v4749
        %4822 = vmatprep.subr.bf16.mxu0 0
        %4823 = vmatpush1.bf16.msra.mxu0 %v4750
        %4824 = vmatprep.subr.bf16.mxu0 0
        %4825 = vmatpush1.bf16.msra.mxu0 %v4751
        %4826 = vmatprep.subr.bf16.mxu0 0
        %4827 = vmatpush1.bf16.msra.mxu0 %v4752
        %4828 = vmatprep.subr.bf16.mxu0 0
        %4829 = vmatpush1.bf16.msra.mxu0 %v4753
        %4830 = vmatprep.subr.bf16.mxu0 0
        %4831 = vmatpush1.bf16.msra.mxu0 %v4754
        %4832 = vmatprep.subr.bf16.mxu0 0
        %4833 = vmatpush1.bf16.msra.mxu0 %v4755
        %4834 = vmatprep.subr.bf16.mxu0 0
        %4835 = vmatpush1.bf16.msra.mxu0 %v4756
        %4836 = vmatprep.subr.bf16.mxu0 0
        %4837 = vmatpush1.bf16.msra.mxu0 %v4757
        %4838 = vmatprep.mubr.bf16.mxu0 %v4512
        %4839 = vmatmul.mubr.bf16.gmra.mrb[0].mxu0 %v4511
        %v4840 = vpop.f32.mrb[0].mxu0
        %v4841 = vadd.f32 %v4612, %v4840
        %v4842 = vpop.f32.mrb[0].mxu0
        %v4843 = vpop.f32.mrb[0].mxu0
        %v4844 = vadd.f32 %v4612, %v4843
        %v4845 = vpop.f32.mrb[0].mxu0
        %4846 = vmatprep.mubr.bf16.mxu0 %v4516
        %4847 = vmatmul.mubr.bf16.gmra.mrb[0].mxu0 %v4515
        %v4848 = vpop.f32.mrb[0].mxu0
        %v4849 = vadd.f32 %v4612, %v4848
        %v4850 = vpop.f32.mrb[0].mxu0
        %v4851 = vpop.f32.mrb[0].mxu0
        %v4852 = vadd.f32 %v4612, %v4851
        %v4853 = vpop.f32.mrb[0].mxu0
        %4854 = vmatprep.mubr.bf16.mxu0 %v4520
        %4855 = vmatmul.mubr.bf16.gmra.mrb[0].mxu0 %v4519
        %v4856 = vpop.f32.mrb[0].mxu0
        %v4857 = vadd.f32 %v4612, %v4856
        %v4858 = vpop.f32.mrb[0].mxu0
        %v4859 = vpop.f32.mrb[0].mxu0
        %v4860 = vadd.f32 %v4612, %v4859
        %v4861 = vpop.f32.mrb[0].mxu0
        %4862 = vmatprep.mubr.bf16.mxu0 %v4524
        %4863 = vmatmul.mubr.bf16.gmra.mrb[0].mxu0 %v4523
        %v4864 = vpop.f32.mrb[0].mxu0
        %v4865 = vadd.f32 %v4612, %v4864
        %v4866 = vpop.f32.mrb[0].mxu0
        %v4867 = vpop.f32.mrb[0].mxu0
        %v4868 = vadd.f32 %v4612, %v4867
        %v4869 = vpop.f32.mrb[0].mxu0
        %4870 = vmatprep.mubr.bf16.mxu0 %v4528
        %4871 = vmatmul.mubr.bf16.gmra.mrb[0].mxu0 %v4527
        %v4872 = vpop.f32.mrb[0].mxu0
        %v4873 = vadd.f32 %v4612, %v4872
        %v4874 = vpop.f32.mrb[0].mxu0
        %v4875 = vpop.f32.mrb[0].mxu0
        %v4876 = vadd.f32 %v4612, %v4875
        %v4877 = vpop.f32.mrb[0].mxu0
        %4878 = vmatprep.mubr.bf16.mxu0 %v4532
        %4879 = vmatmul.mubr.bf16.gmra.mrb[0].mxu0 %v4531
        %v4880 = vpop.f32.mrb[0].mxu0
        %v4881 = vadd.f32 %v4612, %v4880
        %v4882 = vpop.f32.mrb[0].mxu0
        %v4883 = vpop.f32.mrb[0].mxu0
        %v4884 = vadd.f32 %v4612, %v4883
        %v4885 = vpop.f32.mrb[0].mxu0
        %4886 = vmatprep.mubr.bf16.mxu0 %v4536
        %4887 = vmatmul.mubr.bf16.gmra.mrb[0].mxu0 %v4535
        %v4888 = vpop.f32.mrb[0].mxu0
        %v4889 = vadd.f32 %v4612, %v4888
        %v4890 = vpop.f32.mrb[0].mxu0
        %v4891 = vpop.f32.mrb[0].mxu0
        %v4892 = vadd.f32 %v4612, %v4891
        %v4893 = vpop.f32.mrb[0].mxu0
        %4894 = vmatprep.mubr.bf16.mxu0 %v4540
        %4895 = vmatmul.mubr.bf16.gmra.mrb[0].mxu0 %v4539
        %v4896 = vpop.f32.mrb[0].mxu0
        %v4897 = vadd.f32 %v4612, %v4896
        %v4898 = vpop.f32.mrb[0].mxu0
        %v4899 = vpop.f32.mrb[0].mxu0
        %v4900 = vadd.f32 %v4612, %v4899
        %v4901 = vpop.f32.mrb[0].mxu0
        %4902 = vdwg.mxu0
        %4903 = vmatprep.subr.bf16.mxu0 0
        %4904 = vmatpush1.bf16.msra.mxu0 %v4758
        %4905 = vmatprep.subr.bf16.mxu0 0
        %4906 = vmatpush1.bf16.msra.mxu0 %v4759
        %4907 = vmatprep.subr.bf16.mxu0 0
        %4908 = vmatpush1.bf16.msra.mxu0 %v4760
        %4909 = vmatprep.subr.bf16.mxu0 0
        %4910 = vmatpush1.bf16.msra.mxu0 %v4761
        %4911 = vmatprep.subr.bf16.mxu0 0
        %4912 = vmatpush1.bf16.msra.mxu0 %v4762
        %4913 = vmatprep.subr.bf16.mxu0 0
        %4914 = vmatpush1.bf16.msra.mxu0 %v4763
        %4915 = vmatprep.subr.bf16.mxu0 0
        %4916 = vmatpush1.bf16.msra.mxu0 %v4764
        %4917 = vmatprep.subr.bf16.mxu0 0
        %4918 = vmatpush1.bf16.msra.mxu0 %v4765
        %4919 = vmatprep.subr.bf16.mxu0 0
        %4920 = vmatpush1.bf16.msra.mxu0 %v4766
        %4921 = vmatprep.subr.bf16.mxu0 0
        %4922 = vmatpush1.bf16.msra.mxu0 %v4767
        %4923 = vmatprep.subr.bf16.mxu0 0
        %4924 = vmatpush1.bf16.msra.mxu0 %v4768
        %4925 = vmatprep.subr.bf16.mxu0 0
        %4926 = vmatpush1.bf16.msra.mxu0 %v4769
        %4927 = vmatprep.subr.bf16.mxu0 0
        %4928 = vmatpush1.bf16.msra.mxu0 %v4770
        %4929 = vmatprep.subr.bf16.mxu0 0
        %4930 = vmatpush1.bf16.msra.mxu0 %v4771
        %4931 = vmatprep.subr.bf16.mxu0 0
        %4932 = vmatpush1.bf16.msra.mxu0 %v4772
        %4933 = vmatprep.subr.bf16.mxu0 0
        %4934 = vmatpush1.bf16.msra.mxu0 %v4773
        %4935 = vmatprep.mubr.bf16.mxu0 %v4514
        %4936 = vmatmul.mubr.bf16.gmra.mrb[0].mxu0 %v4513
        %v4937 = vpop.f32.mrb[0].mxu0
        %v4938 = vadd.f32 %v4841, %v4937
        %v4939 = vpop.f32.mrb[0].mxu0
        %v4940 = vpop.f32.mrb[0].mxu0
        %v4941 = vadd.f32 %v4844, %v4940
        %v4942 = vpop.f32.mrb[0].mxu0
        %4943 = vmatprep.mubr.bf16.mxu0 %v4518
        %4944 = vmatmul.mubr.bf16.gmra.mrb[0].mxu0 %v4517
        %v4945 = vpop.f32.mrb[0].mxu0
        %v4946 = vadd.f32 %v4849, %v4945
        %v4947 = vpop.f32.mrb[0].mxu0
        %v4948 = vpop.f32.mrb[0].mxu0
        %v4949 = vadd.f32 %v4852, %v4948
        %v4950 = vpop.f32.mrb[0].mxu0
        %4951 = vmatprep.mubr.bf16.mxu0 %v4522
        %4952 = vmatmul.mubr.bf16.gmra.mrb[0].mxu0 %v4521
        %v4953 = vpop.f32.mrb[0].mxu0
        %v4954 = vadd.f32 %v4857, %v4953
        %v4955 = vpop.f32.mrb[0].mxu0
        %v4956 = vpop.f32.mrb[0].mxu0
        %v4957 = vadd.f32 %v4860, %v4956
        %v4958 = vpop.f32.mrb[0].mxu0
        %4959 = vmatprep.mubr.bf16.mxu0 %v4526
        %4960 = vmatmul.mubr.bf16.gmra.mrb[0].mxu0 %v4525
        %v4961 = vpop.f32.mrb[0].mxu0
        %v4962 = vadd.f32 %v4865, %v4961
        %v4963 = vpop.f32.mrb[0].mxu0
        %v4964 = vpop.f32.mrb[0].mxu0
        %v4965 = vadd.f32 %v4868, %v4964
        %v4966 = vpop.f32.mrb[0].mxu0
        %4967 = vmatprep.mubr.bf16.mxu0 %v4530
        %4968 = vmatmul.mubr.bf16.gmra.mrb[0].mxu0 %v4529
        %v4969 = vpop.f32.mrb[0].mxu0
        %v4970 = vadd.f32 %v4873, %v4969
        %v4971 = vpop.f32.mrb[0].mxu0
        %v4972 = vpop.f32.mrb[0].mxu0
        %v4973 = vadd.f32 %v4876, %v4972
        %v4974 = vpop.f32.mrb[0].mxu0
        %4975 = vmatprep.mubr.bf16.mxu0 %v4534
        %4976 = vmatmul.mubr.bf16.gmra.mrb[0].mxu0 %v4533
        %v4977 = vpop.f32.mrb[0].mxu0
        %v4978 = vadd.f32 %v4881, %v4977
        %v4979 = vpop.f32.mrb[0].mxu0
        %v4980 = vpop.f32.mrb[0].mxu0
        %v4981 = vadd.f32 %v4884, %v4980
        %v4982 = vpop.f32.mrb[0].mxu0
        %4983 = vmatprep.mubr.bf16.mxu0 %v4538
        %4984 = vmatmul.mubr.bf16.gmra.mrb[0].mxu0 %v4537
        %v4985 = vpop.f32.mrb[0].mxu0
        %v4986 = vadd.f32 %v4889, %v4985
        %v4987 = vpop.f32.mrb[0].mxu0
        %v4988 = vpop.f32.mrb[0].mxu0
        %v4989 = vadd.f32 %v4892, %v4988
        %v4990 = vpop.f32.mrb[0].mxu0
        %4991 = vmatprep.mubr.bf16.mxu0 %v4542
        %4992 = vmatmul.mubr.bf16.gmra.mrb[0].mxu0 %v4541
        %v4993 = vpop.f32.mrb[0].mxu0
        %v4994 = vadd.f32 %v4897, %v4993
        %v4995 = vpop.f32.mrb[0].mxu0
        %v4996 = vpop.f32.mrb[0].mxu0
        %v4997 = vadd.f32 %v4900, %v4996
        %v4998 = vpop.f32.mrb[0].mxu0
        %4999 = vdwg.mxu0
        %v5000 = vmax.f32 %v4938, %v4941
        %v5001 = vrot.slane %v5000, 4
        %v5002 = vmax.f32 %v5000, %v5001
        %v5003 = vrot.slane %v5002, 2
        %v5004 = vmax.f32 %v5002, %v5003
        %v5005 = vrot.slane %v5004, 1
        %v5006 = vmax.f32 %v5004, %v5005
        %v5007 = vmax.f32 %v4946, %v4949
        %v5008 = vrot.slane %v5007, 4
        %v5009 = vmax.f32 %v5007, %v5008
        %v5010 = vrot.slane %v5009, 2
        %v5011 = vmax.f32 %v5009, %v5010
        %v5012 = vrot.slane %v5011, 1
        %v5013 = vmax.f32 %v5011, %v5012
        %v5014 = vmax.f32 %v4954, %v4957
        %v5015 = vrot.slane %v5014, 4
        %v5016 = vmax.f32 %v5014, %v5015
        %v5017 = vrot.slane %v5016, 2
        %v5018 = vmax.f32 %v5016, %v5017
        %v5019 = vrot.slane %v5018, 1
        %v5020 = vmax.f32 %v5018, %v5019
        %v5021 = vmax.f32 %v4962, %v4965
        %v5022 = vrot.slane %v5021, 4
        %v5023 = vmax.f32 %v5021, %v5022
        %v5024 = vrot.slane %v5023, 2
        %v5025 = vmax.f32 %v5023, %v5024
        %v5026 = vrot.slane %v5025, 1
        %v5027 = vmax.f32 %v5025, %v5026
        %v5028 = vmax.f32 %v4970, %v4973
        %v5029 = vrot.slane %v5028, 4
        %v5030 = vmax.f32 %v5028, %v5029
        %v5031 = vrot.slane %v5030, 2
        %v5032 = vmax.f32 %v5030, %v5031
        %v5033 = vrot.slane %v5032, 1
        %v5034 = vmax.f32 %v5032, %v5033
        %v5035 = vmax.f32 %v4978, %v4981
        %v5036 = vrot.slane %v5035, 4
        %v5037 = vmax.f32 %v5035, %v5036
        %v5038 = vrot.slane %v5037, 2
        %v5039 = vmax.f32 %v5037, %v5038
        %v5040 = vrot.slane %v5039, 1
        %v5041 = vmax.f32 %v5039, %v5040
        %v5042 = vmax.f32 %v4986, %v4989
        %v5043 = vrot.slane %v5042, 4
        %v5044 = vmax.f32 %v5042, %v5043
        %v5045 = vrot.slane %v5044, 2
        %v5046 = vmax.f32 %v5044, %v5045
        %v5047 = vrot.slane %v5046, 1
        %v5048 = vmax.f32 %v5046, %v5047
        %v5049 = vmax.f32 %v4994, %v4997
        %v5050 = vrot.slane %v5049, 4
        %v5051 = vmax.f32 %v5049, %v5050
        %v5052 = vrot.slane %v5051, 2
        %v5053 = vmax.f32 %v5051, %v5052
        %v5054 = vrot.slane %v5053, 1
        %v5055 = vmax.f32 %v5053, %v5054
        %v5064 = vsel %vm2856, %v5013, %v5006
        %v5065 = vsel %vm2858, %v5020, %v5064
        %v5066 = vsel %vm2860, %v5027, %v5065
        %v5067 = vsel %vm2862, %v5034, %v5066
        %v5068 = vsel %vm2864, %v5041, %v5067
        %v5069 = vsel %vm2866, %v5048, %v5068
        %v5070 = vsel %vm2868, %v5055, %v5069
        %5072 = vst [vmem:[%s412] sm:$0xff] %v5070
        %s5073 = sand.u32 %s250, 1
        %s5074 = scalar_lea.sflag [#allocation4], %s5073
        %s5075 = sand.u32 %s250, 1
        %s5076 = smul.addr %s5075, 8
        %s5077 = scalar_lea.vmem [#allocation10], %s5076
        // Predicated region
        $region77: #{tpu_custom_call.1} parent=59 // pred_check
          %p5078 = pneg %p260
        $region78: #{tpu_custom_call.1} parent=59 // pred_check_branch
          %5080 = sbr.rel (%p5078) target = $region80
        $region79: #{tpu_custom_call.1} parent=59 // pred_region
          %s5082 = ssub.s32 128, 128
          %5083 = vsyncadd %s5074, %s5082
          %s5084 = smul.addr %s27, 128
          %s5085 = scalar_lea.hbm %s10, %s5084
          %s5087 = sshll.u32 %s5077, 4
          %s5088 = int_to_ptr.vmem [resolvable:$true] %s5087
          %5090 = dma.vmem_to_hbm [thread:$0]  %s5088, 128, %s5085, %s5074
        $region80: #{tpu_custom_call.1} parent=59 // pred_fallthru
          _
      $region60: #{tpu_custom_call.1} parent=5 // pred_fallthru
        _
      %p5091 = scmp.le.s32.totalorder 2, %s22
      // Predicated region
      $region81: #{tpu_custom_call.1} parent=5 // pred_check
        %p5092 = pneg %p5091
      $region82: #{tpu_custom_call.1} parent=5 // pred_check_branch
        %5094 = sbr.rel (%p5092) target = $region84
      $region83: #{tpu_custom_call.1} parent=5 // pred_region
        %s5095 = ssub.s32 %s22, 2
        // Predicated region
        $region85: #{tpu_custom_call.1} parent=83 // pred_check
          %p5096 = pneg %p266
        $region86: #{tpu_custom_call.1} parent=83 // pred_check_branch
          %5098 = sbr.rel (%p5096) target = $region88
        $region87: #{tpu_custom_call.1} parent=83 // pred_region
          %s5099 = sand.u32 %s251, 1
          %s5100 = scalar_lea.sflag [#allocation4], %s5099
          %s5101 = sand.u32 %s251, 1
          %s5102 = smul.addr %s5101, 8
          %s5103 = scalar_lea.vmem [#allocation10], %s5102
          %5104 = dma.done %s5100, 128
        $region88: #{tpu_custom_call.1} parent=83 // pred_fallthru
          _
      $region84: #{tpu_custom_call.1} parent=5 // pred_fallthru
        _
    $region6: #{tpu_custom_call.1} parent=1 // loop_footer
      %s26 = sadd.s32 1, %s22
    $region7: #{tpu_custom_call.1} parent=1 // loop_footer_branch
      %21 = sbr.rel target = $region3
    $region8: #{tpu_custom_call.1} parent=1 // loop_exit
      _
    %5105 = vsyncpa [#allocation3], 1
    %s5106 = scalar_lea.sflag [#allocation3], 1
    %5107 = vsyncpa %s5106, 1
    %5108 = vsyncpa [#allocation6], 1
    %5109 = vsyncpa [#allocation9], 1
    %5110 = vsyncpa [#allocation4], 1
    %s5111 = scalar_lea.sflag [#allocation4], 1
    %5112 = vsyncpa %s5111, 1

</llo_original>
